<compile_context>
chip_gen: v7x
topology: tpu7x:2x2x1
jax: 0.10.0
libtpu: 0.0.40
codegen_flags: <defaults>
</compile_context>

<pallas_src>
import functools

import jax
import jax.numpy as jnp
from jax.experimental import pallas as pl
from jax.experimental.pallas import tpu as pltpu


# ----------------------------------------------------------------------------
# Small helpers
# ----------------------------------------------------------------------------
_VMEM_LIMIT_CACHE = [None]


def _vmem_limit_bytes():
    """Per-generation scoped-VMEM limit (v5e/v6e: 64 MiB, v7x: 32 MiB)."""
    if _VMEM_LIMIT_CACHE[0] is None:
        try:
            cap = int(pltpu.get_tpu_info().vmem_capacity_bytes)
        except Exception:
            cap = 64 * 1024 * 1024
        _VMEM_LIMIT_CACHE[0] = int(max(32 * 1024 * 1024,
                                       min(cap // 2, 64 * 1024 * 1024)))
    return _VMEM_LIMIT_CACHE[0]


def _pick_conv_bt(B, P, target=16):
    """Largest batch tile that divides B, keeps the row block 8-aligned and
    leaves >= 2 grid steps; falls back to the full batch (single block)."""
    hi = min(target, B // 2)
    best = None
    for t in range(1, hi + 1):
        if B % t == 0 and (t * P) % 8 == 0:
            best = t
    return best if best is not None else B


def _pick_m_tile(M, target=256):
    """Largest multiple-of-8 tile dividing M with >= 2 grid steps; else full M."""
    hi = min(target, M // 2)
    best = None
    for t in range(8, hi + 1, 8):
        if M % t == 0:
            best = t
    return best if best is not None else M


# ----------------------------------------------------------------------------
# Pallas kernel: fused stride-1 conv (tap accumulation) + bias + ReLU.
#
# The input block is a row-major flattening of (bt, ih, iw, Cin) into
# (bt*ih*iw, Cin).  For tap (i, j) the contribution to the output at base row
# r0 is x[r0 + i*iw + j] @ w[i,j], so each tap is ONE contiguous shifted slice
# and ONE MXU matmul -- no strided slices, no reshapes, no im2col buffer.
# Rows whose window wraps around an image edge produce junk values at junk
# positions; consumers either slice them off (cheap fused XLA op) or hit zero
# rows in the FC1 weight.  The last S rows of each block are explicitly
# zeroed so no uninitialized VMEM ever reaches HBM.
# ----------------------------------------------------------------------------
def _conv_kernel(x_ref, w_ref, b_ref, o_ref, *, kh, kw, iw):
    S = (kh - 1) * iw + (kw - 1)
    rows = x_ref.shape[0]
    R = rows - S
    oc = o_ref.shape[-1]
    acc = None
    for i in range(kh):
        for j in range(kw):
            s = i * iw + j
            d = jnp.dot(x_ref[s:s + R, :], w_ref[i * kw + j],
                        preferred_element_type=jnp.float32)
            acc = d if acc is None else acc + d
    y = jnp.maximum(acc + b_ref[...], 0.0)
    o_ref[0:R, :] = y.astype(o_ref.dtype)
    if S > 0:
        o_ref[R:, :] = jnp.zeros((S, oc), o_ref.dtype)


def conv_layer(x_rows, w_taps, b_row, *, kh, kw, iw, P, B,
               out_dtype=jnp.bfloat16):
    """x_rows: (B*P, Cin) bf16, w_taps: (kh*kw, Cin, OC) bf16, b_row: (1, OC) f32."""
    BP, cin = x_rows.shape
    assert BP == B * P
    T, cin2, oc = w_taps.shape
    assert T == kh * kw and cin2 == cin

    bt = _pick_conv_bt(B, P)
    grid = (B // bt,)
    kernel = functools.partial(_conv_kernel, kh=kh, kw=kw, iw=iw)

    return pl.pallas_call(
        kernel,
        out_shape=jax.ShapeDtypeStruct((B * P, oc), out_dtype),
        grid=grid,
        in_specs=[
            pl.BlockSpec((bt * P, cin), lambda i: (i, 0)),   # activations, tiled over batch
            pl.BlockSpec((T, cin, oc), lambda i: (0, 0, 0)),  # weights, VMEM-resident
            pl.BlockSpec((1, oc), lambda i: (0, 0)),          # bias,    VMEM-resident
        ],
        out_specs=pl.BlockSpec((bt * P, oc), lambda i: (i, 0)),
        compiler_params=pltpu.CompilerParams(
            dimension_semantics=("parallel",),
            vmem_limit_bytes=_vmem_limit_bytes(),
        ),
    )(x_rows, w_taps, b_row)


# ----------------------------------------------------------------------------
# Pallas kernel: fused FC1 (actor[0]+critic[0]) + heads (actor[1]+critic[1]).
#   hidden = relu(flat @ Wh + bh)   (tm, 512)  -- stays in VMEM
#   head   = hidden @ Wd + bd       (tm, 128)  -- lane-dense output
# ----------------------------------------------------------------------------
def _fc_head_kernel(x_ref, wh_ref, bh_ref, wd_ref, bd_ref, o_ref):
    h = jnp.dot(x_ref[...], wh_ref[...], preferred_element_type=jnp.float32)
    h = jnp.maximum(h + bh_ref[...], 0.0).astype(jnp.bfloat16)
    y = jnp.dot(h, wd_ref[...], preferred_element_type=jnp.float32)
    o_ref[...] = (y + bd_ref[...]).astype(o_ref.dtype)


def fc_head(flat, wh, bh, wd, bd):
    M, K = flat.shape
    K2, HID = wh.shape
    HID2, NO = wd.shape
    assert K2 == K and HID2 == HID

    tm = _pick_m_tile(M)
    grid = (M // tm,)

    return pl.pallas_call(
        _fc_head_kernel,
        out_shape=jax.ShapeDtypeStruct((M, NO), jnp.float32),
        grid=grid,
        in_specs=[
            pl.BlockSpec((tm, K), lambda i: (i, 0)),
            pl.BlockSpec((K, HID), lambda i: (0, 0)),
            pl.BlockSpec((1, HID), lambda i: (0, 0)),
            pl.BlockSpec((HID, NO), lambda i: (0, 0)),
            pl.BlockSpec((1, NO), lambda i: (0, 0)),
        ],
        out_specs=pl.BlockSpec((tm, NO), lambda i: (i, 0)),
        compiler_params=pltpu.CompilerParams(
            dimension_semantics=("parallel",),
            vmem_limit_bytes=_vmem_limit_bytes(),
        ),
    )(flat, wh, bh, wd, bd)


# ----------------------------------------------------------------------------
# Shape derivation (stride folding via space-to-depth)
# ----------------------------------------------------------------------------
def derive_dims(input_shape):
    C, H, W = input_shape
    assert H % 4 == 0 and W % 4 == 0, "H, W must be multiples of 4"
    ih1, iw1 = H // 4, W // 4                 # conv1 seen as k=2,s=1 on s2d(4) input
    oh1, ow1 = ih1 - 1, iw1 - 1
    assert oh1 == (H - 8) // 4 + 1 and ow1 == (W - 8) // 4 + 1
    assert oh1 % 2 == 0 and ow1 % 2 == 0, "conv1 output must be even for the s2d(2) step"
    ih2, iw2 = oh1 // 2, ow1 // 2             # conv2 seen as k=2,s=1 on s2d(2) input
    oh2, ow2 = ih2 - 1, iw2 - 1
    assert oh2 == (oh1 - 4) // 2 + 1
    ih3, iw3 = ih2, iw2                       # conv3 reads conv2's padded grid directly
    oh3, ow3 = oh2 - 2, ow2 - 2               # k=3, s=1
    assert oh3 >= 1 and ow3 >= 1, "input too small for the Atari conv stack (min 36x36)"
    conv_out = 64 * oh3 * ow3
    return dict(C=C, H=H, W=W, ih1=ih1, iw1=iw1, oh1=oh1, ow1=ow1,
                ih2=ih2, iw2=iw2, oh2=oh2, ow2=ow2,
                ih3=ih3, iw3=iw3, oh3=oh3, ow3=ow3, conv_out=conv_out)


# ----------------------------------------------------------------------------
# Parameters in PyTorch layout (OIHW convs, (out, in) linears)
# ----------------------------------------------------------------------------
def init_params(key, input_shape, n_actions, dims):
    C, _, _ = input_shape
    conv_out = dims["conv_out"]
    keys = jax.random.split(key, 14)

    def u(k, shape, fan_in):
        bound = 1.0 / jnp.sqrt(fan_in)
        return jax.random.uniform(k, shape, jnp.float32, -bound, bound)

    return {
        "conv1_w": u(keys[0], (32, C, 8, 8), C * 64),
        "conv1_b": u(keys[1], (32,), C * 64),
        "conv2_w": u(keys[2], (64, 32, 4, 4), 32 * 16),
        "conv2_b": u(keys[3], (64,), 32 * 16),
        "conv3_w": u(keys[4], (64, 64, 3, 3), 64 * 9),
        "conv3_b": u(keys[5], (64,), 64 * 9),
        "actor1_w": u(keys[6], (256, conv_out), conv_out),
        "actor1_b": u(keys[7], (256,), conv_out),
        "actor2_w": u(keys[8], (n_actions, 256), 256),
        "actor2_b": u(keys[9], (n_actions,), 256),
        "critic1_w": u(keys[10], (256, conv_out), conv_out),
        "critic1_b": u(keys[11], (256,), conv_out),
        "critic2_w": u(keys[12], (1, 256), 256),
        "critic2_b": u(keys[13], (1,), 256),
    }


def prepare_params(params, dims, n_actions):
    """One-time re-layout: tap-major conv weights for the stride-folded convs,
    1/256 folded into conv1, FC fusion + junk-row absorption, bf16 casts."""
    C = dims["C"]
    oh3, ow3, ih3, iw3 = dims["oh3"], dims["ow3"], dims["ih3"], dims["iw3"]

    # conv1: (32, C, 8, 8) -> taps (di,dj) of 2x2, channel order (ri, rj, c)
    w = params["conv1_w"] * (1.0 / 256.0)                 # fold x/256 (exact)
    w = w.reshape(32, C, 2, 4, 2, 4)                      # (oc, c, di, ri, dj, rj)
    w = jnp.transpose(w, (2, 4, 3, 5, 1, 0))              # (di, dj, ri, rj, c, oc)
    w1 = w.reshape(4, 16 * C, 32).astype(jnp.bfloat16)
    b1 = params["conv1_b"].reshape(1, 32).astype(jnp.float32)

    # conv2: (64, 32, 4, 4) -> taps 2x2, channel order (ri, rj, c)
    w = params["conv2_w"].reshape(64, 32, 2, 2, 2, 2)
    w = jnp.transpose(w, (2, 4, 3, 5, 1, 0))
    w2 = w.reshape(4, 128, 64).astype(jnp.bfloat16)
    b2 = params["conv2_b"].reshape(1, 64).astype(jnp.float32)

    # conv3: (64, 64, 3, 3) -> taps 3x3
    w3 = jnp.transpose(params["conv3_w"], (2, 3, 1, 0)).reshape(9, 64, 64)
    w3 = w3.astype(jnp.bfloat16)
    b3 = params["conv3_b"].reshape(1, 64).astype(jnp.float32)

    # FC1: PyTorch columns are (c, y, x) over the 7x7(-like) valid grid; our
    # flat input is the junk-padded (y, x, c) grid -> permute + zero-pad rows.
    def fc1_prep(wfc):
        wfc = wfc.reshape(256, 64, oh3, ow3)
        wfc = jnp.transpose(wfc, (2, 3, 1, 0))            # (y, x, c, out)
        wfc = jnp.pad(wfc, ((0, ih3 - oh3), (0, iw3 - ow3), (0, 0), (0, 0)))
        return wfc.reshape(ih3 * iw3 * 64, 256)

    wh = jnp.concatenate([fc1_prep(params["actor1_w"]),
                          fc1_prep(params["critic1_w"])], axis=1)
    wh = wh.astype(jnp.bfloat16)                          # (K_fc, 512)
    bh = jnp.concatenate([params["actor1_b"],
                          params["critic1_b"]]).reshape(1, 512).astype(jnp.float32)

    # Heads: block-diagonal (512, 128); cols [0:n_actions]=logits, [n_actions]=value
    n_head = 128
    assert 1 <= n_actions <= n_head - 1, "head packing assumes n_actions < 128"
    wd = jnp.zeros((512, n_head), jnp.float32)
    wd = wd.at[:256, :n_actions].set(params["actor2_w"].T)
    wd = wd.at[256:, n_actions].set(params["critic2_w"][0])
    bd = jnp.zeros((n_head,), jnp.float32)
    bd = bd.at[:n_actions].set(params["actor2_b"])
    bd = bd.at[n_actions].set(params["critic2_b"][0])

    return {"w1": w1, "b1": b1, "w2": w2, "b2": b2, "w3": w3, "b3": b3,
            "wh": wh, "bh": bh,
            "wd": wd.astype(jnp.bfloat16),
            "bd": bd.reshape(1, n_head).astype(jnp.float32)}


# ----------------------------------------------------------------------------
# Forward pass (matches AtariBasePPO.forward)
# ----------------------------------------------------------------------------
def atari_base_ppo_forward(prepped, x_nchw, *, dims, n_actions):
    B = x_nchw.shape[0]
    C = dims["C"]
    ih1, iw1, oh1, ow1 = dims["ih1"], dims["iw1"], dims["oh1"], dims["ow1"]
    ih2, iw2 = dims["ih2"], dims["iw2"]
    ih3, iw3 = dims["ih3"], dims["iw3"]

    # Input prep: NCHW uint8 -> space-to-depth(4) NHWC rows, bf16 (one pass).
    x = jnp.transpose(x_nchw, (0, 2, 3, 1))                   # (B, H, W, C)
    x = x.reshape(B, ih1, 4, iw1, 4, C)
    x = jnp.transpose(x, (0, 1, 3, 2, 4, 5))                  # (B, ih1, iw1, 4, 4, C)
    x = x.reshape(B * ih1 * iw1, 16 * C).astype(jnp.bfloat16)

    # conv1 (k8 s4, scale folded into weights): 2x2 taps over Cin=16C
    y1 = conv_layer(x, prepped["w1"], prepped["b1"],
                    kh=2, kw=2, iw=iw1, P=ih1 * iw1, B=B)      # (B*P1, 32)

    # conv1 -> conv2: slice valid region + space-to-depth(2) (one small pass)
    y1 = y1.reshape(B, ih1, iw1, 32)[:, :oh1, :ow1, :]
    y1 = y1.reshape(B, ih2, 2, iw2, 2, 32)
    y1 = jnp.transpose(y1, (0, 1, 3, 2, 4, 5)).reshape(B * ih2 * iw2, 128)

    # conv2 (k4 s2): 2x2 taps over Cin=128
    y2 = conv_layer(y1, prepped["w2"], prepped["b2"],
                    kh=2, kw=2, iw=iw2, P=ih2 * iw2, B=B)      # (B*P2, 64)

    # conv3 (k3 s1) consumes conv2's junk-padded grid directly (no glue)
    y3 = conv_layer(y2, prepped["w3"], prepped["b3"],
                    kh=3, kw=3, iw=iw3, P=ih3 * iw3, B=B)      # (B*P3, 64)

    # Flatten (free reshape); junk grid positions hit zero rows in wh.
    flat = y3.reshape(B, ih3 * iw3 * 64)

    head = fc_head(flat, prepped["wh"], prepped["bh"],
                   prepped["wd"], prepped["bd"])               # (B, 128) f32
    logits = head[:, :n_actions]
    value = head[:, n_actions:n_actions + 1]
    return logits, value


# ----------------------------------------------------------------------------
# Pure-JAX f32 reference on the original PyTorch-layout params (check only)
# ----------------------------------------------------------------------------
def _ref_forward(params, x):
    hp = jax.lax.Precision.HIGHEST
    fx = x.astype(jnp.float32) / 256.0

    def conv(h, w, b, s):
        y = jax.lax.conv_general_dilated(
            h, w, (s, s), "VALID",
            dimension_numbers=("NCHW", "OIHW", "NCHW"), precision=hp)
        return jax.nn.relu(y + b[None, :, None, None])

    h = conv(fx, params["conv1_w"], params["conv1_b"], 4)
    h = conv(h, params["conv2_w"], params["conv2_b"], 2)
    h = conv(h, params["conv3_w"], params["conv3_b"], 1)
    flat = h.reshape(h.shape[0], -1)

    def lin(z, w, b):
        return jnp.dot(z, w.T, precision=hp) + b

    a = lin(jax.nn.relu(lin(flat, params["actor1_w"], params["actor1_b"])),
            params["actor2_w"], params["actor2_b"])
    v = lin(jax.nn.relu(lin(flat, params["critic1_w"], params["critic1_b"])),
            params["critic2_w"], params["critic2_b"])
    return a, v


if __name__ == "__main__":
    # Smallest valid Atari-style shapes: 36x36 -> conv1 8x8, conv2 3x3, conv3 1x1.
    B, C, H, W = 2, 4, 36, 36
    n_actions = 6

    key = jax.random.PRNGKey(0)
    k_param, k_x = jax.random.split(key)

    dims = derive_dims((C, H, W))
    params = init_params(k_param, (C, H, W), n_actions, dims)
    prepped = prepare_params(params, dims, n_actions)

    # uint8 Atari frames (NCHW, PyTorch convention)
    x = jax.random.randint(k_x, (B, C, H, W), 0, 256,
                           dtype=jnp.int32).astype(jnp.uint8)

    fwd = jax.jit(functools.partial(atari_base_ppo_forward,
                                    dims=dims, n_actions=n_actions))
    logits, value = fwd(prepped, x)
    jax.block_until_ready((logits, value))

    assert logits.shape == (B, n_actions) and value.shape == (B, 1)

    ref_logits, ref_value = _ref_forward(params, x)
    # bf16 MXU inputs (f32 accumulation) -> tolerance relaxed vs f32 reference
    assert jnp.allclose(logits, ref_logits, atol=5e-2, rtol=5e-2), (
        float(jnp.max(jnp.abs(logits - ref_logits))))
    assert jnp.allclose(value, ref_value, atol=5e-2, rtol=5e-2), (
        float(jnp.max(jnp.abs(value - ref_value))))

    print("KERNEL_OK")
</pallas_src>

<mosaic_0001>
module attributes {stable_mosaic.version = 11 : i64} {
  func.func @_conv_kernel(%arg0: i32, %arg1: memref<162x64xbf16, #tpu.memory_space<vmem>>, %arg2: memref<4x64x32xbf16, #tpu.memory_space<vmem>>, %arg3: memref<1x32xf32, #tpu.memory_space<vmem>>, %arg4: memref<162x32xbf16, #tpu.memory_space<vmem>>) attributes {dimension_semantics = [#tpu.dimension_semantics<parallel>], iteration_bounds = array<i64: 1>, scalar_prefetch = 0 : i64, scratch_operands = 0 : i64, tpu.core_type = #tpu.core_type<tc>, window_params = [{transform_indices = @transform_0, window_bounds = array<i64: 162, 64>}, {pipeline_mode = #tpu.pipeline_mode<synchronous>, transform_indices = @transform_1, window_bounds = array<i64: 4, 64, 32>}, {pipeline_mode = #tpu.pipeline_mode<synchronous>, transform_indices = @transform_2, window_bounds = array<i64: 1, 32>}, {transform_indices = @transform_3, window_bounds = array<i64: 162, 32>}]} {
    %c0 = arith.constant 0 : index
    %c0_0 = arith.constant 0 : index
    %0 = vector.load %arg1[%c0, %c0_0] : memref<162x64xbf16, #tpu.memory_space<vmem>>, vector<152x64xbf16>
    %c0_1 = arith.constant 0 : index
    %c0_2 = arith.constant 0 : index
    %c0_3 = arith.constant 0 : index
    %1 = vector.load %arg2[%c0_1, %c0_2, %c0_3] : memref<4x64x32xbf16, #tpu.memory_space<vmem>>, vector<1x64x32xbf16>
    %2 = vector.shape_cast %1 : vector<1x64x32xbf16> to vector<64x32xbf16>
    %cst = arith.constant dense<0.000000e+00> : vector<152x32xf32>
    %3 = tpu.matmul %0, %2, %cst {dimension_numbers = #tpu.dot_dimension_numbers<[1], [0], [0], [1], [0, 0, 1, 1], [], []>} : vector<152x64xbf16>, vector<64x32xbf16>, vector<152x32xf32> -> vector<152x32xf32>
    %c1 = arith.constant 1 : index
    %c0_4 = arith.constant 0 : index
    %4 = vector.load %arg1[%c1, %c0_4] : memref<162x64xbf16, #tpu.memory_space<vmem>>, vector<152x64xbf16>
    %c1_5 = arith.constant 1 : index
    %c0_6 = arith.constant 0 : index
    %c0_7 = arith.constant 0 : index
    %5 = vector.load %arg2[%c1_5, %c0_6, %c0_7] : memref<4x64x32xbf16, #tpu.memory_space<vmem>>, vector<1x64x32xbf16>
    %6 = vector.shape_cast %5 : vector<1x64x32xbf16> to vector<64x32xbf16>
    %cst_8 = arith.constant dense<0.000000e+00> : vector<152x32xf32>
    %7 = tpu.matmul %4, %6, %cst_8 {dimension_numbers = #tpu.dot_dimension_numbers<[1], [0], [0], [1], [0, 0, 1, 1], [], []>} : vector<152x64xbf16>, vector<64x32xbf16>, vector<152x32xf32> -> vector<152x32xf32>
    %8 = arith.addf %3, %7 : vector<152x32xf32>
    %c9 = arith.constant 9 : index
    %c0_9 = arith.constant 0 : index
    %9 = vector.load %arg1[%c9, %c0_9] : memref<162x64xbf16, #tpu.memory_space<vmem>>, vector<152x64xbf16>
    %c2 = arith.constant 2 : index
    %c0_10 = arith.constant 0 : index
    %c0_11 = arith.constant 0 : index
    %10 = vector.load %arg2[%c2, %c0_10, %c0_11] : memref<4x64x32xbf16, #tpu.memory_space<vmem>>, vector<1x64x32xbf16>
    %11 = vector.shape_cast %10 : vector<1x64x32xbf16> to vector<64x32xbf16>
    %cst_12 = arith.constant dense<0.000000e+00> : vector<152x32xf32>
    %12 = tpu.matmul %9, %11, %cst_12 {dimension_numbers = #tpu.dot_dimension_numbers<[1], [0], [0], [1], [0, 0, 1, 1], [], []>} : vector<152x64xbf16>, vector<64x32xbf16>, vector<152x32xf32> -> vector<152x32xf32>
    %13 = arith.addf %8, %12 : vector<152x32xf32>
    %c10 = arith.constant 10 : index
    %c0_13 = arith.constant 0 : index
    %14 = vector.load %arg1[%c10, %c0_13] : memref<162x64xbf16, #tpu.memory_space<vmem>>, vector<152x64xbf16>
    %c3 = arith.constant 3 : index
    %c0_14 = arith.constant 0 : index
    %c0_15 = arith.constant 0 : index
    %15 = vector.load %arg2[%c3, %c0_14, %c0_15] : memref<4x64x32xbf16, #tpu.memory_space<vmem>>, vector<1x64x32xbf16>
    %16 = vector.shape_cast %15 : vector<1x64x32xbf16> to vector<64x32xbf16>
    %cst_16 = arith.constant dense<0.000000e+00> : vector<152x32xf32>
    %17 = tpu.matmul %14, %16, %cst_16 {dimension_numbers = #tpu.dot_dimension_numbers<[1], [0], [0], [1], [0, 0, 1, 1], [], []>} : vector<152x64xbf16>, vector<64x32xbf16>, vector<152x32xf32> -> vector<152x32xf32>
    %18 = arith.addf %13, %17 : vector<152x32xf32>
    %c0_17 = arith.constant 0 : index
    %c0_18 = arith.constant 0 : index
    %19 = vector.load %arg3[%c0_17, %c0_18] : memref<1x32xf32, #tpu.memory_space<vmem>>, vector<1x32xf32>
    %20 = vector.broadcast %19 : vector<1x32xf32> to vector<152x32xf32>
    %21 = arith.addf %18, %20 : vector<152x32xf32>
    %cst_19 = arith.constant 0.000000e+00 : f32
    %22 = vector.broadcast %cst_19 : f32 to vector<152x32xf32>
    %23 = arith.maximumf %21, %22 : vector<152x32xf32>
    %24 = arith.truncf %23 : vector<152x32xf32> to vector<152x32xbf16>
    %c0_20 = arith.constant 0 : index
    %c0_21 = arith.constant 0 : index
    %25 = vector.load %arg4[%c0_20, %c0_21] : memref<162x32xbf16, #tpu.memory_space<vmem>>, vector<152x32xbf16>
    tpu.vector_store %arg4[%c0_20, %c0_21], %24 {strides = array<i32>} : memref<162x32xbf16, #tpu.memory_space<vmem>>, vector<152x32xbf16>,
    %cst_22 = arith.constant 0.000000e+00 : bf16
    %26 = vector.broadcast %cst_22 : bf16 to vector<10x32xbf16>
    %c152 = arith.constant 152 : index
    %c0_23 = arith.constant 0 : index
    %27 = vector.load %arg4[%c152, %c0_23] : memref<162x32xbf16, #tpu.memory_space<vmem>>, vector<10x32xbf16>
    tpu.vector_store %arg4[%c152, %c0_23], %26 {strides = array<i32>} : memref<162x32xbf16, #tpu.memory_space<vmem>>, vector<10x32xbf16>,
    return
  }
  func.func @transform_0(%arg0: i32) -> (i32, i32) {
    %c0_i32 = arith.constant 0 : i32
    %c0_i32_0 = arith.constant 0 : i32
    return %arg0, %c0_i32 : i32, i32
  }
  func.func @transform_1(%arg0: i32) -> (i32, i32, i32) {
    %c0_i32 = arith.constant 0 : i32
    %c0_i32_0 = arith.constant 0 : i32
    %c0_i32_1 = arith.constant 0 : i32
    %c0_i32_2 = arith.constant 0 : i32
    return %c0_i32, %c0_i32_0, %c0_i32_1 : i32, i32, i32
  }
  func.func @transform_2(%arg0: i32) -> (i32, i32) {
    %c0_i32 = arith.constant 0 : i32
    %c0_i32_0 = arith.constant 0 : i32
    %c0_i32_1 = arith.constant 0 : i32
    return %c0_i32, %c0_i32_0 : i32, i32
  }
  func.func @transform_3(%arg0: i32) -> (i32, i32) {
    %c0_i32 = arith.constant 0 : i32
    %c0_i32_0 = arith.constant 0 : i32
    return %arg0, %c0_i32 : i32, i32
  }
}

module attributes {stable_mosaic.version = 11 : i64} {
  func.func @_conv_kernel(%arg0: i32, %arg1: memref<16x128xbf16, #tpu.memory_space<vmem>>, %arg2: memref<4x128x64xbf16, #tpu.memory_space<vmem>>, %arg3: memref<1x64xf32, #tpu.memory_space<vmem>>, %arg4: memref<16x64xbf16, #tpu.memory_space<vmem>>) attributes {dimension_semantics = [#tpu.dimension_semantics<parallel>], iteration_bounds = array<i64: 2>, scalar_prefetch = 0 : i64, scratch_operands = 0 : i64, tpu.core_type = #tpu.core_type<tc>, window_params = [{transform_indices = @transform_0, window_bounds = array<i64: 16, 128>}, {pipeline_mode = #tpu.pipeline_mode<synchronous>, transform_indices = @transform_1, window_bounds = array<i64: 4, 128, 64>}, {pipeline_mode = #tpu.pipeline_mode<synchronous>, transform_indices = @transform_2, window_bounds = array<i64: 1, 64>}, {transform_indices = @transform_3, window_bounds = array<i64: 16, 64>}]} {
    %c0 = arith.constant 0 : index
    %c0_0 = arith.constant 0 : index
    %0 = vector.load %arg1[%c0, %c0_0] : memref<16x128xbf16, #tpu.memory_space<vmem>>, vector<11x128xbf16>
    %c0_1 = arith.constant 0 : index
    %c0_2 = arith.constant 0 : index
    %c0_3 = arith.constant 0 : index
    %1 = vector.load %arg2[%c0_1, %c0_2, %c0_3] : memref<4x128x64xbf16, #tpu.memory_space<vmem>>, vector<1x128x64xbf16>
    %2 = vector.shape_cast %1 : vector<1x128x64xbf16> to vector<128x64xbf16>
    %cst = arith.constant dense<0.000000e+00> : vector<11x64xf32>
    %3 = tpu.matmul %0, %2, %cst {dimension_numbers = #tpu.dot_dimension_numbers<[1], [0], [0], [1], [0, 0, 1, 1], [], []>} : vector<11x128xbf16>, vector<128x64xbf16>, vector<11x64xf32> -> vector<11x64xf32>
    %c1 = arith.constant 1 : index
    %c0_4 = arith.constant 0 : index
    %4 = vector.load %arg1[%c1, %c0_4] : memref<16x128xbf16, #tpu.memory_space<vmem>>, vector<11x128xbf16>
    %c1_5 = arith.constant 1 : index
    %c0_6 = arith.constant 0 : index
    %c0_7 = arith.constant 0 : index
    %5 = vector.load %arg2[%c1_5, %c0_6, %c0_7] : memref<4x128x64xbf16, #tpu.memory_space<vmem>>, vector<1x128x64xbf16>
    %6 = vector.shape_cast %5 : vector<1x128x64xbf16> to vector<128x64xbf16>
    %cst_8 = arith.constant dense<0.000000e+00> : vector<11x64xf32>
    %7 = tpu.matmul %4, %6, %cst_8 {dimension_numbers = #tpu.dot_dimension_numbers<[1], [0], [0], [1], [0, 0, 1, 1], [], []>} : vector<11x128xbf16>, vector<128x64xbf16>, vector<11x64xf32> -> vector<11x64xf32>
    %8 = arith.addf %3, %7 : vector<11x64xf32>
    %c4 = arith.constant 4 : index
    %c0_9 = arith.constant 0 : index
    %9 = vector.load %arg1[%c4, %c0_9] : memref<16x128xbf16, #tpu.memory_space<vmem>>, vector<11x128xbf16>
    %c2 = arith.constant 2 : index
    %c0_10 = arith.constant 0 : index
    %c0_11 = arith.constant 0 : index
    %10 = vector.load %arg2[%c2, %c0_10, %c0_11] : memref<4x128x64xbf16, #tpu.memory_space<vmem>>, vector<1x128x64xbf16>
    %11 = vector.shape_cast %10 : vector<1x128x64xbf16> to vector<128x64xbf16>
    %cst_12 = arith.constant dense<0.000000e+00> : vector<11x64xf32>
    %12 = tpu.matmul %9, %11, %cst_12 {dimension_numbers = #tpu.dot_dimension_numbers<[1], [0], [0], [1], [0, 0, 1, 1], [], []>} : vector<11x128xbf16>, vector<128x64xbf16>, vector<11x64xf32> -> vector<11x64xf32>
    %13 = arith.addf %8, %12 : vector<11x64xf32>
    %c5 = arith.constant 5 : index
    %c0_13 = arith.constant 0 : index
    %14 = vector.load %arg1[%c5, %c0_13] : memref<16x128xbf16, #tpu.memory_space<vmem>>, vector<11x128xbf16>
    %c3 = arith.constant 3 : index
    %c0_14 = arith.constant 0 : index
    %c0_15 = arith.constant 0 : index
    %15 = vector.load %arg2[%c3, %c0_14, %c0_15] : memref<4x128x64xbf16, #tpu.memory_space<vmem>>, vector<1x128x64xbf16>
    %16 = vector.shape_cast %15 : vector<1x128x64xbf16> to vector<128x64xbf16>
    %cst_16 = arith.constant dense<0.000000e+00> : vector<11x64xf32>
    %17 = tpu.matmul %14, %16, %cst_16 {dimension_numbers = #tpu.dot_dimension_numbers<[1], [0], [0], [1], [0, 0, 1, 1], [], []>} : vector<11x128xbf16>, vector<128x64xbf16>, vector<11x64xf32> -> vector<11x64xf32>
    %18 = arith.addf %13, %17 : vector<11x64xf32>
    %c0_17 = arith.constant 0 : index
    %c0_18 = arith.constant 0 : index
    %19 = vector.load %arg3[%c0_17, %c0_18] : memref<1x64xf32, #tpu.memory_space<vmem>>, vector<1x64xf32>
    %20 = vector.broadcast %19 : vector<1x64xf32> to vector<11x64xf32>
    %21 = arith.addf %18, %20 : vector<11x64xf32>
    %cst_19 = arith.constant 0.000000e+00 : f32
    %22 = vector.broadcast %cst_19 : f32 to vector<11x64xf32>
    %23 = arith.maximumf %21, %22 : vector<11x64xf32>
    %24 = arith.truncf %23 : vector<11x64xf32> to vector<11x64xbf16>
    %c0_20 = arith.constant 0 : index
    %c0_21 = arith.constant 0 : index
    %25 = vector.load %arg4[%c0_20, %c0_21] : memref<16x64xbf16, #tpu.memory_space<vmem>>, vector<11x64xbf16>
    tpu.vector_store %arg4[%c0_20, %c0_21], %24 {strides = array<i32>} : memref<16x64xbf16, #tpu.memory_space<vmem>>, vector<11x64xbf16>,
    %cst_22 = arith.constant 0.000000e+00 : bf16
    %26 = vector.broadcast %cst_22 : bf16 to vector<5x64xbf16>
    %c11 = arith.constant 11 : index
    %c0_23 = arith.constant 0 : index
    %27 = vector.load %arg4[%c11, %c0_23] : memref<16x64xbf16, #tpu.memory_space<vmem>>, vector<5x64xbf16>
    tpu.vector_store %arg4[%c11, %c0_23], %26 {strides = array<i32>} : memref<16x64xbf16, #tpu.memory_space<vmem>>, vector<5x64xbf16>,
    return
  }
  func.func @transform_0(%arg0: i32) -> (i32, i32) {
    %c0_i32 = arith.constant 0 : i32
    %c0_i32_0 = arith.constant 0 : i32
    return %arg0, %c0_i32 : i32, i32
  }
  func.func @transform_1(%arg0: i32) -> (i32, i32, i32) {
    %c0_i32 = arith.constant 0 : i32
    %c0_i32_0 = arith.constant 0 : i32
    %c0_i32_1 = arith.constant 0 : i32
    %c0_i32_2 = arith.constant 0 : i32
    return %c0_i32, %c0_i32_0, %c0_i32_1 : i32, i32, i32
  }
  func.func @transform_2(%arg0: i32) -> (i32, i32) {
    %c0_i32 = arith.constant 0 : i32
    %c0_i32_0 = arith.constant 0 : i32
    %c0_i32_1 = arith.constant 0 : i32
    return %c0_i32, %c0_i32_0 : i32, i32
  }
  func.func @transform_3(%arg0: i32) -> (i32, i32) {
    %c0_i32 = arith.constant 0 : i32
    %c0_i32_0 = arith.constant 0 : i32
    return %arg0, %c0_i32 : i32, i32
  }
}

module attributes {stable_mosaic.version = 11 : i64} {
  func.func @_conv_kernel(%arg0: i32, %arg1: memref<16x64xbf16, #tpu.memory_space<vmem>>, %arg2: memref<9x64x64xbf16, #tpu.memory_space<vmem>>, %arg3: memref<1x64xf32, #tpu.memory_space<vmem>>, %arg4: memref<16x64xbf16, #tpu.memory_space<vmem>>) attributes {dimension_semantics = [#tpu.dimension_semantics<parallel>], iteration_bounds = array<i64: 2>, scalar_prefetch = 0 : i64, scratch_operands = 0 : i64, tpu.core_type = #tpu.core_type<tc>, window_params = [{transform_indices = @transform_0, window_bounds = array<i64: 16, 64>}, {pipeline_mode = #tpu.pipeline_mode<synchronous>, transform_indices = @transform_1, window_bounds = array<i64: 9, 64, 64>}, {pipeline_mode = #tpu.pipeline_mode<synchronous>, transform_indices = @transform_2, window_bounds = array<i64: 1, 64>}, {transform_indices = @transform_3, window_bounds = array<i64: 16, 64>}]} {
    %c0 = arith.constant 0 : index
    %c0_0 = arith.constant 0 : index
    %0 = vector.load %arg1[%c0, %c0_0] : memref<16x64xbf16, #tpu.memory_space<vmem>>, vector<6x64xbf16>
    %c0_1 = arith.constant 0 : index
    %c0_2 = arith.constant 0 : index
    %c0_3 = arith.constant 0 : index
    %1 = vector.load %arg2[%c0_1, %c0_2, %c0_3] : memref<9x64x64xbf16, #tpu.memory_space<vmem>>, vector<1x64x64xbf16>
    %2 = vector.shape_cast %1 : vector<1x64x64xbf16> to vector<64x64xbf16>
    %cst = arith.constant dense<0.000000e+00> : vector<6x64xf32>
    %3 = tpu.matmul %0, %2, %cst {dimension_numbers = #tpu.dot_dimension_numbers<[1], [0], [0], [1], [0, 0, 1, 1], [], []>} : vector<6x64xbf16>, vector<64x64xbf16>, vector<6x64xf32> -> vector<6x64xf32>
    %c1 = arith.constant 1 : index
    %c0_4 = arith.constant 0 : index
    %4 = vector.load %arg1[%c1, %c0_4] : memref<16x64xbf16, #tpu.memory_space<vmem>>, vector<6x64xbf16>
    %c1_5 = arith.constant 1 : index
    %c0_6 = arith.constant 0 : index
    %c0_7 = arith.constant 0 : index
    %5 = vector.load %arg2[%c1_5, %c0_6, %c0_7] : memref<9x64x64xbf16, #tpu.memory_space<vmem>>, vector<1x64x64xbf16>
    %6 = vector.shape_cast %5 : vector<1x64x64xbf16> to vector<64x64xbf16>
    %cst_8 = arith.constant dense<0.000000e+00> : vector<6x64xf32>
    %7 = tpu.matmul %4, %6, %cst_8 {dimension_numbers = #tpu.dot_dimension_numbers<[1], [0], [0], [1], [0, 0, 1, 1], [], []>} : vector<6x64xbf16>, vector<64x64xbf16>, vector<6x64xf32> -> vector<6x64xf32>
    %8 = arith.addf %3, %7 : vector<6x64xf32>
    %c2 = arith.constant 2 : index
    %c0_9 = arith.constant 0 : index
    %9 = vector.load %arg1[%c2, %c0_9] : memref<16x64xbf16, #tpu.memory_space<vmem>>, vector<6x64xbf16>
    %c2_10 = arith.constant 2 : index
    %c0_11 = arith.constant 0 : index
    %c0_12 = arith.constant 0 : index
    %10 = vector.load %arg2[%c2_10, %c0_11, %c0_12] : memref<9x64x64xbf16, #tpu.memory_space<vmem>>, vector<1x64x64xbf16>
    %11 = vector.shape_cast %10 : vector<1x64x64xbf16> to vector<64x64xbf16>
    %cst_13 = arith.constant dense<0.000000e+00> : vector<6x64xf32>
    %12 = tpu.matmul %9, %11, %cst_13 {dimension_numbers = #tpu.dot_dimension_numbers<[1], [0], [0], [1], [0, 0, 1, 1], [], []>} : vector<6x64xbf16>, vector<64x64xbf16>, vector<6x64xf32> -> vector<6x64xf32>
    %13 = arith.addf %8, %12 : vector<6x64xf32>
    %c4 = arith.constant 4 : index
    %c0_14 = arith.constant 0 : index
    %14 = vector.load %arg1[%c4, %c0_14] : memref<16x64xbf16, #tpu.memory_space<vmem>>, vector<6x64xbf16>
    %c3 = arith.constant 3 : index
    %c0_15 = arith.constant 0 : index
    %c0_16 = arith.constant 0 : index
    %15 = vector.load %arg2[%c3, %c0_15, %c0_16] : memref<9x64x64xbf16, #tpu.memory_space<vmem>>, vector<1x64x64xbf16>
    %16 = vector.shape_cast %15 : vector<1x64x64xbf16> to vector<64x64xbf16>
    %cst_17 = arith.constant dense<0.000000e+00> : vector<6x64xf32>
    %17 = tpu.matmul %14, %16, %cst_17 {dimension_numbers = #tpu.dot_dimension_numbers<[1], [0], [0], [1], [0, 0, 1, 1], [], []>} : vector<6x64xbf16>, vector<64x64xbf16>, vector<6x64xf32> -> vector<6x64xf32>
    %18 = arith.addf %13, %17 : vector<6x64xf32>
    %c5 = arith.constant 5 : index
    %c0_18 = arith.constant 0 : index
    %19 = vector.load %arg1[%c5, %c0_18] : memref<16x64xbf16, #tpu.memory_space<vmem>>, vector<6x64xbf16>
    %c4_19 = arith.constant 4 : index
    %c0_20 = arith.constant 0 : index
    %c0_21 = arith.constant 0 : index
    %20 = vector.load %arg2[%c4_19, %c0_20, %c0_21] : memref<9x64x64xbf16, #tpu.memory_space<vmem>>, vector<1x64x64xbf16>
    %21 = vector.shape_cast %20 : vector<1x64x64xbf16> to vector<64x64xbf16>
    %cst_22 = arith.constant dense<0.000000e+00> : vector<6x64xf32>
    %22 = tpu.matmul %19, %21, %cst_22 {dimension_numbers = #tpu.dot_dimension_numbers<[1], [0], [0], [1], [0, 0, 1, 1], [], []>} : vector<6x64xbf16>, vector<64x64xbf16>, vector<6x64xf32> -> vector<6x64xf32>
    %23 = arith.addf %18, %22 : vector<6x64xf32>
    %c6 = arith.constant 6 : index
    %c0_23 = arith.constant 0 : index
    %24 = vector.load %arg1[%c6, %c0_23] : memref<16x64xbf16, #tpu.memory_space<vmem>>, vector<6x64xbf16>
    %c5_24 = arith.constant 5 : index
    %c0_25 = arith.constant 0 : index
    %c0_26 = arith.constant 0 : index
    %25 = vector.load %arg2[%c5_24, %c0_25, %c0_26] : memref<9x64x64xbf16, #tpu.memory_space<vmem>>, vector<1x64x64xbf16>
    %26 = vector.shape_cast %25 : vector<1x64x64xbf16> to vector<64x64xbf16>
    %cst_27 = arith.constant dense<0.000000e+00> : vector<6x64xf32>
    %27 = tpu.matmul %24, %26, %cst_27 {dimension_numbers = #tpu.dot_dimension_numbers<[1], [0], [0], [1], [0, 0, 1, 1], [], []>} : vector<6x64xbf16>, vector<64x64xbf16>, vector<6x64xf32> -> vector<6x64xf32>
    %28 = arith.addf %23, %27 : vector<6x64xf32>
    %c8 = arith.constant 8 : index
    %c0_28 = arith.constant 0 : index
    %29 = vector.load %arg1[%c8, %c0_28] : memref<16x64xbf16, #tpu.memory_space<vmem>>, vector<6x64xbf16>
    %c6_29 = arith.constant 6 : index
    %c0_30 = arith.constant 0 : index
    %c0_31 = arith.constant 0 : index
    %30 = vector.load %arg2[%c6_29, %c0_30, %c0_31] : memref<9x64x64xbf16, #tpu.memory_space<vmem>>, vector<1x64x64xbf16>
    %31 = vector.shape_cast %30 : vector<1x64x64xbf16> to vector<64x64xbf16>
    %cst_32 = arith.constant dense<0.000000e+00> : vector<6x64xf32>
    %32 = tpu.matmul %29, %31, %cst_32 {dimension_numbers = #tpu.dot_dimension_numbers<[1], [0], [0], [1], [0, 0, 1, 1], [], []>} : vector<6x64xbf16>, vector<64x64xbf16>, vector<6x64xf32> -> vector<6x64xf32>
    %33 = arith.addf %28, %32 : vector<6x64xf32>
    %c9 = arith.constant 9 : index
    %c0_33 = arith.constant 0 : index
    %34 = vector.load %arg1[%c9, %c0_33] : memref<16x64xbf16, #tpu.memory_space<vmem>>, vector<6x64xbf16>
    %c7 = arith.constant 7 : index
    %c0_34 = arith.constant 0 : index
    %c0_35 = arith.constant 0 : index
    %35 = vector.load %arg2[%c7, %c0_34, %c0_35] : memref<9x64x64xbf16, #tpu.memory_space<vmem>>, vector<1x64x64xbf16>
    %36 = vector.shape_cast %35 : vector<1x64x64xbf16> to vector<64x64xbf16>
    %cst_36 = arith.constant dense<0.000000e+00> : vector<6x64xf32>
    %37 = tpu.matmul %34, %36, %cst_36 {dimension_numbers = #tpu.dot_dimension_numbers<[1], [0], [0], [1], [0, 0, 1, 1], [], []>} : vector<6x64xbf16>, vector<64x64xbf16>, vector<6x64xf32> -> vector<6x64xf32>
    %38 = arith.addf %33, %37 : vector<6x64xf32>
    %c10 = arith.constant 10 : index
    %c0_37 = arith.constant 0 : index
    %39 = vector.load %arg1[%c10, %c0_37] : memref<16x64xbf16, #tpu.memory_space<vmem>>, vector<6x64xbf16>
    %c8_38 = arith.constant 8 : index
    %c0_39 = arith.constant 0 : index
    %c0_40 = arith.constant 0 : index
    %40 = vector.load %arg2[%c8_38, %c0_39, %c0_40] : memref<9x64x64xbf16, #tpu.memory_space<vmem>>, vector<1x64x64xbf16>
    %41 = vector.shape_cast %40 : vector<1x64x64xbf16> to vector<64x64xbf16>
    %cst_41 = arith.constant dense<0.000000e+00> : vector<6x64xf32>
    %42 = tpu.matmul %39, %41, %cst_41 {dimension_numbers = #tpu.dot_dimension_numbers<[1], [0], [0], [1], [0, 0, 1, 1], [], []>} : vector<6x64xbf16>, vector<64x64xbf16>, vector<6x64xf32> -> vector<6x64xf32>
    %43 = arith.addf %38, %42 : vector<6x64xf32>
    %c0_42 = arith.constant 0 : index
    %c0_43 = arith.constant 0 : index
    %44 = vector.load %arg3[%c0_42, %c0_43] : memref<1x64xf32, #tpu.memory_space<vmem>>, vector<1x64xf32>
    %45 = vector.broadcast %44 : vector<1x64xf32> to vector<6x64xf32>
    %46 = arith.addf %43, %45 : vector<6x64xf32>
    %cst_44 = arith.constant 0.000000e+00 : f32
    %47 = vector.broadcast %cst_44 : f32 to vector<6x64xf32>
    %48 = arith.maximumf %46, %47 : vector<6x64xf32>
    %49 = arith.truncf %48 : vector<6x64xf32> to vector<6x64xbf16>
    %c0_45 = arith.constant 0 : index
    %c0_46 = arith.constant 0 : index
    %50 = vector.load %arg4[%c0_45, %c0_46] : memref<16x64xbf16, #tpu.memory_space<vmem>>, vector<6x64xbf16>
    tpu.vector_store %arg4[%c0_45, %c0_46], %49 {strides = array<i32>} : memref<16x64xbf16, #tpu.memory_space<vmem>>, vector<6x64xbf16>,
    %cst_47 = arith.constant 0.000000e+00 : bf16
    %51 = vector.broadcast %cst_47 : bf16 to vector<10x64xbf16>
    %c6_48 = arith.constant 6 : index
    %c0_49 = arith.constant 0 : index
    %52 = vector.load %arg4[%c6_48, %c0_49] : memref<16x64xbf16, #tpu.memory_space<vmem>>, vector<10x64xbf16>
    tpu.vector_store %arg4[%c6_48, %c0_49], %51 {strides = array<i32>} : memref<16x64xbf16, #tpu.memory_space<vmem>>, vector<10x64xbf16>,
    return
  }
  func.func @transform_0(%arg0: i32) -> (i32, i32) {
    %c0_i32 = arith.constant 0 : i32
    %c0_i32_0 = arith.constant 0 : i32
    return %arg0, %c0_i32 : i32, i32
  }
  func.func @transform_1(%arg0: i32) -> (i32, i32, i32) {
    %c0_i32 = arith.constant 0 : i32
    %c0_i32_0 = arith.constant 0 : i32
    %c0_i32_1 = arith.constant 0 : i32
    %c0_i32_2 = arith.constant 0 : i32
    return %c0_i32, %c0_i32_0, %c0_i32_1 : i32, i32, i32
  }
  func.func @transform_2(%arg0: i32) -> (i32, i32) {
    %c0_i32 = arith.constant 0 : i32
    %c0_i32_0 = arith.constant 0 : i32
    %c0_i32_1 = arith.constant 0 : i32
    return %c0_i32, %c0_i32_0 : i32, i32
  }
  func.func @transform_3(%arg0: i32) -> (i32, i32) {
    %c0_i32 = arith.constant 0 : i32
    %c0_i32_0 = arith.constant 0 : i32
    return %arg0, %c0_i32 : i32, i32
  }
}

module attributes {stable_mosaic.version = 11 : i64} {
  func.func @_fc_head_kernel(%arg0: i32, %arg1: memref<2x1024xbf16, #tpu.memory_space<vmem>>, %arg2: memref<1024x512xbf16, #tpu.memory_space<vmem>>, %arg3: memref<1x512xf32, #tpu.memory_space<vmem>>, %arg4: memref<512x128xbf16, #tpu.memory_space<vmem>>, %arg5: memref<1x128xf32, #tpu.memory_space<vmem>>, %arg6: memref<2x128xf32, #tpu.memory_space<vmem>>) attributes {dimension_semantics = [#tpu.dimension_semantics<parallel>], iteration_bounds = array<i64: 1>, scalar_prefetch = 0 : i64, scratch_operands = 0 : i64, tpu.core_type = #tpu.core_type<tc>, window_params = [{transform_indices = @transform_0, window_bounds = array<i64: 2, 1024>}, {pipeline_mode = #tpu.pipeline_mode<synchronous>, transform_indices = @transform_1, window_bounds = array<i64: 1024, 512>}, {pipeline_mode = #tpu.pipeline_mode<synchronous>, transform_indices = @transform_2, window_bounds = array<i64: 1, 512>}, {pipeline_mode = #tpu.pipeline_mode<synchronous>, transform_indices = @transform_3, window_bounds = array<i64: 512, 128>}, {pipeline_mode = #tpu.pipeline_mode<synchronous>, transform_indices = @transform_4, window_bounds = array<i64: 1, 128>}, {transform_indices = @transform_5, window_bounds = array<i64: 2, 128>}]} {
    %c0 = arith.constant 0 : index
    %c0_0 = arith.constant 0 : index
    %0 = vector.load %arg1[%c0, %c0_0] : memref<2x1024xbf16, #tpu.memory_space<vmem>>, vector<2x1024xbf16>
    %c0_1 = arith.constant 0 : index
    %c0_2 = arith.constant 0 : index
    %1 = vector.load %arg2[%c0_1, %c0_2] : memref<1024x512xbf16, #tpu.memory_space<vmem>>, vector<1024x512xbf16>
    %cst = arith.constant dense<0.000000e+00> : vector<2x512xf32>
    %2 = tpu.matmul %0, %1, %cst {dimension_numbers = #tpu.dot_dimension_numbers<[1], [0], [0], [1], [0, 0, 1, 1], [], []>} : vector<2x1024xbf16>, vector<1024x512xbf16>, vector<2x512xf32> -> vector<2x512xf32>
    %c0_3 = arith.constant 0 : index
    %c0_4 = arith.constant 0 : index
    %3 = vector.load %arg3[%c0_3, %c0_4] : memref<1x512xf32, #tpu.memory_space<vmem>>, vector<1x512xf32>
    %4 = vector.broadcast %3 : vector<1x512xf32> to vector<2x512xf32>
    %5 = arith.addf %2, %4 : vector<2x512xf32>
    %cst_5 = arith.constant 0.000000e+00 : f32
    %6 = vector.broadcast %cst_5 : f32 to vector<2x512xf32>
    %7 = arith.maximumf %5, %6 : vector<2x512xf32>
    %8 = arith.truncf %7 : vector<2x512xf32> to vector<2x512xbf16>
    %c0_6 = arith.constant 0 : index
    %c0_7 = arith.constant 0 : index
    %9 = vector.load %arg4[%c0_6, %c0_7] : memref<512x128xbf16, #tpu.memory_space<vmem>>, vector<512x128xbf16>
    %cst_8 = arith.constant dense<0.000000e+00> : vector<2x128xf32>
    %10 = tpu.matmul %8, %9, %cst_8 {dimension_numbers = #tpu.dot_dimension_numbers<[1], [0], [0], [1], [0, 0, 1, 1], [], []>} : vector<2x512xbf16>, vector<512x128xbf16>, vector<2x128xf32> -> vector<2x128xf32>
    %c0_9 = arith.constant 0 : index
    %c0_10 = arith.constant 0 : index
    %11 = vector.load %arg5[%c0_9, %c0_10] : memref<1x128xf32, #tpu.memory_space<vmem>>, vector<1x128xf32>
    %12 = vector.broadcast %11 : vector<1x128xf32> to vector<2x128xf32>
    %13 = arith.addf %10, %12 : vector<2x128xf32>
    %c0_11 = arith.constant 0 : index
    %c0_12 = arith.constant 0 : index
    %14 = vector.load %arg6[%c0_11, %c0_12] : memref<2x128xf32, #tpu.memory_space<vmem>>, vector<2x128xf32>
    tpu.vector_store %arg6[%c0_11, %c0_12], %13 {strides = array<i32>} : memref<2x128xf32, #tpu.memory_space<vmem>>, vector<2x128xf32>,
    return
  }
  func.func @transform_0(%arg0: i32) -> (i32, i32) {
    %c0_i32 = arith.constant 0 : i32
    %c0_i32_0 = arith.constant 0 : i32
    return %arg0, %c0_i32 : i32, i32
  }
  func.func @transform_1(%arg0: i32) -> (i32, i32) {
    %c0_i32 = arith.constant 0 : i32
    %c0_i32_0 = arith.constant 0 : i32
    %c0_i32_1 = arith.constant 0 : i32
    return %c0_i32, %c0_i32_0 : i32, i32
  }
  func.func @transform_2(%arg0: i32) -> (i32, i32) {
    %c0_i32 = arith.constant 0 : i32
    %c0_i32_0 = arith.constant 0 : i32
    %c0_i32_1 = arith.constant 0 : i32
    return %c0_i32, %c0_i32_0 : i32, i32
  }
  func.func @transform_3(%arg0: i32) -> (i32, i32) {
    %c0_i32 = arith.constant 0 : i32
    %c0_i32_0 = arith.constant 0 : i32
    %c0_i32_1 = arith.constant 0 : i32
    return %c0_i32, %c0_i32_0 : i32, i32
  }
  func.func @transform_4(%arg0: i32) -> (i32, i32) {
    %c0_i32 = arith.constant 0 : i32
    %c0_i32_0 = arith.constant 0 : i32
    %c0_i32_1 = arith.constant 0 : i32
    return %c0_i32, %c0_i32_0 : i32, i32
  }
  func.func @transform_5(%arg0: i32) -> (i32, i32) {
    %c0_i32 = arith.constant 0 : i32
    %c0_i32_0 = arith.constant 0 : i32
    return %arg0, %c0_i32 : i32, i32
  }
}

</mosaic_0001>

<llo_original>
// kernel: atari_base_ppo_forward.4
$region0: #{atari_base_ppo_forward.4}
  #allocation0 [shape = 'u32[]', space=smem, size = 0x4, offset = 0x4, fixed_abs, tag = 'smem constant byte address 0x4 - core index']
  #allocation1 [shape = 'u32[144,128]{1,0:T(1,128)}', space=vmem, size = 0x12000, scoped, tag = 'internal scratch']
  %s0 = inlined_call_operand.vmem [shape: bf16[162,64], index: 0, kind: input, shape index: {}]
  %s1 = inlined_call_operand.vmem [shape: bf16[4,64,32], index: 1, kind: input, shape index: {}]
  %s2 = inlined_call_operand.vmem [shape: f32[1,32], index: 2, kind: input, shape index: {}]
  %s3 = inlined_call_operand.vmem [shape: bf16[162,32], index: 3, kind: output, shape index: {}]
  %s4 = sld [smem:[#allocation0]]
  $region22: #{atari_base_ppo_forward.4} parent=0
    _
  %s6 = ssub.s32 1, %s4
  %s7 = scalar_select 0, %s6, %s4
  // Predicated region
  $region2: #{atari_base_ppo_forward.4} parent=0 // pred_check
    _
  $region3: #{atari_base_ppo_forward.4} parent=0 // pred_check_branch
    %9 = sbr.rel (0) target = $region5
  $region4: #{atari_base_ppo_forward.4} parent=0 // pred_region
    _
  $region5: #{atari_base_ppo_forward.4} parent=0 // pred_fallthru
    _
  // Predicated region
  $region6: #{atari_base_ppo_forward.4} parent=0 // pred_check
    _
  $region7: #{atari_base_ppo_forward.4} parent=0 // pred_check_branch
    %11 = sbr.rel (0) target = $region9
  $region8: #{atari_base_ppo_forward.4} parent=0 // pred_region
    _
  $region9: #{atari_base_ppo_forward.4} parent=0 // pred_fallthru
    _
  // Predicated region
  $region10: #{atari_base_ppo_forward.4} parent=0 // pred_check
    _
  $region11: #{atari_base_ppo_forward.4} parent=0 // pred_check_branch
    %13 = sbr.rel (0) target = $region13
  $region12: #{atari_base_ppo_forward.4} parent=0 // pred_region
    _
  $region13: #{atari_base_ppo_forward.4} parent=0 // pred_fallthru
    _
  %v15 = vld [vmem:[%s0] sm:$0xf]
  %v16 = vld [vmem:[%s0 + $0x4] sm:$0xf]
  %v17 = vld [vmem:[%s0 + $0x8] sm:$0xf]
  %v18 = vld [vmem:[%s0 + $0xc] sm:$0xf]
  %v19 = vld [vmem:[%s0 + $0x10] sm:$0xf]
  %v20 = vld [vmem:[%s0 + $0x14] sm:$0xf]
  %v21 = vld [vmem:[%s0 + $0x18] sm:$0xf]
  %v22 = vld [vmem:[%s0 + $0x1c] sm:$0xf]
  %v23 = vld [vmem:[%s0 + $0x20] sm:$0xf]
  %v24 = vld [vmem:[%s0 + $0x24] sm:$0xf]
  %v25 = vld [vmem:[%s0 + $0x28] sm:$0xf]
  %v26 = vld [vmem:[%s0 + $0x2c] sm:$0xf]
  %v27 = vld [vmem:[%s0 + $0x30] sm:$0xf]
  %v28 = vld [vmem:[%s0 + $0x34] sm:$0xf]
  %v29 = vld [vmem:[%s0 + $0x38] sm:$0xf]
  %v30 = vld [vmem:[%s0 + $0x3c] sm:$0xf]
  %v31 = vld [vmem:[%s0 + $0x40] sm:$0xf]
  %v32 = vld [vmem:[%s0 + $0x44] sm:$0xf]
  %v33 = vld [vmem:[%s0 + $0x48] sm:$0xf]
  %v34 = vld [vmem:[%s1] sm:$0xf]
  %v35 = vld [vmem:[%s1 + $0x4] sm:$0xf]
  %v36 = vld [vmem:[%s1 + $0x8] sm:$0xf]
  %v37 = vld [vmem:[%s1 + $0xc] sm:$0xf]
  %v38 = vld [vmem:[%s1 + $0x10] sm:$0xf]
  %v39 = vld [vmem:[%s1 + $0x14] sm:$0xf]
  %v40 = vld [vmem:[%s1 + $0x18] sm:$0xf]
  %v41 = vld [vmem:[%s1 + $0x1c] sm:$0xf]
  %v42 = vld [vmem:[%s0 + $0x4c] sm:$0x1]
  %s43 = scalar_lea.vmem %s1, 32
  %v44 = vld [vmem:[%s43] sm:$0xf]
  %v45 = vld [vmem:[%s43 + $0x4] sm:$0xf]
  %v46 = vld [vmem:[%s43 + $0x8] sm:$0xf]
  %v47 = vld [vmem:[%s43 + $0xc] sm:$0xf]
  %v48 = vld [vmem:[%s43 + $0x10] sm:$0xf]
  %v49 = vld [vmem:[%s43 + $0x14] sm:$0xf]
  %v50 = vld [vmem:[%s43 + $0x18] sm:$0xf]
  %v51 = vld [vmem:[%s43 + $0x1c] sm:$0xf]
  %v72 = vunpack.c.l.b16 %v15
  %v73 = vunpack.c.l.b16 %v16
  %v74 = vunpack.c.l.b16 %v17
  %v75 = vunpack.c.l.b16 %v18
  %v76 = vunpack.c.l.b16 %v19
  %v77 = vunpack.c.l.b16 %v20
  %v78 = vunpack.c.l.b16 %v21
  %v79 = vunpack.c.l.b16 %v22
  %v80 = vunpack.c.l.b16 %v23
  %v81 = vunpack.c.l.b16 %v24
  %v82 = vunpack.c.l.b16 %v25
  %v83 = vunpack.c.l.b16 %v26
  %v84 = vunpack.c.l.b16 %v27
  %v85 = vunpack.c.l.b16 %v28
  %v86 = vunpack.c.l.b16 %v29
  %v87 = vunpack.c.l.b16 %v30
  %v88 = vunpack.c.l.b16 %v31
  %v89 = vunpack.c.l.b16 %v32
  %v90 = vunpack.c.l.b16 %v33
  %v91 = vunpack.c.l.b16 %v42
  %v92 = vpack.c.b16 %v73, %v72
  %v93 = vpack.c.b16 %v75, %v74
  %v94 = vpack.c.b16 %v77, %v76
  %v95 = vpack.c.b16 %v79, %v78
  %v96 = vpack.c.b16 %v81, %v80
  %v97 = vpack.c.b16 %v83, %v82
  %v98 = vpack.c.b16 %v85, %v84
  %v99 = vpack.c.b16 %v87, %v86
  %v100 = vpack.c.b16 %v89, %v88
  %v101 = vpack.c.b16 %v91, %v90
  %vm102 = vsmask.f32 7424
  %v104 = vshrl.u32 %v92, 16
  %v106 = vshll.u32 %v92, 16
  %v108 = vrot.slane %v106, 1
  %v109 = vor.u32 %v104, %v108
  %v111 = vshll.u32 %v93, 16
  %v113 = vrot.slane %v111, 1
  %v114 = vsel %vm102, %v109, %v113
  %v115 = vshrl.u32 %v93, 16
  %v117 = vor.u32 %v115, %v113
  %v119 = vshll.u32 %v94, 16
  %v121 = vrot.slane %v119, 1
  %v122 = vsel %vm102, %v117, %v121
  %v123 = vshrl.u32 %v94, 16
  %v125 = vor.u32 %v123, %v121
  %v127 = vshll.u32 %v95, 16
  %v129 = vrot.slane %v127, 1
  %v130 = vsel %vm102, %v125, %v129
  %v131 = vshrl.u32 %v95, 16
  %v133 = vor.u32 %v131, %v129
  %v135 = vshll.u32 %v96, 16
  %v137 = vrot.slane %v135, 1
  %v138 = vsel %vm102, %v133, %v137
  %v139 = vshrl.u32 %v96, 16
  %v141 = vor.u32 %v139, %v137
  %v143 = vshll.u32 %v97, 16
  %v145 = vrot.slane %v143, 1
  %v146 = vsel %vm102, %v141, %v145
  %v147 = vshrl.u32 %v97, 16
  %v149 = vor.u32 %v147, %v145
  %v151 = vshll.u32 %v98, 16
  %v153 = vrot.slane %v151, 1
  %v154 = vsel %vm102, %v149, %v153
  %v155 = vshrl.u32 %v98, 16
  %v157 = vor.u32 %v155, %v153
  %v159 = vshll.u32 %v99, 16
  %v161 = vrot.slane %v159, 1
  %v162 = vsel %vm102, %v157, %v161
  %v163 = vshrl.u32 %v99, 16
  %v165 = vor.u32 %v163, %v161
  %v167 = vshll.u32 %v100, 16
  %v169 = vrot.slane %v167, 1
  %v170 = vsel %vm102, %v165, %v169
  %v171 = vshrl.u32 %v100, 16
  %v173 = vor.u32 %v171, %v169
  %v175 = vshll.u32 %v101, 16
  %v177 = vrot.slane %v175, 1
  %v178 = vsel %vm102, %v173, %v177
  %v179 = vshrl.u32 %v101, 16
  %v181 = vor.u32 %v179, %v177
  %v190 = vunpack.c.l.b16 %v44
  %v191 = vunpack.c.l.b16 %v45
  %v192 = vunpack.c.l.b16 %v46
  %v193 = vunpack.c.l.b16 %v47
  %v194 = vunpack.c.l.b16 %v48
  %v195 = vunpack.c.l.b16 %v49
  %v196 = vunpack.c.l.b16 %v50
  %v197 = vunpack.c.l.b16 %v51
  %v198 = vpack.c.b16 %v191, %v190
  %v199 = vpack.c.b16 %v193, %v192
  %v200 = vpack.c.b16 %v195, %v194
  %v201 = vpack.c.b16 %v197, %v196
  %vm206 = vcmask 523264
  %v208 = vsel %vm206, %v114, 0
  %v211 = vsel %vm206, %v122, 0
  %v214 = vsel %vm206, %v130, 0
  %v217 = vsel %vm206, %v138, 0
  %v220 = vsel %vm206, %v146, 0
  %v223 = vsel %vm206, %v154, 0
  %v226 = vsel %vm206, %v162, 0
  %v229 = vsel %vm206, %v170, 0
  %v232 = vsel %vm206, %v178, 0
  %v235 = vsel %vm206, %v181, 0
  %237 = vmatprep.subr.bf16.mxu0 0
  %238 = vmatpush1.bf16.msra.mxu0 %v198
  %239 = vmatprep.subr.bf16.mxu0 0
  %240 = vmatpush1.bf16.msra.mxu0 %v199
  %241 = vmatprep.subr.bf16.mxu0 0
  %242 = vmatpush1.bf16.msra.mxu0 %v200
  %243 = vmatprep.subr.bf16.mxu0 0
  %244 = vmatpush1.bf16.msra.mxu0 %v201
  %245 = vmatprep.subr.bf16.mxu0 0
  %246 = vmatpush1.bf16.msra.mxu0 0
  %247 = vmatprep.subr.bf16.mxu0 0
  %248 = vmatpush1.bf16.msra.mxu0 0
  %249 = vmatprep.subr.bf16.mxu0 0
  %250 = vmatpush1.bf16.msra.mxu0 0
  %251 = vmatprep.subr.bf16.mxu0 0
  %252 = vmatpush1.bf16.msra.mxu0 0
  %253 = vmatprep.subr.bf16.mxu0 0
  %254 = vmatpush1.bf16.msra.mxu0 0
  %255 = vmatprep.subr.bf16.mxu0 0
  %256 = vmatpush1.bf16.msra.mxu0 0
  %257 = vmatprep.subr.bf16.mxu0 0
  %258 = vmatpush1.bf16.msra.mxu0 0
  %259 = vmatprep.subr.bf16.mxu0 0
  %260 = vmatpush1.bf16.msra.mxu0 0
  %261 = vmatprep.subr.bf16.mxu0 0
  %262 = vmatpush1.bf16.msra.mxu0 0
  %263 = vmatprep.subr.bf16.mxu0 0
  %264 = vmatpush1.bf16.msra.mxu0 0
  %265 = vmatprep.subr.bf16.mxu0 0
  %266 = vmatpush1.bf16.msra.mxu0 0
  %267 = vmatprep.subr.bf16.mxu0 0
  %268 = vmatpush1.bf16.msra.mxu0 0
  %269 = vmatprep.mubr.bf16.mxu0 0
  %270 = vmatmul.mubr.bf16.gmra.mrb[0].mxu0 %v208
  %v271 = vpop.f32.mrb[0].mxu0
  %v272 = vadd.f32 0.0, %v271
  %v273 = vpop.f32.mrb[0].mxu0
  %v274 = vpop.f32.mrb[0].mxu0
  %v275 = vadd.f32 0.0, %v274
  %v276 = vpop.f32.mrb[0].mxu0
  %277 = vmatprep.mubr.bf16.mxu0 0
  %278 = vmatmul.mubr.bf16.gmra.mrb[0].mxu0 %v211
  %v279 = vpop.f32.mrb[0].mxu0
  %v280 = vadd.f32 0.0, %v279
  %v281 = vpop.f32.mrb[0].mxu0
  %v282 = vpop.f32.mrb[0].mxu0
  %v283 = vadd.f32 0.0, %v282
  %v284 = vpop.f32.mrb[0].mxu0
  %285 = vmatprep.mubr.bf16.mxu0 0
  %286 = vmatmul.mubr.bf16.gmra.mrb[0].mxu0 %v214
  %v287 = vpop.f32.mrb[0].mxu0
  %v288 = vadd.f32 0.0, %v287
  %v289 = vpop.f32.mrb[0].mxu0
  %v290 = vpop.f32.mrb[0].mxu0
  %v291 = vadd.f32 0.0, %v290
  %v292 = vpop.f32.mrb[0].mxu0
  %293 = vmatprep.mubr.bf16.mxu0 0
  %294 = vmatmul.mubr.bf16.gmra.mrb[0].mxu0 %v217
  %v295 = vpop.f32.mrb[0].mxu0
  %v296 = vadd.f32 0.0, %v295
  %v297 = vpop.f32.mrb[0].mxu0
  %v298 = vpop.f32.mrb[0].mxu0
  %v299 = vadd.f32 0.0, %v298
  %v300 = vpop.f32.mrb[0].mxu0
  %301 = vmatprep.mubr.bf16.mxu0 0
  %302 = vmatmul.mubr.bf16.gmra.mrb[0].mxu0 %v220
  %v303 = vpop.f32.mrb[0].mxu0
  %v304 = vadd.f32 0.0, %v303
  %v305 = vpop.f32.mrb[0].mxu0
  %v306 = vpop.f32.mrb[0].mxu0
  %v307 = vadd.f32 0.0, %v306
  %v308 = vpop.f32.mrb[0].mxu0
  %309 = vmatprep.mubr.bf16.mxu0 0
  %310 = vmatmul.mubr.bf16.gmra.mrb[0].mxu0 %v223
  %v311 = vpop.f32.mrb[0].mxu0
  %v312 = vadd.f32 0.0, %v311
  %v313 = vpop.f32.mrb[0].mxu0
  %v314 = vpop.f32.mrb[0].mxu0
  %v315 = vadd.f32 0.0, %v314
  %v316 = vpop.f32.mrb[0].mxu0
  %317 = vmatprep.mubr.bf16.mxu0 0
  %318 = vmatmul.mubr.bf16.gmra.mrb[0].mxu0 %v226
  %v319 = vpop.f32.mrb[0].mxu0
  %v320 = vadd.f32 0.0, %v319
  %v321 = vpop.f32.mrb[0].mxu0
  %v322 = vpop.f32.mrb[0].mxu0
  %v323 = vadd.f32 0.0, %v322
  %v324 = vpop.f32.mrb[0].mxu0
  %325 = vmatprep.mubr.bf16.mxu0 0
  %326 = vmatmul.mubr.bf16.gmra.mrb[0].mxu0 %v229
  %v327 = vpop.f32.mrb[0].mxu0
  %v328 = vadd.f32 0.0, %v327
  %v329 = vpop.f32.mrb[0].mxu0
  %v330 = vpop.f32.mrb[0].mxu0
  %v331 = vadd.f32 0.0, %v330
  %v332 = vpop.f32.mrb[0].mxu0
  %333 = vmatprep.mubr.bf16.mxu0 0
  %334 = vmatmul.mubr.bf16.gmra.mrb[0].mxu0 %v232
  %v335 = vpop.f32.mrb[0].mxu0
  %v336 = vadd.f32 0.0, %v335
  %v337 = vpop.f32.mrb[0].mxu0
  %v338 = vpop.f32.mrb[0].mxu0
  %v339 = vadd.f32 0.0, %v338
  %v340 = vpop.f32.mrb[0].mxu0
  %341 = vmatprep.mubr.bf16.mxu0 0
  %342 = vmatmul.mubr.bf16.gmra.mrb[0].mxu0 %v235
  %v343 = vpop.f32.mrb[0].mxu0
  %v344 = vadd.f32 0.0, %v343
  %v345 = vpop.f32.mrb[0].mxu0
  %v346 = vpop.f32.mrb[0].mxu0
  %v347 = vpop.f32.mrb[0].mxu0
  %348 = vdwg.mxu0
  %v349 = vpack.c.b16 %v90, %v90
  %v358 = vunpack.c.l.b16 %v34
  %v359 = vunpack.c.l.b16 %v35
  %v360 = vunpack.c.l.b16 %v36
  %v361 = vunpack.c.l.b16 %v37
  %v362 = vunpack.c.l.b16 %v38
  %v363 = vunpack.c.l.b16 %v39
  %v364 = vunpack.c.l.b16 %v40
  %v365 = vunpack.c.l.b16 %v41
  %v366 = vpack.c.b16 %v359, %v358
  %v367 = vpack.c.b16 %v361, %v360
  %v368 = vpack.c.b16 %v363, %v362
  %v369 = vpack.c.b16 %v365, %v364
  %v374 = vsel %vm206, %v92, 0
  %v376 = vsel %vm206, %v93, 0
  %v378 = vsel %vm206, %v94, 0
  %v380 = vsel %vm206, %v95, 0
  %v382 = vsel %vm206, %v96, 0
  %v384 = vsel %vm206, %v97, 0
  %v386 = vsel %vm206, %v98, 0
  %v388 = vsel %vm206, %v99, 0
  %v390 = vsel %vm206, %v100, 0
  %v393 = vsel %vm206, %v349, 0
  %395 = vmatprep.subr.bf16.mxu0 0
  %396 = vmatpush1.bf16.msra.mxu0 %v366
  %397 = vmatprep.subr.bf16.mxu0 0
  %398 = vmatpush1.bf16.msra.mxu0 %v367
  %399 = vmatprep.subr.bf16.mxu0 0
  %400 = vmatpush1.bf16.msra.mxu0 %v368
  %401 = vmatprep.subr.bf16.mxu0 0
  %402 = vmatpush1.bf16.msra.mxu0 %v369
  %403 = vmatprep.subr.bf16.mxu0 0
  %404 = vmatpush1.bf16.msra.mxu0 0
  %405 = vmatprep.subr.bf16.mxu0 0
  %406 = vmatpush1.bf16.msra.mxu0 0
  %407 = vmatprep.subr.bf16.mxu0 0
  %408 = vmatpush1.bf16.msra.mxu0 0
  %409 = vmatprep.subr.bf16.mxu0 0
  %410 = vmatpush1.bf16.msra.mxu0 0
  %411 = vmatprep.subr.bf16.mxu0 0
  %412 = vmatpush1.bf16.msra.mxu0 0
  %413 = vmatprep.subr.bf16.mxu0 0
  %414 = vmatpush1.bf16.msra.mxu0 0
  %415 = vmatprep.subr.bf16.mxu0 0
  %416 = vmatpush1.bf16.msra.mxu0 0
  %417 = vmatprep.subr.bf16.mxu0 0
  %418 = vmatpush1.bf16.msra.mxu0 0
  %419 = vmatprep.subr.bf16.mxu0 0
  %420 = vmatpush1.bf16.msra.mxu0 0
  %421 = vmatprep.subr.bf16.mxu0 0
  %422 = vmatpush1.bf16.msra.mxu0 0
  %423 = vmatprep.subr.bf16.mxu0 0
  %424 = vmatpush1.bf16.msra.mxu0 0
  %425 = vmatprep.subr.bf16.mxu0 0
  %426 = vmatpush1.bf16.msra.mxu0 0
  %427 = vmatprep.mubr.bf16.mxu0 0
  %428 = vmatmul.mubr.bf16.gmra.mrb[0].mxu0 %v374
  %v429 = vpop.f32.mrb[0].mxu0
  %v430 = vadd.f32 %v272, %v429
  %v431 = vpop.f32.mrb[0].mxu0
  %v432 = vpop.f32.mrb[0].mxu0
  %v433 = vadd.f32 %v275, %v432
  %v434 = vpop.f32.mrb[0].mxu0
  %435 = vmatprep.mubr.bf16.mxu0 0
  %436 = vmatmul.mubr.bf16.gmra.mrb[0].mxu0 %v376
  %v437 = vpop.f32.mrb[0].mxu0
  %v438 = vadd.f32 %v280, %v437
  %v439 = vpop.f32.mrb[0].mxu0
  %v440 = vpop.f32.mrb[0].mxu0
  %v441 = vadd.f32 %v283, %v440
  %v442 = vpop.f32.mrb[0].mxu0
  %443 = vmatprep.mubr.bf16.mxu0 0
  %444 = vmatmul.mubr.bf16.gmra.mrb[0].mxu0 %v378
  %v445 = vpop.f32.mrb[0].mxu0
  %v446 = vadd.f32 %v288, %v445
  %v447 = vpop.f32.mrb[0].mxu0
  %v448 = vpop.f32.mrb[0].mxu0
  %v449 = vadd.f32 %v291, %v448
  %v450 = vpop.f32.mrb[0].mxu0
  %451 = vmatprep.mubr.bf16.mxu0 0
  %452 = vmatmul.mubr.bf16.gmra.mrb[0].mxu0 %v380
  %v453 = vpop.f32.mrb[0].mxu0
  %v454 = vadd.f32 %v296, %v453
  %v455 = vpop.f32.mrb[0].mxu0
  %v456 = vpop.f32.mrb[0].mxu0
  %v457 = vadd.f32 %v299, %v456
  %v458 = vpop.f32.mrb[0].mxu0
  %459 = vmatprep.mubr.bf16.mxu0 0
  %460 = vmatmul.mubr.bf16.gmra.mrb[0].mxu0 %v382
  %v461 = vpop.f32.mrb[0].mxu0
  %v462 = vadd.f32 %v304, %v461
  %v463 = vpop.f32.mrb[0].mxu0
  %v464 = vpop.f32.mrb[0].mxu0
  %v465 = vadd.f32 %v307, %v464
  %v466 = vpop.f32.mrb[0].mxu0
  %467 = vmatprep.mubr.bf16.mxu0 0
  %468 = vmatmul.mubr.bf16.gmra.mrb[0].mxu0 %v384
  %v469 = vpop.f32.mrb[0].mxu0
  %v470 = vadd.f32 %v312, %v469
  %v471 = vpop.f32.mrb[0].mxu0
  %v472 = vpop.f32.mrb[0].mxu0
  %v473 = vadd.f32 %v315, %v472
  %v474 = vpop.f32.mrb[0].mxu0
  %475 = vmatprep.mubr.bf16.mxu0 0
  %476 = vmatmul.mubr.bf16.gmra.mrb[0].mxu0 %v386
  %v477 = vpop.f32.mrb[0].mxu0
  %v478 = vadd.f32 %v320, %v477
  %v479 = vpop.f32.mrb[0].mxu0
  %v480 = vpop.f32.mrb[0].mxu0
  %v481 = vadd.f32 %v323, %v480
  %v482 = vpop.f32.mrb[0].mxu0
  %483 = vmatprep.mubr.bf16.mxu0 0
  %484 = vmatmul.mubr.bf16.gmra.mrb[0].mxu0 %v388
  %v485 = vpop.f32.mrb[0].mxu0
  %v486 = vadd.f32 %v328, %v485
  %v487 = vpop.f32.mrb[0].mxu0
  %v488 = vpop.f32.mrb[0].mxu0
  %v489 = vadd.f32 %v331, %v488
  %v490 = vpop.f32.mrb[0].mxu0
  %491 = vmatprep.mubr.bf16.mxu0 0
  %492 = vmatmul.mubr.bf16.gmra.mrb[0].mxu0 %v390
  %v493 = vpop.f32.mrb[0].mxu0
  %v494 = vadd.f32 %v336, %v493
  %v495 = vpop.f32.mrb[0].mxu0
  %v496 = vpop.f32.mrb[0].mxu0
  %v497 = vadd.f32 %v339, %v496
  %v498 = vpop.f32.mrb[0].mxu0
  %499 = vmatprep.mubr.bf16.mxu0 0
  %500 = vmatmul.mubr.bf16.gmra.mrb[0].mxu0 %v393
  %v501 = vpop.f32.mrb[0].mxu0
  %v502 = vadd.f32 %v344, %v501
  %v503 = vpop.f32.mrb[0].mxu0
  %v504 = vpop.f32.mrb[0].mxu0
  %v505 = vpop.f32.mrb[0].mxu0
  %506 = vdwg.mxu0
  %v507 = vld [vmem:[%s0 + $0x4] sm:$0xf]
  %v508 = vld [vmem:[%s0 + $0x8] sm:$0xf]
  %v509 = vld [vmem:[%s0 + $0xc] sm:$0xf]
  %v510 = vld [vmem:[%s0 + $0x10] sm:$0xf]
  %v511 = vld [vmem:[%s0 + $0x14] sm:$0xf]
  %v512 = vld [vmem:[%s0 + $0x18] sm:$0xf]
  %v513 = vld [vmem:[%s0 + $0x1c] sm:$0xf]
  %v514 = vld [vmem:[%s0 + $0x20] sm:$0xf]
  %v515 = vld [vmem:[%s0 + $0x24] sm:$0xf]
  %v516 = vld [vmem:[%s0 + $0x28] sm:$0xf]
  %v517 = vld [vmem:[%s0 + $0x2c] sm:$0xf]
  %v518 = vld [vmem:[%s0 + $0x30] sm:$0xf]
  %v519 = vld [vmem:[%s0 + $0x34] sm:$0xf]
  %v520 = vld [vmem:[%s0 + $0x38] sm:$0xf]
  %v521 = vld [vmem:[%s0 + $0x3c] sm:$0xf]
  %v522 = vld [vmem:[%s0 + $0x40] sm:$0xf]
  %v523 = vld [vmem:[%s0 + $0x44] sm:$0xf]
  %v524 = vld [vmem:[%s0 + $0x48] sm:$0xf]
  %v525 = vld [vmem:[%s0 + $0x4c] sm:$0xf]
  %v526 = vld [vmem:[%s0 + $0x50] sm:$0x1]
  %s527 = scalar_lea.vmem %s1, 64
  %v528 = vld [vmem:[%s527] sm:$0xf]
  %v529 = vld [vmem:[%s527 + $0x4] sm:$0xf]
  %v530 = vld [vmem:[%s527 + $0x8] sm:$0xf]
  %v531 = vld [vmem:[%s527 + $0xc] sm:$0xf]
  %v532 = vld [vmem:[%s527 + $0x10] sm:$0xf]
  %v533 = vld [vmem:[%s527 + $0x14] sm:$0xf]
  %v534 = vld [vmem:[%s527 + $0x18] sm:$0xf]
  %v535 = vld [vmem:[%s527 + $0x1c] sm:$0xf]
  %v556 = vunpack.c.l.b16 %v507
  %v557 = vunpack.c.l.b16 %v508
  %v558 = vunpack.c.l.b16 %v509
  %v559 = vunpack.c.l.b16 %v510
  %v560 = vunpack.c.l.b16 %v511
  %v561 = vunpack.c.l.b16 %v512
  %v562 = vunpack.c.l.b16 %v513
  %v563 = vunpack.c.l.b16 %v514
  %v564 = vunpack.c.l.b16 %v515
  %v565 = vunpack.c.l.b16 %v516
  %v566 = vunpack.c.l.b16 %v517
  %v567 = vunpack.c.l.b16 %v518
  %v568 = vunpack.c.l.b16 %v519
  %v569 = vunpack.c.l.b16 %v520
  %v570 = vunpack.c.l.b16 %v521
  %v571 = vunpack.c.l.b16 %v522
  %v572 = vunpack.c.l.b16 %v523
  %v573 = vunpack.c.l.b16 %v524
  %v574 = vunpack.c.l.b16 %v525
  %v575 = vunpack.c.l.b16 %v526
  %v576 = vpack.c.b16 %v557, %v556
  %v577 = vpack.c.b16 %v559, %v558
  %v578 = vpack.c.b16 %v561, %v560
  %v579 = vpack.c.b16 %v563, %v562
  %v580 = vpack.c.b16 %v565, %v564
  %v581 = vpack.c.b16 %v567, %v566
  %v582 = vpack.c.b16 %v569, %v568
  %v583 = vpack.c.b16 %v571, %v570
  %v584 = vpack.c.b16 %v573, %v572
  %v585 = vpack.c.b16 %v575, %v574
  %v587 = vshrl.u32 %v576, 16
  %v589 = vshll.u32 %v576, 16
  %v591 = vrot.slane %v589, 1
  %v592 = vor.u32 %v587, %v591
  %v594 = vshll.u32 %v577, 16
  %v596 = vrot.slane %v594, 1
  %v597 = vsel %vm102, %v592, %v596
  %v598 = vshrl.u32 %v577, 16
  %v600 = vor.u32 %v598, %v596
  %v602 = vshll.u32 %v578, 16
  %v604 = vrot.slane %v602, 1
  %v605 = vsel %vm102, %v600, %v604
  %v606 = vshrl.u32 %v578, 16
  %v608 = vor.u32 %v606, %v604
  %v610 = vshll.u32 %v579, 16
  %v612 = vrot.slane %v610, 1
  %v613 = vsel %vm102, %v608, %v612
  %v614 = vshrl.u32 %v579, 16
  %v616 = vor.u32 %v614, %v612
  %v618 = vshll.u32 %v580, 16
  %v620 = vrot.slane %v618, 1
  %v621 = vsel %vm102, %v616, %v620
  %v622 = vshrl.u32 %v580, 16
  %v624 = vor.u32 %v622, %v620
  %v626 = vshll.u32 %v581, 16
  %v628 = vrot.slane %v626, 1
  %v629 = vsel %vm102, %v624, %v628
  %v630 = vshrl.u32 %v581, 16
  %v632 = vor.u32 %v630, %v628
  %v634 = vshll.u32 %v582, 16
  %v636 = vrot.slane %v634, 1
  %v637 = vsel %vm102, %v632, %v636
  %v638 = vshrl.u32 %v582, 16
  %v640 = vor.u32 %v638, %v636
  %v642 = vshll.u32 %v583, 16
  %v644 = vrot.slane %v642, 1
  %v645 = vsel %vm102, %v640, %v644
  %v646 = vshrl.u32 %v583, 16
  %v648 = vor.u32 %v646, %v644
  %v650 = vshll.u32 %v584, 16
  %v652 = vrot.slane %v650, 1
  %v653 = vsel %vm102, %v648, %v652
  %v654 = vshrl.u32 %v584, 16
  %v656 = vor.u32 %v654, %v652
  %v658 = vshll.u32 %v585, 16
  %v660 = vrot.slane %v658, 1
  %v661 = vsel %vm102, %v656, %v660
  %v662 = vshrl.u32 %v585, 16
  %v664 = vor.u32 %v662, %v660
  %v673 = vunpack.c.l.b16 %v528
  %v674 = vunpack.c.l.b16 %v529
  %v675 = vunpack.c.l.b16 %v530
  %v676 = vunpack.c.l.b16 %v531
  %v677 = vunpack.c.l.b16 %v532
  %v678 = vunpack.c.l.b16 %v533
  %v679 = vunpack.c.l.b16 %v534
  %v680 = vunpack.c.l.b16 %v535
  %v681 = vpack.c.b16 %v674, %v673
  %v682 = vpack.c.b16 %v676, %v675
  %v683 = vpack.c.b16 %v678, %v677
  %v684 = vpack.c.b16 %v680, %v679
  %v690 = vsel %vm206, %v597, 0
  %v693 = vsel %vm206, %v605, 0
  %v696 = vsel %vm206, %v613, 0
  %v699 = vsel %vm206, %v621, 0
  %v702 = vsel %vm206, %v629, 0
  %v705 = vsel %vm206, %v637, 0
  %v708 = vsel %vm206, %v645, 0
  %v711 = vsel %vm206, %v653, 0
  %v714 = vsel %vm206, %v661, 0
  %v717 = vsel %vm206, %v664, 0
  %719 = vmatprep.subr.bf16.mxu0 0
  %720 = vmatpush1.bf16.msra.mxu0 %v681
  %721 = vmatprep.subr.bf16.mxu0 0
  %722 = vmatpush1.bf16.msra.mxu0 %v682
  %723 = vmatprep.subr.bf16.mxu0 0
  %724 = vmatpush1.bf16.msra.mxu0 %v683
  %725 = vmatprep.subr.bf16.mxu0 0
  %726 = vmatpush1.bf16.msra.mxu0 %v684
  %727 = vmatprep.subr.bf16.mxu0 0
  %728 = vmatpush1.bf16.msra.mxu0 0
  %729 = vmatprep.subr.bf16.mxu0 0
  %730 = vmatpush1.bf16.msra.mxu0 0
  %731 = vmatprep.subr.bf16.mxu0 0
  %732 = vmatpush1.bf16.msra.mxu0 0
  %733 = vmatprep.subr.bf16.mxu0 0
  %734 = vmatpush1.bf16.msra.mxu0 0
  %735 = vmatprep.subr.bf16.mxu0 0
  %736 = vmatpush1.bf16.msra.mxu0 0
  %737 = vmatprep.subr.bf16.mxu0 0
  %738 = vmatpush1.bf16.msra.mxu0 0
  %739 = vmatprep.subr.bf16.mxu0 0
  %740 = vmatpush1.bf16.msra.mxu0 0
  %741 = vmatprep.subr.bf16.mxu0 0
  %742 = vmatpush1.bf16.msra.mxu0 0
  %743 = vmatprep.subr.bf16.mxu0 0
  %744 = vmatpush1.bf16.msra.mxu0 0
  %745 = vmatprep.subr.bf16.mxu0 0
  %746 = vmatpush1.bf16.msra.mxu0 0
  %747 = vmatprep.subr.bf16.mxu0 0
  %748 = vmatpush1.bf16.msra.mxu0 0
  %749 = vmatprep.subr.bf16.mxu0 0
  %750 = vmatpush1.bf16.msra.mxu0 0
  %751 = vmatprep.mubr.bf16.mxu0 0
  %752 = vmatmul.mubr.bf16.gmra.mrb[0].mxu0 %v690
  %v753 = vpop.f32.mrb[0].mxu0
  %v754 = vadd.f32 0.0, %v753
  %v755 = vpop.f32.mrb[0].mxu0
  %v756 = vpop.f32.mrb[0].mxu0
  %v757 = vadd.f32 0.0, %v756
  %v758 = vpop.f32.mrb[0].mxu0
  %759 = vmatprep.mubr.bf16.mxu0 0
  %760 = vmatmul.mubr.bf16.gmra.mrb[0].mxu0 %v693
  %v761 = vpop.f32.mrb[0].mxu0
  %v762 = vadd.f32 0.0, %v761
  %v763 = vpop.f32.mrb[0].mxu0
  %v764 = vpop.f32.mrb[0].mxu0
  %v765 = vadd.f32 0.0, %v764
  %v766 = vpop.f32.mrb[0].mxu0
  %767 = vmatprep.mubr.bf16.mxu0 0
  %768 = vmatmul.mubr.bf16.gmra.mrb[0].mxu0 %v696
  %v769 = vpop.f32.mrb[0].mxu0
  %v770 = vadd.f32 0.0, %v769
  %v771 = vpop.f32.mrb[0].mxu0
  %v772 = vpop.f32.mrb[0].mxu0
  %v773 = vadd.f32 0.0, %v772
  %v774 = vpop.f32.mrb[0].mxu0
  %775 = vmatprep.mubr.bf16.mxu0 0
  %776 = vmatmul.mubr.bf16.gmra.mrb[0].mxu0 %v699
  %v777 = vpop.f32.mrb[0].mxu0
  %v778 = vadd.f32 0.0, %v777
  %v779 = vpop.f32.mrb[0].mxu0
  %v780 = vpop.f32.mrb[0].mxu0
  %v781 = vadd.f32 0.0, %v780
  %v782 = vpop.f32.mrb[0].mxu0
  %783 = vmatprep.mubr.bf16.mxu0 0
  %784 = vmatmul.mubr.bf16.gmra.mrb[0].mxu0 %v702
  %v785 = vpop.f32.mrb[0].mxu0
  %v786 = vadd.f32 0.0, %v785
  %v787 = vpop.f32.mrb[0].mxu0
  %v788 = vpop.f32.mrb[0].mxu0
  %v789 = vadd.f32 0.0, %v788
  %v790 = vpop.f32.mrb[0].mxu0
  %791 = vmatprep.mubr.bf16.mxu0 0
  %792 = vmatmul.mubr.bf16.gmra.mrb[0].mxu0 %v705
  %v793 = vpop.f32.mrb[0].mxu0
  %v794 = vadd.f32 0.0, %v793
  %v795 = vpop.f32.mrb[0].mxu0
  %v796 = vpop.f32.mrb[0].mxu0
  %v797 = vadd.f32 0.0, %v796
  %v798 = vpop.f32.mrb[0].mxu0
  %799 = vmatprep.mubr.bf16.mxu0 0
  %800 = vmatmul.mubr.bf16.gmra.mrb[0].mxu0 %v708
  %v801 = vpop.f32.mrb[0].mxu0
  %v802 = vadd.f32 0.0, %v801
  %v803 = vpop.f32.mrb[0].mxu0
  %v804 = vpop.f32.mrb[0].mxu0
  %v805 = vadd.f32 0.0, %v804
  %v806 = vpop.f32.mrb[0].mxu0
  %807 = vmatprep.mubr.bf16.mxu0 0
  %808 = vmatmul.mubr.bf16.gmra.mrb[0].mxu0 %v711
  %v809 = vpop.f32.mrb[0].mxu0
  %v810 = vadd.f32 0.0, %v809
  %v811 = vpop.f32.mrb[0].mxu0
  %v812 = vpop.f32.mrb[0].mxu0
  %v813 = vadd.f32 0.0, %v812
  %v814 = vpop.f32.mrb[0].mxu0
  %815 = vmatprep.mubr.bf16.mxu0 0
  %816 = vmatmul.mubr.bf16.gmra.mrb[0].mxu0 %v714
  %v817 = vpop.f32.mrb[0].mxu0
  %v818 = vadd.f32 0.0, %v817
  %v819 = vpop.f32.mrb[0].mxu0
  %v820 = vpop.f32.mrb[0].mxu0
  %v821 = vadd.f32 0.0, %v820
  %v822 = vpop.f32.mrb[0].mxu0
  %823 = vmatprep.mubr.bf16.mxu0 0
  %824 = vmatmul.mubr.bf16.gmra.mrb[0].mxu0 %v717
  %v825 = vpop.f32.mrb[0].mxu0
  %v826 = vadd.f32 0.0, %v825
  %v827 = vpop.f32.mrb[0].mxu0
  %v828 = vpop.f32.mrb[0].mxu0
  %v829 = vpop.f32.mrb[0].mxu0
  %830 = vdwg.mxu0
  %v831 = vadd.f32 %v430, %v754
  %v832 = vadd.f32 %v433, %v757
  %v833 = vadd.f32 %v438, %v762
  %v834 = vadd.f32 %v441, %v765
  %v835 = vadd.f32 %v446, %v770
  %v836 = vadd.f32 %v449, %v773
  %v837 = vadd.f32 %v454, %v778
  %v838 = vadd.f32 %v457, %v781
  %v839 = vadd.f32 %v462, %v786
  %v840 = vadd.f32 %v465, %v789
  %v841 = vadd.f32 %v470, %v794
  %v842 = vadd.f32 %v473, %v797
  %v843 = vadd.f32 %v478, %v802
  %v844 = vadd.f32 %v481, %v805
  %v845 = vadd.f32 %v486, %v810
  %v846 = vadd.f32 %v489, %v813
  %v847 = vadd.f32 %v494, %v818
  %v848 = vadd.f32 %v497, %v821
  %v849 = vadd.f32 %v502, %v826
  %v850 = vld [vmem:[%s0 + $0x4] sm:$0xe]
  %s851 = scalar_lea.vmem %s1, 96
  %v852 = vld [vmem:[%s851] sm:$0xf]
  %v853 = vld [vmem:[%s851 + $0x4] sm:$0xf]
  %v854 = vld [vmem:[%s851 + $0x8] sm:$0xf]
  %v855 = vld [vmem:[%s851 + $0xc] sm:$0xf]
  %v856 = vld [vmem:[%s851 + $0x10] sm:$0xf]
  %v857 = vld [vmem:[%s851 + $0x14] sm:$0xf]
  %v858 = vld [vmem:[%s851 + $0x18] sm:$0xf]
  %v859 = vld [vmem:[%s851 + $0x1c] sm:$0xf]
  %v861 = vunpack.c.l.b16 %v850
  %v862 = vpack.c.b16 %v557, %v861
  %vm863 = vcmask 1046528
  %v864 = vrot.slane %v862, 1
  %v865 = vrot.slane %v577, 1
  %v866 = vsel %vm863, %v864, %v865
  %v867 = vrot.slane %v578, 1
  %v868 = vsel %vm863, %v865, %v867
  %v869 = vrot.slane %v579, 1
  %v870 = vsel %vm863, %v867, %v869
  %v871 = vrot.slane %v580, 1
  %v872 = vsel %vm863, %v869, %v871
  %v873 = vrot.slane %v581, 1
  %v874 = vsel %vm863, %v871, %v873
  %v875 = vrot.slane %v582, 1
  %v876 = vsel %vm863, %v873, %v875
  %v877 = vrot.slane %v583, 1
  %v878 = vsel %vm863, %v875, %v877
  %v879 = vrot.slane %v584, 1
  %v880 = vsel %vm863, %v877, %v879
  %v881 = vrot.slane %v585, 1
  %v882 = vsel %vm863, %v879, %v881
  %v891 = vunpack.c.l.b16 %v852
  %v892 = vunpack.c.l.b16 %v853
  %v893 = vunpack.c.l.b16 %v854
  %v894 = vunpack.c.l.b16 %v855
  %v895 = vunpack.c.l.b16 %v856
  %v896 = vunpack.c.l.b16 %v857
  %v897 = vunpack.c.l.b16 %v858
  %v898 = vunpack.c.l.b16 %v859
  %v899 = vpack.c.b16 %v892, %v891
  %v900 = vpack.c.b16 %v894, %v893
  %v901 = vpack.c.b16 %v896, %v895
  %v902 = vpack.c.b16 %v898, %v897
  %v908 = vsel %vm206, %v866, 0
  %v911 = vsel %vm206, %v868, 0
  %v914 = vsel %vm206, %v870, 0
  %v917 = vsel %vm206, %v872, 0
  %v920 = vsel %vm206, %v874, 0
  %v923 = vsel %vm206, %v876, 0
  %v926 = vsel %vm206, %v878, 0
  %v929 = vsel %vm206, %v880, 0
  %v932 = vsel %vm206, %v882, 0
  %v935 = vsel %vm206, %v881, 0
  %937 = vmatprep.subr.bf16.mxu0 0
  %938 = vmatpush1.bf16.msra.mxu0 %v899
  %939 = vmatprep.subr.bf16.mxu0 0
  %940 = vmatpush1.bf16.msra.mxu0 %v900
  %941 = vmatprep.subr.bf16.mxu0 0
  %942 = vmatpush1.bf16.msra.mxu0 %v901
  %943 = vmatprep.subr.bf16.mxu0 0
  %944 = vmatpush1.bf16.msra.mxu0 %v902
  %945 = vmatprep.subr.bf16.mxu0 0
  %946 = vmatpush1.bf16.msra.mxu0 0
  %947 = vmatprep.subr.bf16.mxu0 0
  %948 = vmatpush1.bf16.msra.mxu0 0
  %949 = vmatprep.subr.bf16.mxu0 0
  %950 = vmatpush1.bf16.msra.mxu0 0
  %951 = vmatprep.subr.bf16.mxu0 0
  %952 = vmatpush1.bf16.msra.mxu0 0
  %953 = vmatprep.subr.bf16.mxu0 0
  %954 = vmatpush1.bf16.msra.mxu0 0
  %955 = vmatprep.subr.bf16.mxu0 0
  %956 = vmatpush1.bf16.msra.mxu0 0
  %957 = vmatprep.subr.bf16.mxu0 0
  %958 = vmatpush1.bf16.msra.mxu0 0
  %959 = vmatprep.subr.bf16.mxu0 0
  %960 = vmatpush1.bf16.msra.mxu0 0
  %961 = vmatprep.subr.bf16.mxu0 0
  %962 = vmatpush1.bf16.msra.mxu0 0
  %963 = vmatprep.subr.bf16.mxu0 0
  %964 = vmatpush1.bf16.msra.mxu0 0
  %965 = vmatprep.subr.bf16.mxu0 0
  %966 = vmatpush1.bf16.msra.mxu0 0
  %967 = vmatprep.subr.bf16.mxu0 0
  %968 = vmatpush1.bf16.msra.mxu0 0
  %969 = vmatprep.mubr.bf16.mxu0 0
  %970 = vmatmul.mubr.bf16.gmra.mrb[0].mxu0 %v908
  %v971 = vpop.f32.mrb[0].mxu0
  %v972 = vadd.f32 0.0, %v971
  %v973 = vpop.f32.mrb[0].mxu0
  %v974 = vpop.f32.mrb[0].mxu0
  %v975 = vadd.f32 0.0, %v974
  %v976 = vpop.f32.mrb[0].mxu0
  %977 = vmatprep.mubr.bf16.mxu0 0
  %978 = vmatmul.mubr.bf16.gmra.mrb[0].mxu0 %v911
  %v979 = vpop.f32.mrb[0].mxu0
  %v980 = vadd.f32 0.0, %v979
  %v981 = vpop.f32.mrb[0].mxu0
  %v982 = vpop.f32.mrb[0].mxu0
  %v983 = vadd.f32 0.0, %v982
  %v984 = vpop.f32.mrb[0].mxu0
  %985 = vmatprep.mubr.bf16.mxu0 0
  %986 = vmatmul.mubr.bf16.gmra.mrb[0].mxu0 %v914
  %v987 = vpop.f32.mrb[0].mxu0
  %v988 = vadd.f32 0.0, %v987
  %v989 = vpop.f32.mrb[0].mxu0
  %v990 = vpop.f32.mrb[0].mxu0
  %v991 = vadd.f32 0.0, %v990
  %v992 = vpop.f32.mrb[0].mxu0
  %993 = vmatprep.mubr.bf16.mxu0 0
  %994 = vmatmul.mubr.bf16.gmra.mrb[0].mxu0 %v917
  %v995 = vpop.f32.mrb[0].mxu0
  %v996 = vadd.f32 0.0, %v995
  %v997 = vpop.f32.mrb[0].mxu0
  %v998 = vpop.f32.mrb[0].mxu0
  %v999 = vadd.f32 0.0, %v998
  %v1000 = vpop.f32.mrb[0].mxu0
  %1001 = vmatprep.mubr.bf16.mxu0 0
  %1002 = vmatmul.mubr.bf16.gmra.mrb[0].mxu0 %v920
  %v1003 = vpop.f32.mrb[0].mxu0
  %v1004 = vadd.f32 0.0, %v1003
  %v1005 = vpop.f32.mrb[0].mxu0
  %v1006 = vpop.f32.mrb[0].mxu0
  %v1007 = vadd.f32 0.0, %v1006
  %v1008 = vpop.f32.mrb[0].mxu0
  %1009 = vmatprep.mubr.bf16.mxu0 0
  %1010 = vmatmul.mubr.bf16.gmra.mrb[0].mxu0 %v923
  %v1011 = vpop.f32.mrb[0].mxu0
  %v1012 = vadd.f32 0.0, %v1011
  %v1013 = vpop.f32.mrb[0].mxu0
  %v1014 = vpop.f32.mrb[0].mxu0
  %v1015 = vadd.f32 0.0, %v1014
  %v1016 = vpop.f32.mrb[0].mxu0
  %1017 = vmatprep.mubr.bf16.mxu0 0
  %1018 = vmatmul.mubr.bf16.gmra.mrb[0].mxu0 %v926
  %v1019 = vpop.f32.mrb[0].mxu0
  %v1020 = vadd.f32 0.0, %v1019
  %v1021 = vpop.f32.mrb[0].mxu0
  %v1022 = vpop.f32.mrb[0].mxu0
  %v1023 = vadd.f32 0.0, %v1022
  %v1024 = vpop.f32.mrb[0].mxu0
  %1025 = vmatprep.mubr.bf16.mxu0 0
  %1026 = vmatmul.mubr.bf16.gmra.mrb[0].mxu0 %v929
  %v1027 = vpop.f32.mrb[0].mxu0
  %v1028 = vadd.f32 0.0, %v1027
  %v1029 = vpop.f32.mrb[0].mxu0
  %v1030 = vpop.f32.mrb[0].mxu0
  %v1031 = vadd.f32 0.0, %v1030
  %v1032 = vpop.f32.mrb[0].mxu0
  %1033 = vmatprep.mubr.bf16.mxu0 0
  %1034 = vmatmul.mubr.bf16.gmra.mrb[0].mxu0 %v932
  %v1035 = vpop.f32.mrb[0].mxu0
  %v1036 = vadd.f32 0.0, %v1035
  %v1037 = vpop.f32.mrb[0].mxu0
  %v1038 = vpop.f32.mrb[0].mxu0
  %v1039 = vadd.f32 0.0, %v1038
  %v1040 = vpop.f32.mrb[0].mxu0
  %1041 = vmatprep.mubr.bf16.mxu0 0
  %1042 = vmatmul.mubr.bf16.gmra.mrb[0].mxu0 %v935
  %v1043 = vpop.f32.mrb[0].mxu0
  %v1044 = vadd.f32 0.0, %v1043
  %v1045 = vpop.f32.mrb[0].mxu0
  %v1046 = vpop.f32.mrb[0].mxu0
  %v1047 = vpop.f32.mrb[0].mxu0
  %1048 = vdwg.mxu0
  %v1049 = vadd.f32 %v831, %v972
  %v1050 = vadd.f32 %v832, %v975
  %v1051 = vadd.f32 %v833, %v980
  %v1052 = vadd.f32 %v834, %v983
  %v1053 = vadd.f32 %v835, %v988
  %v1054 = vadd.f32 %v836, %v991
  %v1055 = vadd.f32 %v837, %v996
  %v1056 = vadd.f32 %v838, %v999
  %v1057 = vadd.f32 %v839, %v1004
  %v1058 = vadd.f32 %v840, %v1007
  %v1059 = vadd.f32 %v841, %v1012
  %v1060 = vadd.f32 %v842, %v1015
  %v1061 = vadd.f32 %v843, %v1020
  %v1062 = vadd.f32 %v844, %v1023
  %v1063 = vadd.f32 %v845, %v1028
  %v1064 = vadd.f32 %v846, %v1031
  %v1065 = vadd.f32 %v847, %v1036
  %v1066 = vadd.f32 %v848, %v1039
  %v1067 = vadd.f32 %v849, %v1044
  %v1068 = vld [vmem:[%s2] sm:$0x1]
  %v1070 = vlaneseq
  %v1071 = vshrl.u32 %v1070, 7
  %v1072 = vsub.s32 0, %v1071
  %v1073 = vrot.slane %v1068, %v1072
  %v1075 = vadd.f32 %v1049, %v1073
  %v1076 = vadd.f32 %v1050, %v1073
  %v1077 = vadd.f32 %v1051, %v1073
  %v1078 = vadd.f32 %v1052, %v1073
  %v1079 = vadd.f32 %v1053, %v1073
  %v1080 = vadd.f32 %v1054, %v1073
  %v1081 = vadd.f32 %v1055, %v1073
  %v1082 = vadd.f32 %v1056, %v1073
  %v1083 = vadd.f32 %v1057, %v1073
  %v1084 = vadd.f32 %v1058, %v1073
  %v1085 = vadd.f32 %v1059, %v1073
  %v1086 = vadd.f32 %v1060, %v1073
  %v1087 = vadd.f32 %v1061, %v1073
  %v1088 = vadd.f32 %v1062, %v1073
  %v1089 = vadd.f32 %v1063, %v1073
  %v1090 = vadd.f32 %v1064, %v1073
  %v1091 = vadd.f32 %v1065, %v1073
  %v1092 = vadd.f32 %v1066, %v1073
  %v1093 = vadd.f32 %v1067, %v1073
  %v1094 = vmax.f32 %v1075, 0.0
  %v1095 = vmax.f32 %v1076, 0.0
  %v1096 = vmax.f32 %v1077, 0.0
  %v1097 = vmax.f32 %v1078, 0.0
  %v1098 = vmax.f32 %v1079, 0.0
  %v1099 = vmax.f32 %v1080, 0.0
  %v1100 = vmax.f32 %v1081, 0.0
  %v1101 = vmax.f32 %v1082, 0.0
  %v1102 = vmax.f32 %v1083, 0.0
  %v1103 = vmax.f32 %v1084, 0.0
  %v1104 = vmax.f32 %v1085, 0.0
  %v1105 = vmax.f32 %v1086, 0.0
  %v1106 = vmax.f32 %v1087, 0.0
  %v1107 = vmax.f32 %v1088, 0.0
  %v1108 = vmax.f32 %v1089, 0.0
  %v1109 = vmax.f32 %v1090, 0.0
  %v1110 = vmax.f32 %v1091, 0.0
  %v1111 = vmax.f32 %v1092, 0.0
  %v1112 = vmax.f32 %v1093, 0.0
  %v1113 = vpack.c.bf16 %v1095, %v1094
  %v1114 = vpack.c.bf16 %v1097, %v1096
  %v1115 = vpack.c.bf16 %v1099, %v1098
  %v1116 = vpack.c.bf16 %v1101, %v1100
  %v1117 = vpack.c.bf16 %v1103, %v1102
  %v1118 = vpack.c.bf16 %v1105, %v1104
  %v1119 = vpack.c.bf16 %v1107, %v1106
  %v1120 = vpack.c.bf16 %v1109, %v1108
  %v1121 = vpack.c.bf16 %v1111, %v1110
  %v1122 = vpack.c.bf16 %v1112, %v1112
  %v1133 = vunpack.c.l.b16 %v1113
  %v1134 = vunpack.c.h.b16 %v1113
  %v1135 = vunpack.c.l.b16 %v1114
  %v1136 = vunpack.c.h.b16 %v1114
  %v1137 = vunpack.c.l.b16 %v1115
  %v1138 = vunpack.c.h.b16 %v1115
  %v1139 = vunpack.c.l.b16 %v1116
  %v1140 = vunpack.c.h.b16 %v1116
  %v1141 = vunpack.c.l.b16 %v1117
  %v1142 = vunpack.c.h.b16 %v1117
  %v1143 = vunpack.c.l.b16 %v1118
  %v1144 = vunpack.c.h.b16 %v1118
  %v1145 = vunpack.c.l.b16 %v1119
  %v1146 = vunpack.c.h.b16 %v1119
  %v1147 = vunpack.c.l.b16 %v1120
  %v1148 = vunpack.c.h.b16 %v1120
  %v1149 = vunpack.c.l.b16 %v1121
  %v1150 = vunpack.c.h.b16 %v1121
  %v1151 = vunpack.c.l.b16 %v1122
  %v1152 = vpack.c.b16 %v1133, %v1133
  %v1153 = vpack.c.b16 %v1134, %v1134
  %v1154 = vpack.c.b16 %v1135, %v1135
  %v1155 = vpack.c.b16 %v1136, %v1136
  %v1156 = vpack.c.b16 %v1137, %v1137
  %v1157 = vpack.c.b16 %v1138, %v1138
  %v1158 = vpack.c.b16 %v1139, %v1139
  %v1159 = vpack.c.b16 %v1140, %v1140
  %v1160 = vpack.c.b16 %v1141, %v1141
  %v1161 = vpack.c.b16 %v1142, %v1142
  %v1162 = vpack.c.b16 %v1143, %v1143
  %v1163 = vpack.c.b16 %v1144, %v1144
  %v1164 = vpack.c.b16 %v1145, %v1145
  %v1165 = vpack.c.b16 %v1146, %v1146
  %v1166 = vpack.c.b16 %v1147, %v1147
  %v1167 = vpack.c.b16 %v1148, %v1148
  %v1168 = vpack.c.b16 %v1149, %v1149
  %v1169 = vpack.c.b16 %v1150, %v1150
  %v1170 = vpack.c.b16 %v1151, %v1151
  %vm1190 = vcmask 257024
  %1191 = vst.msk [vmem:[%s3] sm:$0xf] %vm1190, %v1152
  %1192 = vst.msk [vmem:[%s3 + $0x4] sm:$0xf] %vm1190, %v1153
  %1193 = vst.msk [vmem:[%s3 + $0x8] sm:$0xf] %vm1190, %v1154
  %1194 = vst.msk [vmem:[%s3 + $0xc] sm:$0xf] %vm1190, %v1155
  %1195 = vst.msk [vmem:[%s3 + $0x10] sm:$0xf] %vm1190, %v1156
  %1196 = vst.msk [vmem:[%s3 + $0x14] sm:$0xf] %vm1190, %v1157
  %1197 = vst.msk [vmem:[%s3 + $0x18] sm:$0xf] %vm1190, %v1158
  %1198 = vst.msk [vmem:[%s3 + $0x1c] sm:$0xf] %vm1190, %v1159
  %1199 = vst.msk [vmem:[%s3 + $0x20] sm:$0xf] %vm1190, %v1160
  %1200 = vst.msk [vmem:[%s3 + $0x24] sm:$0xf] %vm1190, %v1161
  %1201 = vst.msk [vmem:[%s3 + $0x28] sm:$0xf] %vm1190, %v1162
  %1202 = vst.msk [vmem:[%s3 + $0x2c] sm:$0xf] %vm1190, %v1163
  %1203 = vst.msk [vmem:[%s3 + $0x30] sm:$0xf] %vm1190, %v1164
  %1204 = vst.msk [vmem:[%s3 + $0x34] sm:$0xf] %vm1190, %v1165
  %1205 = vst.msk [vmem:[%s3 + $0x38] sm:$0xf] %vm1190, %v1166
  %1206 = vst.msk [vmem:[%s3 + $0x3c] sm:$0xf] %vm1190, %v1167
  %1207 = vst.msk [vmem:[%s3 + $0x40] sm:$0xf] %vm1190, %v1168
  %1208 = vst.msk [vmem:[%s3 + $0x44] sm:$0xf] %vm1190, %v1169
  %1209 = vst.msk [vmem:[%s3 + $0x48] sm:$0xf] %vm1190, %v1170
  %1210 = vst.msk [vmem:[%s3 + $0x4c] sm:$0xf] %vm1190, 0
  %vm1211 = vcmask 253952
  %1212 = vst.msk [vmem:[%s3 + $0x50] sm:$0x1] %vm1211, 0
  // Predicated region
  $region14: #{atari_base_ppo_forward.4} parent=0 // pred_check
    _
  $region15: #{atari_base_ppo_forward.4} parent=0 // pred_check_branch
    %1214 = sbr.rel (0) target = $region17
  $region16: #{atari_base_ppo_forward.4} parent=0 // pred_region
    _
  $region17: #{atari_base_ppo_forward.4} parent=0 // pred_fallthru
    _
  // Predicated region
  $region18: #{atari_base_ppo_forward.4} parent=0 // pred_check
    _
  $region19: #{atari_base_ppo_forward.4} parent=0 // pred_check_branch
    %1216 = sbr.rel (0) target = $region21
  $region20: #{atari_base_ppo_forward.4} parent=0 // pred_region
    _
  $region21: #{atari_base_ppo_forward.4} parent=0 // pred_fallthru
    _

// kernel: atari_base_ppo_forward.5
$region0: #{atari_base_ppo_forward.5}
  #allocation0 [shape = 'u32[]', space=smem, size = 0x4, offset = 0x4, fixed_abs, tag = 'smem constant byte address 0x4 - core index']
  #allocation1 [shape = 'u32[144,128]{1,0:T(1,128)}', space=vmem, size = 0x12000, scoped, tag = 'internal scratch']
  %s0 = inlined_call_operand.vmem [shape: bf16[32,128], index: 0, kind: input, shape index: {}]
  %s1 = inlined_call_operand.vmem [shape: bf16[4,128,64], index: 1, kind: input, shape index: {}]
  %s2 = inlined_call_operand.vmem [shape: f32[1,64], index: 2, kind: input, shape index: {}]
  %s3 = inlined_call_operand.vmem [shape: bf16[32,64], index: 3, kind: output, shape index: {}]
  %s4 = sld [smem:[#allocation0]]
  $region45: #{atari_base_ppo_forward.5} parent=0
    _
  %s6 = ssub.s32 1, %s4
  %s7 = scalar_select 0, %s6, %s4
  loop: start=0, step=1, limit=4
  $region2: #{atari_base_ppo_forward.5} parent=0 // loop_pre_header
    _
  $region3: #{atari_base_ppo_forward.5} parent=0 // loop_header
    %s9 = sphi 0, %s13
    %p10 = scmp.ge.s32.totalorder %s9, 4
    %s19 = sphi 0, %s21
    %s22 = sphi 0, %s19
    %s23 = sphi 0, %s22
    %s39 = sphi 0, %s23
    %s43 = sphi 0, %s43
    %s45 = sphi 0, %s43
    %s46 = sphi 0, %s45
    %s60 = sphi 0, %s46
    %s64 = sphi 0, %s64
    %s66 = sphi 0, %s64
    %s67 = sphi 0, %s66
    %s81 = sphi 0, %s67
    %s87 = sphi 0, %s89
    %s90 = sphi 0, %s87
    %s91 = sphi 0, %s90
    %s107 = sphi 0, %s91
  $region4: #{atari_base_ppo_forward.5} parent=0 // loop_header_branch
    %12 = sbr.rel (%p10) target = $region8
  $region5: #{atari_base_ppo_forward.5} parent=0 // loop_body
    %s14 = ssub.s32 %s9, 1
    %s15 = ssub.s32 %s9, 2
    %s16 = sadd.s32 %s9, 1
    %s17 = ssub.s32 %s9, %s16
    %p18 = scmp.eq.s32.totalorder %s17, 0
    %s20 = sadd.s32 %s19, 1
    %s21 = scalar_select %p18, %s19, %s20
    %p24 = pneg %p18
    %p25 = scmp.eq.s32.totalorder %s9, 1
    %p26 = por %p24, %p25
    %p27 = scmp.ne.s32.totalorder %s19, %s22
    %p28 = scmp.eq.s32.totalorder %s9, 0
    %p29 = por %p27, %p28
    %p30 = scmp.ne.s32.totalorder %s19, %s22
    %p31 = scmp.eq.s32.totalorder %s14, 1
    %p32 = por %p30, %p31
    %p33 = scmp.ne.s32.totalorder %s22, %s23
    %p34 = scmp.eq.s32.totalorder %s14, 0
    %p35 = por %p33, %p34
    %p36 = scmp.ne.s32.totalorder %s22, %s23
    %p37 = scmp.eq.s32.totalorder %s15, 1
    %p38 = por %p36, %p37
    %p40 = scmp.ne.s32.totalorder %s23, %s39
    %p41 = scmp.eq.s32.totalorder %s15, 0
    %p42 = por %p40, %p41
    %s44 = sadd.s32 %s43, 1
    %p47 = scmp.eq.s32.totalorder %s9, 1
    %p48 = scmp.ne.s32.totalorder %s43, %s45
    %p49 = scmp.eq.s32.totalorder %s9, 0
    %p50 = por %p48, %p49
    %p51 = scmp.ne.s32.totalorder %s43, %s45
    %p52 = scmp.eq.s32.totalorder %s14, 1
    %p53 = por %p51, %p52
    %p54 = scmp.ne.s32.totalorder %s45, %s46
    %p55 = scmp.eq.s32.totalorder %s14, 0
    %p56 = por %p54, %p55
    %p57 = scmp.ne.s32.totalorder %s45, %s46
    %p58 = scmp.eq.s32.totalorder %s15, 1
    %p59 = por %p57, %p58
    %p61 = scmp.ne.s32.totalorder %s46, %s60
    %p62 = scmp.eq.s32.totalorder %s15, 0
    %p63 = por %p61, %p62
    %s65 = sadd.s32 %s64, 1
    %p68 = scmp.eq.s32.totalorder %s9, 1
    %p69 = scmp.ne.s32.totalorder %s64, %s66
    %p70 = scmp.eq.s32.totalorder %s9, 0
    %p71 = por %p69, %p70
    %p72 = scmp.ne.s32.totalorder %s64, %s66
    %p73 = scmp.eq.s32.totalorder %s14, 1
    %p74 = por %p72, %p73
    %p75 = scmp.ne.s32.totalorder %s66, %s67
    %p76 = scmp.eq.s32.totalorder %s14, 0
    %p77 = por %p75, %p76
    %p78 = scmp.ne.s32.totalorder %s66, %s67
    %p79 = scmp.eq.s32.totalorder %s15, 1
    %p80 = por %p78, %p79
    %p82 = scmp.ne.s32.totalorder %s67, %s81
    %p83 = scmp.eq.s32.totalorder %s15, 0
    %p84 = por %p82, %p83
    %s85 = ssub.s32 %s9, %s16
    %p86 = scmp.eq.s32.totalorder %s85, 0
    %s88 = sadd.s32 %s87, 1
    %s89 = scalar_select %p86, %s87, %s88
    %p92 = pneg %p86
    %p93 = scmp.eq.s32.totalorder %s9, 1
    %p94 = por %p92, %p93
    %p95 = scmp.ne.s32.totalorder %s87, %s90
    %p96 = scmp.eq.s32.totalorder %s9, 0
    %p97 = por %p95, %p96
    %p98 = scmp.ne.s32.totalorder %s87, %s90
    %p99 = scmp.eq.s32.totalorder %s14, 1
    %p100 = por %p98, %p99
    %p101 = scmp.ne.s32.totalorder %s90, %s91
    %p102 = scmp.eq.s32.totalorder %s14, 0
    %p103 = por %p101, %p102
    %p104 = scmp.ne.s32.totalorder %s90, %s91
    %p105 = scmp.eq.s32.totalorder %s15, 1
    %p106 = por %p104, %p105
    %p108 = scmp.ne.s32.totalorder %s91, %s107
    %p109 = scmp.eq.s32.totalorder %s15, 0
    %p110 = por %p108, %p109
    %p111 = scmp.le.s32.totalorder 1, %s9
    %p112 = scmp.lt.s32.totalorder %s9, 3
    %p113 = pnand %p111, %p112
    %p114 = pneg %p113
    // Predicated region
    $region9: #{atari_base_ppo_forward.5} parent=5 // pred_check
      _
    $region10: #{atari_base_ppo_forward.5} parent=5 // pred_check_branch
      %116 = sbr.rel (%p113) target = $region12
    $region11: #{atari_base_ppo_forward.5} parent=5 // pred_region
      %s117 = ssub.s32 %s9, 1
      // Predicated region
      $region13: #{atari_base_ppo_forward.5} parent=11 // pred_check
        %p118 = pneg %p56
      $region14: #{atari_base_ppo_forward.5} parent=11 // pred_check_branch
        %120 = sbr.rel (%p118) target = $region16
      $region15: #{atari_base_ppo_forward.5} parent=11 // pred_region
        _
      $region16: #{atari_base_ppo_forward.5} parent=11 // pred_fallthru
        _
      // Predicated region
      $region17: #{atari_base_ppo_forward.5} parent=11 // pred_check
        %p121 = pneg %p77
      $region18: #{atari_base_ppo_forward.5} parent=11 // pred_check_branch
        %123 = sbr.rel (%p121) target = $region20
      $region19: #{atari_base_ppo_forward.5} parent=11 // pred_region
        _
      $region20: #{atari_base_ppo_forward.5} parent=11 // pred_fallthru
        _
    $region12: #{atari_base_ppo_forward.5} parent=5 // pred_fallthru
      _
    %p124 = scmp.lt.s32.totalorder %s9, 2
    // Predicated region
    $region21: #{atari_base_ppo_forward.5} parent=5 // pred_check
      %p125 = pneg %p124
    $region22: #{atari_base_ppo_forward.5} parent=5 // pred_check_branch
      %127 = sbr.rel (%p125) target = $region24
    $region23: #{atari_base_ppo_forward.5} parent=5 // pred_region
      // Predicated region
      $region25: #{atari_base_ppo_forward.5} parent=23 // pred_check
        %p128 = pneg %p29
      $region26: #{atari_base_ppo_forward.5} parent=23 // pred_check_branch
        %130 = sbr.rel (%p128) target = $region28
      $region27: #{atari_base_ppo_forward.5} parent=23 // pred_region
        %s131 = smul.u32 2, %s9
        %p132 = scmp.lt.s32.totalorder %s131, 3
        %s133 = scalar_select %p132, %s131, 3
        %s134 = smul.addr %s133, 4
        %s135 = scalar_lea.vmem %s0, %s134
        %s136 = smul.u32 2, %s9
      $region28: #{atari_base_ppo_forward.5} parent=23 // pred_fallthru
        _
    $region24: #{atari_base_ppo_forward.5} parent=5 // pred_fallthru
      _
    %p137 = scmp.le.s32.totalorder 1, %s9
    %p138 = scmp.lt.s32.totalorder %s9, 3
    %p139 = pnand %p137, %p138
    %p140 = pneg %p139
    // Predicated region
    $region29: #{atari_base_ppo_forward.5} parent=5 // pred_check
      _
    $region30: #{atari_base_ppo_forward.5} parent=5 // pred_check_branch
      %142 = sbr.rel (%p139) target = $region32
    $region31: #{atari_base_ppo_forward.5} parent=5 // pred_region
      %s143 = ssub.s32 %s9, 1
      %s144 = smul.u32 2, %s14
      %p145 = scmp.lt.s32.totalorder %s144, 3
      %s146 = scalar_select %p145, %s144, 3
      %s147 = smul.addr %s146, 4
      %s148 = scalar_lea.vmem %s0, %s147
      %p149 = pneg %p35
      %p150 = pneg %p32
      %p151 = pneg %p56
      %p152 = pneg %p53
      %p153 = pneg %p77
      %p154 = pneg %p74
      %p155 = pneg %p103
      %p156 = pneg %p100
      %s157 = smul.u32 2, %s14
      %p158 = scmp.lt.s32.totalorder %s157, 3
      %s159 = scalar_select %p158, %s157, 3
      %s160 = smul.addr %s159, 4
      %s161 = scalar_lea.vmem %s3, %s160
      %s162 = smul.u32 2, %s14
      %p163 = scmp.lt.s32.totalorder %s162, 3
      %s164 = scalar_select %p163, %s162, 3
      %s165 = smul.addr %s164, 4
      %s166 = scalar_lea.vmem %s0, %s165
      %s167 = smul.u32 2, %s14
      %s168 = smul.u32 2, %s14
      %p169 = scmp.lt.s32.totalorder %s168, 3
      %s170 = scalar_select %p169, %s168, 3
      %s171 = smul.addr %s170, 4
      %s172 = scalar_lea.vmem %s3, %s171
      %s173 = smul.u32 2, %s14
      %v175 = vld [vmem:[%s166] sm:$0xf]
      %v176 = vld [vmem:[%s166 + $0x4] sm:$0x3]
      %v177 = vld [vmem:[%s1] sm:$0xf]
      %v178 = vld [vmem:[%s1 + $0x4] sm:$0xf]
      %v179 = vld [vmem:[%s1 + $0x8] sm:$0xf]
      %v180 = vld [vmem:[%s1 + $0xc] sm:$0xf]
      %v181 = vld [vmem:[%s1 + $0x10] sm:$0xf]
      %v182 = vld [vmem:[%s1 + $0x14] sm:$0xf]
      %v183 = vld [vmem:[%s1 + $0x18] sm:$0xf]
      %v184 = vld [vmem:[%s1 + $0x1c] sm:$0xf]
      %v185 = vld [vmem:[%s1 + $0x20] sm:$0xf]
      %v186 = vld [vmem:[%s1 + $0x24] sm:$0xf]
      %v187 = vld [vmem:[%s1 + $0x28] sm:$0xf]
      %v188 = vld [vmem:[%s1 + $0x2c] sm:$0xf]
      %v189 = vld [vmem:[%s1 + $0x30] sm:$0xf]
      %v190 = vld [vmem:[%s1 + $0x34] sm:$0xf]
      %v191 = vld [vmem:[%s1 + $0x38] sm:$0xf]
      %v192 = vld [vmem:[%s1 + $0x3c] sm:$0xf]
      %s193 = scalar_lea.vmem %s1, 64
      %v194 = vld [vmem:[%s193] sm:$0xf]
      %v195 = vld [vmem:[%s193 + $0x4] sm:$0xf]
      %v196 = vld [vmem:[%s193 + $0x8] sm:$0xf]
      %v197 = vld [vmem:[%s193 + $0xc] sm:$0xf]
      %v198 = vld [vmem:[%s193 + $0x10] sm:$0xf]
      %v199 = vld [vmem:[%s193 + $0x14] sm:$0xf]
      %v200 = vld [vmem:[%s193 + $0x18] sm:$0xf]
      %v201 = vld [vmem:[%s193 + $0x1c] sm:$0xf]
      %v202 = vld [vmem:[%s193 + $0x20] sm:$0xf]
      %v203 = vld [vmem:[%s193 + $0x24] sm:$0xf]
      %v204 = vld [vmem:[%s193 + $0x28] sm:$0xf]
      %v205 = vld [vmem:[%s193 + $0x2c] sm:$0xf]
      %v206 = vld [vmem:[%s193 + $0x30] sm:$0xf]
      %v207 = vld [vmem:[%s193 + $0x34] sm:$0xf]
      %v208 = vld [vmem:[%s193 + $0x38] sm:$0xf]
      %v209 = vld [vmem:[%s193 + $0x3c] sm:$0xf]
      %v212 = vunpack.c.l.b16 %v175
      %v213 = vunpack.c.l.b16 %v176
      %v214 = vpack.c.b16 %v213, %v212
      %v216 = vshrl.u32 %v214, 16
      %v218 = vshll.u32 %v214, 16
      %v220 = vrot.slane %v218, 1
      %v221 = vor.u32 %v216, %v220
      %v239 = vunpack.c.l.b16 %v194
      %v240 = vunpack.c.l.b16 %v195
      %v241 = vunpack.c.l.b16 %v196
      %v242 = vunpack.c.l.b16 %v197
      %v243 = vunpack.c.l.b16 %v198
      %v244 = vunpack.c.l.b16 %v199
      %v245 = vunpack.c.l.b16 %v200
      %v246 = vunpack.c.l.b16 %v201
      %v247 = vunpack.c.l.b16 %v202
      %v248 = vunpack.c.l.b16 %v203
      %v249 = vunpack.c.l.b16 %v204
      %v250 = vunpack.c.l.b16 %v205
      %v251 = vunpack.c.l.b16 %v206
      %v252 = vunpack.c.l.b16 %v207
      %v253 = vunpack.c.l.b16 %v208
      %v254 = vunpack.c.l.b16 %v209
      %v255 = vpack.c.b16 %v240, %v239
      %v256 = vpack.c.b16 %v242, %v241
      %v257 = vpack.c.b16 %v244, %v243
      %v258 = vpack.c.b16 %v246, %v245
      %v259 = vpack.c.b16 %v248, %v247
      %v260 = vpack.c.b16 %v250, %v249
      %v261 = vpack.c.b16 %v252, %v251
      %v262 = vpack.c.b16 %v254, %v253
      %271 = vmatprep.subr.bf16.mxu0 0
      %272 = vmatpush1.bf16.msra.mxu0 %v255
      %273 = vmatprep.subr.bf16.mxu0 0
      %274 = vmatpush1.bf16.msra.mxu0 %v256
      %275 = vmatprep.subr.bf16.mxu0 0
      %276 = vmatpush1.bf16.msra.mxu0 %v257
      %277 = vmatprep.subr.bf16.mxu0 0
      %278 = vmatpush1.bf16.msra.mxu0 %v258
      %279 = vmatprep.subr.bf16.mxu0 0
      %280 = vmatpush1.bf16.msra.mxu0 %v259
      %281 = vmatprep.subr.bf16.mxu0 0
      %282 = vmatpush1.bf16.msra.mxu0 %v260
      %283 = vmatprep.subr.bf16.mxu0 0
      %284 = vmatpush1.bf16.msra.mxu0 %v261
      %285 = vmatprep.subr.bf16.mxu0 0
      %286 = vmatpush1.bf16.msra.mxu0 %v262
      %287 = vmatprep.subr.bf16.mxu0 0
      %288 = vmatpush1.bf16.msra.mxu0 0
      %289 = vmatprep.subr.bf16.mxu0 0
      %290 = vmatpush1.bf16.msra.mxu0 0
      %291 = vmatprep.subr.bf16.mxu0 0
      %292 = vmatpush1.bf16.msra.mxu0 0
      %293 = vmatprep.subr.bf16.mxu0 0
      %294 = vmatpush1.bf16.msra.mxu0 0
      %295 = vmatprep.subr.bf16.mxu0 0
      %296 = vmatpush1.bf16.msra.mxu0 0
      %297 = vmatprep.subr.bf16.mxu0 0
      %298 = vmatpush1.bf16.msra.mxu0 0
      %299 = vmatprep.subr.bf16.mxu0 0
      %300 = vmatpush1.bf16.msra.mxu0 0
      %301 = vmatprep.subr.bf16.mxu0 0
      %302 = vmatpush1.bf16.msra.mxu0 0
      %303 = vmatprep.mubr.bf16.mxu0 0
      %304 = vmatmul.mubr.bf16.gmra.mrb[0].mxu0 %v221
      %v305 = vpop.f32.mrb[0].mxu0
      %v306 = vadd.f32 0.0, %v305
      %v307 = vpop.f32.mrb[0].mxu0
      %v308 = vpop.f32.mrb[0].mxu0
      %v309 = vadd.f32 0.0, %v308
      %v310 = vpop.f32.mrb[0].mxu0
      %311 = vdwg.mxu0
      %v329 = vunpack.c.l.b16 %v177
      %v330 = vunpack.c.l.b16 %v178
      %v331 = vunpack.c.l.b16 %v179
      %v332 = vunpack.c.l.b16 %v180
      %v333 = vunpack.c.l.b16 %v181
      %v334 = vunpack.c.l.b16 %v182
      %v335 = vunpack.c.l.b16 %v183
      %v336 = vunpack.c.l.b16 %v184
      %v337 = vunpack.c.l.b16 %v185
      %v338 = vunpack.c.l.b16 %v186
      %v339 = vunpack.c.l.b16 %v187
      %v340 = vunpack.c.l.b16 %v188
      %v341 = vunpack.c.l.b16 %v189
      %v342 = vunpack.c.l.b16 %v190
      %v343 = vunpack.c.l.b16 %v191
      %v344 = vunpack.c.l.b16 %v192
      %v345 = vpack.c.b16 %v330, %v329
      %v346 = vpack.c.b16 %v332, %v331
      %v347 = vpack.c.b16 %v334, %v333
      %v348 = vpack.c.b16 %v336, %v335
      %v349 = vpack.c.b16 %v338, %v337
      %v350 = vpack.c.b16 %v340, %v339
      %v351 = vpack.c.b16 %v342, %v341
      %v352 = vpack.c.b16 %v344, %v343
      %361 = vmatprep.subr.bf16.mxu0 0
      %362 = vmatpush1.bf16.msra.mxu0 %v345
      %363 = vmatprep.subr.bf16.mxu0 0
      %364 = vmatpush1.bf16.msra.mxu0 %v346
      %365 = vmatprep.subr.bf16.mxu0 0
      %366 = vmatpush1.bf16.msra.mxu0 %v347
      %367 = vmatprep.subr.bf16.mxu0 0
      %368 = vmatpush1.bf16.msra.mxu0 %v348
      %369 = vmatprep.subr.bf16.mxu0 0
      %370 = vmatpush1.bf16.msra.mxu0 %v349
      %371 = vmatprep.subr.bf16.mxu0 0
      %372 = vmatpush1.bf16.msra.mxu0 %v350
      %373 = vmatprep.subr.bf16.mxu0 0
      %374 = vmatpush1.bf16.msra.mxu0 %v351
      %375 = vmatprep.subr.bf16.mxu0 0
      %376 = vmatpush1.bf16.msra.mxu0 %v352
      %377 = vmatprep.subr.bf16.mxu0 0
      %378 = vmatpush1.bf16.msra.mxu0 0
      %379 = vmatprep.subr.bf16.mxu0 0
      %380 = vmatpush1.bf16.msra.mxu0 0
      %381 = vmatprep.subr.bf16.mxu0 0
      %382 = vmatpush1.bf16.msra.mxu0 0
      %383 = vmatprep.subr.bf16.mxu0 0
      %384 = vmatpush1.bf16.msra.mxu0 0
      %385 = vmatprep.subr.bf16.mxu0 0
      %386 = vmatpush1.bf16.msra.mxu0 0
      %387 = vmatprep.subr.bf16.mxu0 0
      %388 = vmatpush1.bf16.msra.mxu0 0
      %389 = vmatprep.subr.bf16.mxu0 0
      %390 = vmatpush1.bf16.msra.mxu0 0
      %391 = vmatprep.subr.bf16.mxu0 0
      %392 = vmatpush1.bf16.msra.mxu0 0
      %393 = vmatprep.mubr.bf16.mxu0 0
      %394 = vmatmul.mubr.bf16.gmra.mrb[0].mxu0 %v214
      %v395 = vpop.f32.mrb[0].mxu0
      %v396 = vadd.f32 %v306, %v395
      %v397 = vpop.f32.mrb[0].mxu0
      %v398 = vpop.f32.mrb[0].mxu0
      %v399 = vadd.f32 %v309, %v398
      %v400 = vpop.f32.mrb[0].mxu0
      %401 = vdwg.mxu0
      %v402 = vld [vmem:[%s166] sm:$0xc]
      %v403 = vld [vmem:[%s166 + $0x4] sm:$0xf]
      %s404 = scalar_lea.vmem %s1, 128
      %v405 = vld [vmem:[%s404] sm:$0xf]
      %v406 = vld [vmem:[%s404 + $0x4] sm:$0xf]
      %v407 = vld [vmem:[%s404 + $0x8] sm:$0xf]
      %v408 = vld [vmem:[%s404 + $0xc] sm:$0xf]
      %v409 = vld [vmem:[%s404 + $0x10] sm:$0xf]
      %v410 = vld [vmem:[%s404 + $0x14] sm:$0xf]
      %v411 = vld [vmem:[%s404 + $0x18] sm:$0xf]
      %v412 = vld [vmem:[%s404 + $0x1c] sm:$0xf]
      %v413 = vld [vmem:[%s404 + $0x20] sm:$0xf]
      %v414 = vld [vmem:[%s404 + $0x24] sm:$0xf]
      %v415 = vld [vmem:[%s404 + $0x28] sm:$0xf]
      %v416 = vld [vmem:[%s404 + $0x2c] sm:$0xf]
      %v417 = vld [vmem:[%s404 + $0x30] sm:$0xf]
      %v418 = vld [vmem:[%s404 + $0x34] sm:$0xf]
      %v419 = vld [vmem:[%s404 + $0x38] sm:$0xf]
      %v420 = vld [vmem:[%s404 + $0x3c] sm:$0xf]
      %v423 = vunpack.c.l.b16 %v402
      %v424 = vunpack.c.l.b16 %v403
      %v425 = vpack.c.b16 %v424, %v423
      %v426 = vrot.slane %v425, 2
      %v444 = vunpack.c.l.b16 %v405
      %v445 = vunpack.c.l.b16 %v406
      %v446 = vunpack.c.l.b16 %v407
      %v447 = vunpack.c.l.b16 %v408
      %v448 = vunpack.c.l.b16 %v409
      %v449 = vunpack.c.l.b16 %v410
      %v450 = vunpack.c.l.b16 %v411
      %v451 = vunpack.c.l.b16 %v412
      %v452 = vunpack.c.l.b16 %v413
      %v453 = vunpack.c.l.b16 %v414
      %v454 = vunpack.c.l.b16 %v415
      %v455 = vunpack.c.l.b16 %v416
      %v456 = vunpack.c.l.b16 %v417
      %v457 = vunpack.c.l.b16 %v418
      %v458 = vunpack.c.l.b16 %v419
      %v459 = vunpack.c.l.b16 %v420
      %v460 = vpack.c.b16 %v445, %v444
      %v461 = vpack.c.b16 %v447, %v446
      %v462 = vpack.c.b16 %v449, %v448
      %v463 = vpack.c.b16 %v451, %v450
      %v464 = vpack.c.b16 %v453, %v452
      %v465 = vpack.c.b16 %v455, %v454
      %v466 = vpack.c.b16 %v457, %v456
      %v467 = vpack.c.b16 %v459, %v458
      %476 = vmatprep.subr.bf16.mxu0 0
      %477 = vmatpush1.bf16.msra.mxu0 %v460
      %478 = vmatprep.subr.bf16.mxu0 0
      %479 = vmatpush1.bf16.msra.mxu0 %v461
      %480 = vmatprep.subr.bf16.mxu0 0
      %481 = vmatpush1.bf16.msra.mxu0 %v462
      %482 = vmatprep.subr.bf16.mxu0 0
      %483 = vmatpush1.bf16.msra.mxu0 %v463
      %484 = vmatprep.subr.bf16.mxu0 0
      %485 = vmatpush1.bf16.msra.mxu0 %v464
      %486 = vmatprep.subr.bf16.mxu0 0
      %487 = vmatpush1.bf16.msra.mxu0 %v465
      %488 = vmatprep.subr.bf16.mxu0 0
      %489 = vmatpush1.bf16.msra.mxu0 %v466
      %490 = vmatprep.subr.bf16.mxu0 0
      %491 = vmatpush1.bf16.msra.mxu0 %v467
      %492 = vmatprep.subr.bf16.mxu0 0
      %493 = vmatpush1.bf16.msra.mxu0 0
      %494 = vmatprep.subr.bf16.mxu0 0
      %495 = vmatpush1.bf16.msra.mxu0 0
      %496 = vmatprep.subr.bf16.mxu0 0
      %497 = vmatpush1.bf16.msra.mxu0 0
      %498 = vmatprep.subr.bf16.mxu0 0
      %499 = vmatpush1.bf16.msra.mxu0 0
      %500 = vmatprep.subr.bf16.mxu0 0
      %501 = vmatpush1.bf16.msra.mxu0 0
      %502 = vmatprep.subr.bf16.mxu0 0
      %503 = vmatpush1.bf16.msra.mxu0 0
      %504 = vmatprep.subr.bf16.mxu0 0
      %505 = vmatpush1.bf16.msra.mxu0 0
      %506 = vmatprep.subr.bf16.mxu0 0
      %507 = vmatpush1.bf16.msra.mxu0 0
      %508 = vmatprep.mubr.bf16.mxu0 0
      %509 = vmatmul.mubr.bf16.gmra.mrb[0].mxu0 %v426
      %v510 = vpop.f32.mrb[0].mxu0
      %v511 = vadd.f32 0.0, %v510
      %v512 = vpop.f32.mrb[0].mxu0
      %v513 = vpop.f32.mrb[0].mxu0
      %v514 = vadd.f32 0.0, %v513
      %v515 = vpop.f32.mrb[0].mxu0
      %516 = vdwg.mxu0
      %v517 = vadd.f32 %v396, %v511
      %v518 = vadd.f32 %v399, %v514
      %s519 = scalar_lea.vmem %s1, 192
      %v520 = vld [vmem:[%s519] sm:$0xf]
      %v521 = vld [vmem:[%s519 + $0x4] sm:$0xf]
      %v522 = vld [vmem:[%s519 + $0x8] sm:$0xf]
      %v523 = vld [vmem:[%s519 + $0xc] sm:$0xf]
      %v524 = vld [vmem:[%s519 + $0x10] sm:$0xf]
      %v525 = vld [vmem:[%s519 + $0x14] sm:$0xf]
      %v526 = vld [vmem:[%s519 + $0x18] sm:$0xf]
      %v527 = vld [vmem:[%s519 + $0x1c] sm:$0xf]
      %v528 = vld [vmem:[%s519 + $0x20] sm:$0xf]
      %v529 = vld [vmem:[%s519 + $0x24] sm:$0xf]
      %v530 = vld [vmem:[%s519 + $0x28] sm:$0xf]
      %v531 = vld [vmem:[%s519 + $0x2c] sm:$0xf]
      %v532 = vld [vmem:[%s519 + $0x30] sm:$0xf]
      %v533 = vld [vmem:[%s519 + $0x34] sm:$0xf]
      %v534 = vld [vmem:[%s519 + $0x38] sm:$0xf]
      %v535 = vld [vmem:[%s519 + $0x3c] sm:$0xf]
      %v537 = vshrl.u32 %v425, 16
      %v539 = vrot.slane %v537, 2
      %v540 = vshll.u32 %v425, 16
      %v542 = vrot.slane %v540, 3
      %v543 = vor.u32 %v539, %v542
      %v561 = vunpack.c.l.b16 %v520
      %v562 = vunpack.c.l.b16 %v521
      %v563 = vunpack.c.l.b16 %v522
      %v564 = vunpack.c.l.b16 %v523
      %v565 = vunpack.c.l.b16 %v524
      %v566 = vunpack.c.l.b16 %v525
      %v567 = vunpack.c.l.b16 %v526
      %v568 = vunpack.c.l.b16 %v527
      %v569 = vunpack.c.l.b16 %v528
      %v570 = vunpack.c.l.b16 %v529
      %v571 = vunpack.c.l.b16 %v530
      %v572 = vunpack.c.l.b16 %v531
      %v573 = vunpack.c.l.b16 %v532
      %v574 = vunpack.c.l.b16 %v533
      %v575 = vunpack.c.l.b16 %v534
      %v576 = vunpack.c.l.b16 %v535
      %v577 = vpack.c.b16 %v562, %v561
      %v578 = vpack.c.b16 %v564, %v563
      %v579 = vpack.c.b16 %v566, %v565
      %v580 = vpack.c.b16 %v568, %v567
      %v581 = vpack.c.b16 %v570, %v569
      %v582 = vpack.c.b16 %v572, %v571
      %v583 = vpack.c.b16 %v574, %v573
      %v584 = vpack.c.b16 %v576, %v575
      %593 = vmatprep.subr.bf16.mxu0 0
      %594 = vmatpush1.bf16.msra.mxu0 %v577
      %595 = vmatprep.subr.bf16.mxu0 0
      %596 = vmatpush1.bf16.msra.mxu0 %v578
      %597 = vmatprep.subr.bf16.mxu0 0
      %598 = vmatpush1.bf16.msra.mxu0 %v579
      %599 = vmatprep.subr.bf16.mxu0 0
      %600 = vmatpush1.bf16.msra.mxu0 %v580
      %601 = vmatprep.subr.bf16.mxu0 0
      %602 = vmatpush1.bf16.msra.mxu0 %v581
      %603 = vmatprep.subr.bf16.mxu0 0
      %604 = vmatpush1.bf16.msra.mxu0 %v582
      %605 = vmatprep.subr.bf16.mxu0 0
      %606 = vmatpush1.bf16.msra.mxu0 %v583
      %607 = vmatprep.subr.bf16.mxu0 0
      %608 = vmatpush1.bf16.msra.mxu0 %v584
      %609 = vmatprep.subr.bf16.mxu0 0
      %610 = vmatpush1.bf16.msra.mxu0 0
      %611 = vmatprep.subr.bf16.mxu0 0
      %612 = vmatpush1.bf16.msra.mxu0 0
      %613 = vmatprep.subr.bf16.mxu0 0
      %614 = vmatpush1.bf16.msra.mxu0 0
      %615 = vmatprep.subr.bf16.mxu0 0
      %616 = vmatpush1.bf16.msra.mxu0 0
      %617 = vmatprep.subr.bf16.mxu0 0
      %618 = vmatpush1.bf16.msra.mxu0 0
      %619 = vmatprep.subr.bf16.mxu0 0
      %620 = vmatpush1.bf16.msra.mxu0 0
      %621 = vmatprep.subr.bf16.mxu0 0
      %622 = vmatpush1.bf16.msra.mxu0 0
      %623 = vmatprep.subr.bf16.mxu0 0
      %624 = vmatpush1.bf16.msra.mxu0 0
      %625 = vmatprep.mubr.bf16.mxu0 0
      %626 = vmatmul.mubr.bf16.gmra.mrb[0].mxu0 %v543
      %v627 = vpop.f32.mrb[0].mxu0
      %v628 = vadd.f32 0.0, %v627
      %v629 = vpop.f32.mrb[0].mxu0
      %v630 = vpop.f32.mrb[0].mxu0
      %v631 = vadd.f32 0.0, %v630
      %v632 = vpop.f32.mrb[0].mxu0
      %633 = vdwg.mxu0
      %v634 = vadd.f32 %v517, %v628
      %v635 = vadd.f32 %v518, %v631
      %v636 = vld [vmem:[%s2] sm:$0x1]
      %v638 = vlaneseq
      %v639 = vshrl.u32 %v638, 7
      %v640 = vsub.s32 0, %v639
      %v641 = vrot.slane %v636, %v640
      %v643 = vadd.f32 %v634, %v641
      %v644 = vadd.f32 %v635, %v641
      %v645 = vmax.f32 %v643, 0.0
      %v646 = vmax.f32 %v644, 0.0
      %v647 = vpack.c.bf16 %v646, %v645
      %v649 = vunpack.c.l.b16 %v647
      %v650 = vunpack.c.h.b16 %v647
      %v651 = vpack.c.b16 %v649, %v649
      %v652 = vpack.c.b16 %v650, %v650
      %vm655 = vcmask 519168
      %656 = vst.msk [vmem:[%s172] sm:$0xf] %vm655, %v651
      %vm657 = vcmask 517120
      %vm658 = vsmask.f32 1280
      %vm659 = vmand %vm657, %vm658
      %v660 = vld [vmem:[%s172 + $0x4] sm:$0x3]
      %v661 = vsel %vm659, %v652, %v660
      %662 = vst [vmem:[%s172 + $0x4] sm:$0x3] %v661
      %vm663 = vcmask 519169
      %vm664 = vsmask.f32 7942
      %vm665 = vmand %vm663, %vm664
      %v666 = vld [vmem:[%s172 + $0x4] sm:$0xe]
      %v667 = vsel %vm665, 0, %v666
      %668 = vst [vmem:[%s172 + $0x4] sm:$0xe] %v667
      %s669 = smul.u32 2, %s14
      %p670 = scmp.lt.s32.totalorder %s669, 3
      %s671 = scalar_select %p670, %s669, 3
      %s672 = smul.addr %s671, 4
      %s673 = scalar_lea.vmem %s3, %s672
      // Predicated region
      $region33: #{atari_base_ppo_forward.5} parent=31 // pred_check
        %p674 = pneg %p100
      $region34: #{atari_base_ppo_forward.5} parent=31 // pred_check_branch
        %676 = sbr.rel (%p674) target = $region36
      $region35: #{atari_base_ppo_forward.5} parent=31 // pred_region
        %s677 = smul.u32 2, %s14
      $region36: #{atari_base_ppo_forward.5} parent=31 // pred_fallthru
        _
    $region32: #{atari_base_ppo_forward.5} parent=5 // pred_fallthru
      _
    %p678 = scmp.le.s32.totalorder 2, %s9
    // Predicated region
    $region37: #{atari_base_ppo_forward.5} parent=5 // pred_check
      %p679 = pneg %p678
    $region38: #{atari_base_ppo_forward.5} parent=5 // pred_check_branch
      %681 = sbr.rel (%p679) target = $region40
    $region39: #{atari_base_ppo_forward.5} parent=5 // pred_region
      %s682 = ssub.s32 %s9, 2
      // Predicated region
      $region41: #{atari_base_ppo_forward.5} parent=39 // pred_check
        %p683 = pneg %p106
      $region42: #{atari_base_ppo_forward.5} parent=39 // pred_check_branch
        %685 = sbr.rel (%p683) target = $region44
      $region43: #{atari_base_ppo_forward.5} parent=39 // pred_region
        %s686 = smul.u32 2, %s15
        %p687 = scmp.lt.s32.totalorder %s686, 3
        %s688 = scalar_select %p687, %s686, 3
        %s689 = smul.addr %s688, 4
        %s690 = scalar_lea.vmem %s3, %s689
      $region44: #{atari_base_ppo_forward.5} parent=39 // pred_fallthru
        _
    $region40: #{atari_base_ppo_forward.5} parent=5 // pred_fallthru
      _
  $region6: #{atari_base_ppo_forward.5} parent=0 // loop_footer
    %s13 = sadd.s32 1, %s9
  $region7: #{atari_base_ppo_forward.5} parent=0 // loop_footer_branch
    %8 = sbr.rel target = $region3
  $region8: #{atari_base_ppo_forward.5} parent=0 // loop_exit
    _

// kernel: atari_base_ppo_forward.6
$region0: #{atari_base_ppo_forward.6}
  #allocation0 [shape = 'u32[]', space=smem, size = 0x4, offset = 0x4, fixed_abs, tag = 'smem constant byte address 0x4 - core index']
  #allocation1 [shape = 'u32[144,128]{1,0:T(1,128)}', space=vmem, size = 0x12000, scoped, tag = 'internal scratch']
  %s0 = inlined_call_operand.vmem [shape: bf16[32,64], index: 0, kind: input, shape index: {}]
  %s1 = inlined_call_operand.vmem [shape: bf16[9,64,64], index: 1, kind: input, shape index: {}]
  %s2 = inlined_call_operand.vmem [shape: f32[1,64], index: 2, kind: input, shape index: {}]
  %s3 = inlined_call_operand.vmem [shape: bf16[32,64], index: 3, kind: output, shape index: {}]
  %s4 = sld [smem:[#allocation0]]
  $region45: #{atari_base_ppo_forward.6} parent=0
    _
  %s6 = ssub.s32 1, %s4
  %s7 = scalar_select 0, %s6, %s4
  loop: start=0, step=1, limit=4
  $region2: #{atari_base_ppo_forward.6} parent=0 // loop_pre_header
    _
  $region3: #{atari_base_ppo_forward.6} parent=0 // loop_header
    %s9 = sphi 0, %s13
    %p10 = scmp.ge.s32.totalorder %s9, 4
    %s19 = sphi 0, %s21
    %s22 = sphi 0, %s19
    %s23 = sphi 0, %s22
    %s39 = sphi 0, %s23
    %s43 = sphi 0, %s43
    %s45 = sphi 0, %s43
    %s46 = sphi 0, %s45
    %s60 = sphi 0, %s46
    %s64 = sphi 0, %s64
    %s66 = sphi 0, %s64
    %s67 = sphi 0, %s66
    %s81 = sphi 0, %s67
    %s87 = sphi 0, %s89
    %s90 = sphi 0, %s87
    %s91 = sphi 0, %s90
    %s107 = sphi 0, %s91
  $region4: #{atari_base_ppo_forward.6} parent=0 // loop_header_branch
    %12 = sbr.rel (%p10) target = $region8
  $region5: #{atari_base_ppo_forward.6} parent=0 // loop_body
    %s14 = ssub.s32 %s9, 1
    %s15 = ssub.s32 %s9, 2
    %s16 = sadd.s32 %s9, 1
    %s17 = ssub.s32 %s9, %s16
    %p18 = scmp.eq.s32.totalorder %s17, 0
    %s20 = sadd.s32 %s19, 1
    %s21 = scalar_select %p18, %s19, %s20
    %p24 = pneg %p18
    %p25 = scmp.eq.s32.totalorder %s9, 1
    %p26 = por %p24, %p25
    %p27 = scmp.ne.s32.totalorder %s19, %s22
    %p28 = scmp.eq.s32.totalorder %s9, 0
    %p29 = por %p27, %p28
    %p30 = scmp.ne.s32.totalorder %s19, %s22
    %p31 = scmp.eq.s32.totalorder %s14, 1
    %p32 = por %p30, %p31
    %p33 = scmp.ne.s32.totalorder %s22, %s23
    %p34 = scmp.eq.s32.totalorder %s14, 0
    %p35 = por %p33, %p34
    %p36 = scmp.ne.s32.totalorder %s22, %s23
    %p37 = scmp.eq.s32.totalorder %s15, 1
    %p38 = por %p36, %p37
    %p40 = scmp.ne.s32.totalorder %s23, %s39
    %p41 = scmp.eq.s32.totalorder %s15, 0
    %p42 = por %p40, %p41
    %s44 = sadd.s32 %s43, 1
    %p47 = scmp.eq.s32.totalorder %s9, 1
    %p48 = scmp.ne.s32.totalorder %s43, %s45
    %p49 = scmp.eq.s32.totalorder %s9, 0
    %p50 = por %p48, %p49
    %p51 = scmp.ne.s32.totalorder %s43, %s45
    %p52 = scmp.eq.s32.totalorder %s14, 1
    %p53 = por %p51, %p52
    %p54 = scmp.ne.s32.totalorder %s45, %s46
    %p55 = scmp.eq.s32.totalorder %s14, 0
    %p56 = por %p54, %p55
    %p57 = scmp.ne.s32.totalorder %s45, %s46
    %p58 = scmp.eq.s32.totalorder %s15, 1
    %p59 = por %p57, %p58
    %p61 = scmp.ne.s32.totalorder %s46, %s60
    %p62 = scmp.eq.s32.totalorder %s15, 0
    %p63 = por %p61, %p62
    %s65 = sadd.s32 %s64, 1
    %p68 = scmp.eq.s32.totalorder %s9, 1
    %p69 = scmp.ne.s32.totalorder %s64, %s66
    %p70 = scmp.eq.s32.totalorder %s9, 0
    %p71 = por %p69, %p70
    %p72 = scmp.ne.s32.totalorder %s64, %s66
    %p73 = scmp.eq.s32.totalorder %s14, 1
    %p74 = por %p72, %p73
    %p75 = scmp.ne.s32.totalorder %s66, %s67
    %p76 = scmp.eq.s32.totalorder %s14, 0
    %p77 = por %p75, %p76
    %p78 = scmp.ne.s32.totalorder %s66, %s67
    %p79 = scmp.eq.s32.totalorder %s15, 1
    %p80 = por %p78, %p79
    %p82 = scmp.ne.s32.totalorder %s67, %s81
    %p83 = scmp.eq.s32.totalorder %s15, 0
    %p84 = por %p82, %p83
    %s85 = ssub.s32 %s9, %s16
    %p86 = scmp.eq.s32.totalorder %s85, 0
    %s88 = sadd.s32 %s87, 1
    %s89 = scalar_select %p86, %s87, %s88
    %p92 = pneg %p86
    %p93 = scmp.eq.s32.totalorder %s9, 1
    %p94 = por %p92, %p93
    %p95 = scmp.ne.s32.totalorder %s87, %s90
    %p96 = scmp.eq.s32.totalorder %s9, 0
    %p97 = por %p95, %p96
    %p98 = scmp.ne.s32.totalorder %s87, %s90
    %p99 = scmp.eq.s32.totalorder %s14, 1
    %p100 = por %p98, %p99
    %p101 = scmp.ne.s32.totalorder %s90, %s91
    %p102 = scmp.eq.s32.totalorder %s14, 0
    %p103 = por %p101, %p102
    %p104 = scmp.ne.s32.totalorder %s90, %s91
    %p105 = scmp.eq.s32.totalorder %s15, 1
    %p106 = por %p104, %p105
    %p108 = scmp.ne.s32.totalorder %s91, %s107
    %p109 = scmp.eq.s32.totalorder %s15, 0
    %p110 = por %p108, %p109
    %p111 = scmp.le.s32.totalorder 1, %s9
    %p112 = scmp.lt.s32.totalorder %s9, 3
    %p113 = pnand %p111, %p112
    %p114 = pneg %p113
    // Predicated region
    $region9: #{atari_base_ppo_forward.6} parent=5 // pred_check
      _
    $region10: #{atari_base_ppo_forward.6} parent=5 // pred_check_branch
      %116 = sbr.rel (%p113) target = $region12
    $region11: #{atari_base_ppo_forward.6} parent=5 // pred_region
      %s117 = ssub.s32 %s9, 1
      // Predicated region
      $region13: #{atari_base_ppo_forward.6} parent=11 // pred_check
        %p118 = pneg %p56
      $region14: #{atari_base_ppo_forward.6} parent=11 // pred_check_branch
        %120 = sbr.rel (%p118) target = $region16
      $region15: #{atari_base_ppo_forward.6} parent=11 // pred_region
        _
      $region16: #{atari_base_ppo_forward.6} parent=11 // pred_fallthru
        _
      // Predicated region
      $region17: #{atari_base_ppo_forward.6} parent=11 // pred_check
        %p121 = pneg %p77
      $region18: #{atari_base_ppo_forward.6} parent=11 // pred_check_branch
        %123 = sbr.rel (%p121) target = $region20
      $region19: #{atari_base_ppo_forward.6} parent=11 // pred_region
        _
      $region20: #{atari_base_ppo_forward.6} parent=11 // pred_fallthru
        _
    $region12: #{atari_base_ppo_forward.6} parent=5 // pred_fallthru
      _
    %p124 = scmp.lt.s32.totalorder %s9, 2
    // Predicated region
    $region21: #{atari_base_ppo_forward.6} parent=5 // pred_check
      %p125 = pneg %p124
    $region22: #{atari_base_ppo_forward.6} parent=5 // pred_check_branch
      %127 = sbr.rel (%p125) target = $region24
    $region23: #{atari_base_ppo_forward.6} parent=5 // pred_region
      // Predicated region
      $region25: #{atari_base_ppo_forward.6} parent=23 // pred_check
        %p128 = pneg %p29
      $region26: #{atari_base_ppo_forward.6} parent=23 // pred_check_branch
        %130 = sbr.rel (%p128) target = $region28
      $region27: #{atari_base_ppo_forward.6} parent=23 // pred_region
        %s131 = smul.u32 2, %s9
        %p132 = scmp.lt.s32.totalorder %s131, 3
        %s133 = scalar_select %p132, %s131, 3
        %s134 = smul.addr %s133, 4
        %s135 = scalar_lea.vmem %s0, %s134
        %s136 = smul.u32 2, %s9
      $region28: #{atari_base_ppo_forward.6} parent=23 // pred_fallthru
        _
    $region24: #{atari_base_ppo_forward.6} parent=5 // pred_fallthru
      _
    %p137 = scmp.le.s32.totalorder 1, %s9
    %p138 = scmp.lt.s32.totalorder %s9, 3
    %p139 = pnand %p137, %p138
    %p140 = pneg %p139
    // Predicated region
    $region29: #{atari_base_ppo_forward.6} parent=5 // pred_check
      _
    $region30: #{atari_base_ppo_forward.6} parent=5 // pred_check_branch
      %142 = sbr.rel (%p139) target = $region32
    $region31: #{atari_base_ppo_forward.6} parent=5 // pred_region
      %s143 = ssub.s32 %s9, 1
      %s144 = smul.u32 2, %s14
      %p145 = scmp.lt.s32.totalorder %s144, 3
      %s146 = scalar_select %p145, %s144, 3
      %s147 = smul.addr %s146, 4
      %s148 = scalar_lea.vmem %s0, %s147
      %p149 = pneg %p35
      %p150 = pneg %p32
      %p151 = pneg %p56
      %p152 = pneg %p53
      %p153 = pneg %p77
      %p154 = pneg %p74
      %p155 = pneg %p103
      %p156 = pneg %p100
      %s157 = smul.u32 2, %s14
      %p158 = scmp.lt.s32.totalorder %s157, 3
      %s159 = scalar_select %p158, %s157, 3
      %s160 = smul.addr %s159, 4
      %s161 = scalar_lea.vmem %s3, %s160
      %s162 = smul.u32 2, %s14
      %p163 = scmp.lt.s32.totalorder %s162, 3
      %s164 = scalar_select %p163, %s162, 3
      %s165 = smul.addr %s164, 4
      %s166 = scalar_lea.vmem %s0, %s165
      %s167 = smul.u32 2, %s14
      %s168 = smul.u32 2, %s14
      %p169 = scmp.lt.s32.totalorder %s168, 3
      %s170 = scalar_select %p169, %s168, 3
      %s171 = smul.addr %s170, 4
      %s172 = scalar_lea.vmem %s3, %s171
      %s173 = smul.u32 2, %s14
      %v175 = vld [vmem:[%s166] sm:$0x7]
      %v176 = vld [vmem:[%s1] sm:$0xf]
      %v177 = vld [vmem:[%s1 + $0x4] sm:$0xf]
      %v178 = vld [vmem:[%s1 + $0x8] sm:$0xf]
      %v179 = vld [vmem:[%s1 + $0xc] sm:$0xf]
      %v180 = vld [vmem:[%s1 + $0x10] sm:$0xf]
      %v181 = vld [vmem:[%s1 + $0x14] sm:$0xf]
      %v182 = vld [vmem:[%s1 + $0x18] sm:$0xf]
      %v183 = vld [vmem:[%s1 + $0x1c] sm:$0xf]
      %v184 = vld [vmem:[%s166] sm:$0xf]
      %s185 = scalar_lea.vmem %s1, 32
      %v186 = vld [vmem:[%s185] sm:$0xf]
      %v187 = vld [vmem:[%s185 + $0x4] sm:$0xf]
      %v188 = vld [vmem:[%s185 + $0x8] sm:$0xf]
      %v189 = vld [vmem:[%s185 + $0xc] sm:$0xf]
      %v190 = vld [vmem:[%s185 + $0x10] sm:$0xf]
      %v191 = vld [vmem:[%s185 + $0x14] sm:$0xf]
      %v192 = vld [vmem:[%s185 + $0x18] sm:$0xf]
      %v193 = vld [vmem:[%s185 + $0x1c] sm:$0xf]
      %v195 = vunpack.c.l.b16 %v184
      %v196 = vpack.c.b16 %v195, %v195
      %v198 = vshrl.u32 %v196, 16
      %v200 = vshll.u32 %v196, 16
      %v202 = vrot.slane %v200, 1
      %v203 = vor.u32 %v198, %v202
      %v212 = vunpack.c.l.b16 %v186
      %v213 = vunpack.c.l.b16 %v187
      %v214 = vunpack.c.l.b16 %v188
      %v215 = vunpack.c.l.b16 %v189
      %v216 = vunpack.c.l.b16 %v190
      %v217 = vunpack.c.l.b16 %v191
      %v218 = vunpack.c.l.b16 %v192
      %v219 = vunpack.c.l.b16 %v193
      %v220 = vpack.c.b16 %v213, %v212
      %v221 = vpack.c.b16 %v215, %v214
      %v222 = vpack.c.b16 %v217, %v216
      %v223 = vpack.c.b16 %v219, %v218
      %vm228 = vcmask 523264
      %v230 = vsel %vm228, %v203, 0
      %232 = vmatprep.subr.bf16.mxu0 0
      %233 = vmatpush1.bf16.msra.mxu0 %v220
      %234 = vmatprep.subr.bf16.mxu0 0
      %235 = vmatpush1.bf16.msra.mxu0 %v221
      %236 = vmatprep.subr.bf16.mxu0 0
      %237 = vmatpush1.bf16.msra.mxu0 %v222
      %238 = vmatprep.subr.bf16.mxu0 0
      %239 = vmatpush1.bf16.msra.mxu0 %v223
      %240 = vmatprep.subr.bf16.mxu0 0
      %241 = vmatpush1.bf16.msra.mxu0 0
      %242 = vmatprep.subr.bf16.mxu0 0
      %243 = vmatpush1.bf16.msra.mxu0 0
      %244 = vmatprep.subr.bf16.mxu0 0
      %245 = vmatpush1.bf16.msra.mxu0 0
      %246 = vmatprep.subr.bf16.mxu0 0
      %247 = vmatpush1.bf16.msra.mxu0 0
      %248 = vmatprep.subr.bf16.mxu0 0
      %249 = vmatpush1.bf16.msra.mxu0 0
      %250 = vmatprep.subr.bf16.mxu0 0
      %251 = vmatpush1.bf16.msra.mxu0 0
      %252 = vmatprep.subr.bf16.mxu0 0
      %253 = vmatpush1.bf16.msra.mxu0 0
      %254 = vmatprep.subr.bf16.mxu0 0
      %255 = vmatpush1.bf16.msra.mxu0 0
      %256 = vmatprep.subr.bf16.mxu0 0
      %257 = vmatpush1.bf16.msra.mxu0 0
      %258 = vmatprep.subr.bf16.mxu0 0
      %259 = vmatpush1.bf16.msra.mxu0 0
      %260 = vmatprep.subr.bf16.mxu0 0
      %261 = vmatpush1.bf16.msra.mxu0 0
      %262 = vmatprep.subr.bf16.mxu0 0
      %263 = vmatpush1.bf16.msra.mxu0 0
      %264 = vmatprep.mubr.bf16.mxu0 0
      %265 = vmatmul.mubr.bf16.gmra.mrb[0].mxu0 %v230
      %v266 = vpop.f32.mrb[0].mxu0
      %v267 = vadd.f32 0.0, %v266
      %v268 = vpop.f32.mrb[0].mxu0
      %v269 = vpop.f32.mrb[0].mxu0
      %v270 = vpop.f32.mrb[0].mxu0
      %271 = vdwg.mxu0
      %v280 = vunpack.c.l.b16 %v176
      %v281 = vunpack.c.l.b16 %v177
      %v282 = vunpack.c.l.b16 %v178
      %v283 = vunpack.c.l.b16 %v179
      %v284 = vunpack.c.l.b16 %v180
      %v285 = vunpack.c.l.b16 %v181
      %v286 = vunpack.c.l.b16 %v182
      %v287 = vunpack.c.l.b16 %v183
      %v288 = vpack.c.b16 %v281, %v280
      %v289 = vpack.c.b16 %v283, %v282
      %v290 = vpack.c.b16 %v285, %v284
      %v291 = vpack.c.b16 %v287, %v286
      %v297 = vsel %vm228, %v175, 0
      %299 = vmatprep.subr.bf16.mxu0 0
      %300 = vmatpush1.bf16.msra.mxu0 %v288
      %301 = vmatprep.subr.bf16.mxu0 0
      %302 = vmatpush1.bf16.msra.mxu0 %v289
      %303 = vmatprep.subr.bf16.mxu0 0
      %304 = vmatpush1.bf16.msra.mxu0 %v290
      %305 = vmatprep.subr.bf16.mxu0 0
      %306 = vmatpush1.bf16.msra.mxu0 %v291
      %307 = vmatprep.subr.bf16.mxu0 0
      %308 = vmatpush1.bf16.msra.mxu0 0
      %309 = vmatprep.subr.bf16.mxu0 0
      %310 = vmatpush1.bf16.msra.mxu0 0
      %311 = vmatprep.subr.bf16.mxu0 0
      %312 = vmatpush1.bf16.msra.mxu0 0
      %313 = vmatprep.subr.bf16.mxu0 0
      %314 = vmatpush1.bf16.msra.mxu0 0
      %315 = vmatprep.subr.bf16.mxu0 0
      %316 = vmatpush1.bf16.msra.mxu0 0
      %317 = vmatprep.subr.bf16.mxu0 0
      %318 = vmatpush1.bf16.msra.mxu0 0
      %319 = vmatprep.subr.bf16.mxu0 0
      %320 = vmatpush1.bf16.msra.mxu0 0
      %321 = vmatprep.subr.bf16.mxu0 0
      %322 = vmatpush1.bf16.msra.mxu0 0
      %323 = vmatprep.subr.bf16.mxu0 0
      %324 = vmatpush1.bf16.msra.mxu0 0
      %325 = vmatprep.subr.bf16.mxu0 0
      %326 = vmatpush1.bf16.msra.mxu0 0
      %327 = vmatprep.subr.bf16.mxu0 0
      %328 = vmatpush1.bf16.msra.mxu0 0
      %329 = vmatprep.subr.bf16.mxu0 0
      %330 = vmatpush1.bf16.msra.mxu0 0
      %331 = vmatprep.mubr.bf16.mxu0 0
      %332 = vmatmul.mubr.bf16.gmra.mrb[0].mxu0 %v297
      %v333 = vpop.f32.mrb[0].mxu0
      %v334 = vadd.f32 %v267, %v333
      %v335 = vpop.f32.mrb[0].mxu0
      %v336 = vpop.f32.mrb[0].mxu0
      %v337 = vpop.f32.mrb[0].mxu0
      %338 = vdwg.mxu0
      %v339 = vld [vmem:[%s166] sm:$0xe]
      %s340 = scalar_lea.vmem %s1, 64
      %v341 = vld [vmem:[%s340] sm:$0xf]
      %v342 = vld [vmem:[%s340 + $0x4] sm:$0xf]
      %v343 = vld [vmem:[%s340 + $0x8] sm:$0xf]
      %v344 = vld [vmem:[%s340 + $0xc] sm:$0xf]
      %v345 = vld [vmem:[%s340 + $0x10] sm:$0xf]
      %v346 = vld [vmem:[%s340 + $0x14] sm:$0xf]
      %v347 = vld [vmem:[%s340 + $0x18] sm:$0xf]
      %v348 = vld [vmem:[%s340 + $0x1c] sm:$0xf]
      %v350 = vunpack.c.l.b16 %v339
      %v351 = vpack.c.b16 %v350, %v350
      %v352 = vrot.slane %v351, 1
      %v361 = vunpack.c.l.b16 %v341
      %v362 = vunpack.c.l.b16 %v342
      %v363 = vunpack.c.l.b16 %v343
      %v364 = vunpack.c.l.b16 %v344
      %v365 = vunpack.c.l.b16 %v345
      %v366 = vunpack.c.l.b16 %v346
      %v367 = vunpack.c.l.b16 %v347
      %v368 = vunpack.c.l.b16 %v348
      %v369 = vpack.c.b16 %v362, %v361
      %v370 = vpack.c.b16 %v364, %v363
      %v371 = vpack.c.b16 %v366, %v365
      %v372 = vpack.c.b16 %v368, %v367
      %v378 = vsel %vm228, %v352, 0
      %380 = vmatprep.subr.bf16.mxu0 0
      %381 = vmatpush1.bf16.msra.mxu0 %v369
      %382 = vmatprep.subr.bf16.mxu0 0
      %383 = vmatpush1.bf16.msra.mxu0 %v370
      %384 = vmatprep.subr.bf16.mxu0 0
      %385 = vmatpush1.bf16.msra.mxu0 %v371
      %386 = vmatprep.subr.bf16.mxu0 0
      %387 = vmatpush1.bf16.msra.mxu0 %v372
      %388 = vmatprep.subr.bf16.mxu0 0
      %389 = vmatpush1.bf16.msra.mxu0 0
      %390 = vmatprep.subr.bf16.mxu0 0
      %391 = vmatpush1.bf16.msra.mxu0 0
      %392 = vmatprep.subr.bf16.mxu0 0
      %393 = vmatpush1.bf16.msra.mxu0 0
      %394 = vmatprep.subr.bf16.mxu0 0
      %395 = vmatpush1.bf16.msra.mxu0 0
      %396 = vmatprep.subr.bf16.mxu0 0
      %397 = vmatpush1.bf16.msra.mxu0 0
      %398 = vmatprep.subr.bf16.mxu0 0
      %399 = vmatpush1.bf16.msra.mxu0 0
      %400 = vmatprep.subr.bf16.mxu0 0
      %401 = vmatpush1.bf16.msra.mxu0 0
      %402 = vmatprep.subr.bf16.mxu0 0
      %403 = vmatpush1.bf16.msra.mxu0 0
      %404 = vmatprep.subr.bf16.mxu0 0
      %405 = vmatpush1.bf16.msra.mxu0 0
      %406 = vmatprep.subr.bf16.mxu0 0
      %407 = vmatpush1.bf16.msra.mxu0 0
      %408 = vmatprep.subr.bf16.mxu0 0
      %409 = vmatpush1.bf16.msra.mxu0 0
      %410 = vmatprep.subr.bf16.mxu0 0
      %411 = vmatpush1.bf16.msra.mxu0 0
      %412 = vmatprep.mubr.bf16.mxu0 0
      %413 = vmatmul.mubr.bf16.gmra.mrb[0].mxu0 %v378
      %v414 = vpop.f32.mrb[0].mxu0
      %v415 = vadd.f32 0.0, %v414
      %v416 = vpop.f32.mrb[0].mxu0
      %v417 = vpop.f32.mrb[0].mxu0
      %v418 = vpop.f32.mrb[0].mxu0
      %419 = vdwg.mxu0
      %v420 = vadd.f32 %v334, %v415
      %v421 = vld [vmem:[%s166] sm:$0xc]
      %v422 = vld [vmem:[%s166 + $0x4] sm:$0x1]
      %s423 = scalar_lea.vmem %s1, 96
      %v424 = vld [vmem:[%s423] sm:$0xf]
      %v425 = vld [vmem:[%s423 + $0x4] sm:$0xf]
      %v426 = vld [vmem:[%s423 + $0x8] sm:$0xf]
      %v427 = vld [vmem:[%s423 + $0xc] sm:$0xf]
      %v428 = vld [vmem:[%s423 + $0x10] sm:$0xf]
      %v429 = vld [vmem:[%s423 + $0x14] sm:$0xf]
      %v430 = vld [vmem:[%s423 + $0x18] sm:$0xf]
      %v431 = vld [vmem:[%s423 + $0x1c] sm:$0xf]
      %v434 = vunpack.c.l.b16 %v421
      %v435 = vunpack.c.l.b16 %v422
      %v436 = vpack.c.b16 %v435, %v434
      %v437 = vrot.slane %v436, 2
      %v446 = vunpack.c.l.b16 %v424
      %v447 = vunpack.c.l.b16 %v425
      %v448 = vunpack.c.l.b16 %v426
      %v449 = vunpack.c.l.b16 %v427
      %v450 = vunpack.c.l.b16 %v428
      %v451 = vunpack.c.l.b16 %v429
      %v452 = vunpack.c.l.b16 %v430
      %v453 = vunpack.c.l.b16 %v431
      %v454 = vpack.c.b16 %v447, %v446
      %v455 = vpack.c.b16 %v449, %v448
      %v456 = vpack.c.b16 %v451, %v450
      %v457 = vpack.c.b16 %v453, %v452
      %v463 = vsel %vm228, %v437, 0
      %465 = vmatprep.subr.bf16.mxu0 0
      %466 = vmatpush1.bf16.msra.mxu0 %v454
      %467 = vmatprep.subr.bf16.mxu0 0
      %468 = vmatpush1.bf16.msra.mxu0 %v455
      %469 = vmatprep.subr.bf16.mxu0 0
      %470 = vmatpush1.bf16.msra.mxu0 %v456
      %471 = vmatprep.subr.bf16.mxu0 0
      %472 = vmatpush1.bf16.msra.mxu0 %v457
      %473 = vmatprep.subr.bf16.mxu0 0
      %474 = vmatpush1.bf16.msra.mxu0 0
      %475 = vmatprep.subr.bf16.mxu0 0
      %476 = vmatpush1.bf16.msra.mxu0 0
      %477 = vmatprep.subr.bf16.mxu0 0
      %478 = vmatpush1.bf16.msra.mxu0 0
      %479 = vmatprep.subr.bf16.mxu0 0
      %480 = vmatpush1.bf16.msra.mxu0 0
      %481 = vmatprep.subr.bf16.mxu0 0
      %482 = vmatpush1.bf16.msra.mxu0 0
      %483 = vmatprep.subr.bf16.mxu0 0
      %484 = vmatpush1.bf16.msra.mxu0 0
      %485 = vmatprep.subr.bf16.mxu0 0
      %486 = vmatpush1.bf16.msra.mxu0 0
      %487 = vmatprep.subr.bf16.mxu0 0
      %488 = vmatpush1.bf16.msra.mxu0 0
      %489 = vmatprep.subr.bf16.mxu0 0
      %490 = vmatpush1.bf16.msra.mxu0 0
      %491 = vmatprep.subr.bf16.mxu0 0
      %492 = vmatpush1.bf16.msra.mxu0 0
      %493 = vmatprep.subr.bf16.mxu0 0
      %494 = vmatpush1.bf16.msra.mxu0 0
      %495 = vmatprep.subr.bf16.mxu0 0
      %496 = vmatpush1.bf16.msra.mxu0 0
      %497 = vmatprep.mubr.bf16.mxu0 0
      %498 = vmatmul.mubr.bf16.gmra.mrb[0].mxu0 %v463
      %v499 = vpop.f32.mrb[0].mxu0
      %v500 = vadd.f32 0.0, %v499
      %v501 = vpop.f32.mrb[0].mxu0
      %v502 = vpop.f32.mrb[0].mxu0
      %v503 = vpop.f32.mrb[0].mxu0
      %504 = vdwg.mxu0
      %v505 = vadd.f32 %v420, %v500
      %v506 = vld [vmem:[%s166 + $0x4] sm:$0x3]
      %s507 = scalar_lea.vmem %s1, 128
      %v508 = vld [vmem:[%s507] sm:$0xf]
      %v509 = vld [vmem:[%s507 + $0x4] sm:$0xf]
      %v510 = vld [vmem:[%s507 + $0x8] sm:$0xf]
      %v511 = vld [vmem:[%s507 + $0xc] sm:$0xf]
      %v512 = vld [vmem:[%s507 + $0x10] sm:$0xf]
      %v513 = vld [vmem:[%s507 + $0x14] sm:$0xf]
      %v514 = vld [vmem:[%s507 + $0x18] sm:$0xf]
      %v515 = vld [vmem:[%s507 + $0x1c] sm:$0xf]
      %v517 = vunpack.c.l.b16 %v506
      %v518 = vpack.c.b16 %v517, %v434
      %v520 = vshrl.u32 %v518, 16
      %v522 = vrot.slane %v520, 2
      %v523 = vshll.u32 %v518, 16
      %v525 = vrot.slane %v523, 3
      %v526 = vor.u32 %v522, %v525
      %v535 = vunpack.c.l.b16 %v508
      %v536 = vunpack.c.l.b16 %v509
      %v537 = vunpack.c.l.b16 %v510
      %v538 = vunpack.c.l.b16 %v511
      %v539 = vunpack.c.l.b16 %v512
      %v540 = vunpack.c.l.b16 %v513
      %v541 = vunpack.c.l.b16 %v514
      %v542 = vunpack.c.l.b16 %v515
      %v543 = vpack.c.b16 %v536, %v535
      %v544 = vpack.c.b16 %v538, %v537
      %v545 = vpack.c.b16 %v540, %v539
      %v546 = vpack.c.b16 %v542, %v541
      %v552 = vsel %vm228, %v526, 0
      %554 = vmatprep.subr.bf16.mxu0 0
      %555 = vmatpush1.bf16.msra.mxu0 %v543
      %556 = vmatprep.subr.bf16.mxu0 0
      %557 = vmatpush1.bf16.msra.mxu0 %v544
      %558 = vmatprep.subr.bf16.mxu0 0
      %559 = vmatpush1.bf16.msra.mxu0 %v545
      %560 = vmatprep.subr.bf16.mxu0 0
      %561 = vmatpush1.bf16.msra.mxu0 %v546
      %562 = vmatprep.subr.bf16.mxu0 0
      %563 = vmatpush1.bf16.msra.mxu0 0
      %564 = vmatprep.subr.bf16.mxu0 0
      %565 = vmatpush1.bf16.msra.mxu0 0
      %566 = vmatprep.subr.bf16.mxu0 0
      %567 = vmatpush1.bf16.msra.mxu0 0
      %568 = vmatprep.subr.bf16.mxu0 0
      %569 = vmatpush1.bf16.msra.mxu0 0
      %570 = vmatprep.subr.bf16.mxu0 0
      %571 = vmatpush1.bf16.msra.mxu0 0
      %572 = vmatprep.subr.bf16.mxu0 0
      %573 = vmatpush1.bf16.msra.mxu0 0
      %574 = vmatprep.subr.bf16.mxu0 0
      %575 = vmatpush1.bf16.msra.mxu0 0
      %576 = vmatprep.subr.bf16.mxu0 0
      %577 = vmatpush1.bf16.msra.mxu0 0
      %578 = vmatprep.subr.bf16.mxu0 0
      %579 = vmatpush1.bf16.msra.mxu0 0
      %580 = vmatprep.subr.bf16.mxu0 0
      %581 = vmatpush1.bf16.msra.mxu0 0
      %582 = vmatprep.subr.bf16.mxu0 0
      %583 = vmatpush1.bf16.msra.mxu0 0
      %584 = vmatprep.subr.bf16.mxu0 0
      %585 = vmatpush1.bf16.msra.mxu0 0
      %586 = vmatprep.mubr.bf16.mxu0 0
      %587 = vmatmul.mubr.bf16.gmra.mrb[0].mxu0 %v552
      %v588 = vpop.f32.mrb[0].mxu0
      %v589 = vadd.f32 0.0, %v588
      %v590 = vpop.f32.mrb[0].mxu0
      %v591 = vpop.f32.mrb[0].mxu0
      %v592 = vpop.f32.mrb[0].mxu0
      %593 = vdwg.mxu0
      %v594 = vadd.f32 %v505, %v589
      %v595 = vld [vmem:[%s166] sm:$0x8]
      %s596 = scalar_lea.vmem %s1, 160
      %v597 = vld [vmem:[%s596] sm:$0xf]
      %v598 = vld [vmem:[%s596 + $0x4] sm:$0xf]
      %v599 = vld [vmem:[%s596 + $0x8] sm:$0xf]
      %v600 = vld [vmem:[%s596 + $0xc] sm:$0xf]
      %v601 = vld [vmem:[%s596 + $0x10] sm:$0xf]
      %v602 = vld [vmem:[%s596 + $0x14] sm:$0xf]
      %v603 = vld [vmem:[%s596 + $0x18] sm:$0xf]
      %v604 = vld [vmem:[%s596 + $0x1c] sm:$0xf]
      %v606 = vunpack.c.l.b16 %v595
      %v607 = vpack.c.b16 %v517, %v606
      %v608 = vrot.slane %v607, 3
      %v617 = vunpack.c.l.b16 %v597
      %v618 = vunpack.c.l.b16 %v598
      %v619 = vunpack.c.l.b16 %v599
      %v620 = vunpack.c.l.b16 %v600
      %v621 = vunpack.c.l.b16 %v601
      %v622 = vunpack.c.l.b16 %v602
      %v623 = vunpack.c.l.b16 %v603
      %v624 = vunpack.c.l.b16 %v604
      %v625 = vpack.c.b16 %v618, %v617
      %v626 = vpack.c.b16 %v620, %v619
      %v627 = vpack.c.b16 %v622, %v621
      %v628 = vpack.c.b16 %v624, %v623
      %v634 = vsel %vm228, %v608, 0
      %636 = vmatprep.subr.bf16.mxu0 0
      %637 = vmatpush1.bf16.msra.mxu0 %v625
      %638 = vmatprep.subr.bf16.mxu0 0
      %639 = vmatpush1.bf16.msra.mxu0 %v626
      %640 = vmatprep.subr.bf16.mxu0 0
      %641 = vmatpush1.bf16.msra.mxu0 %v627
      %642 = vmatprep.subr.bf16.mxu0 0
      %643 = vmatpush1.bf16.msra.mxu0 %v628
      %644 = vmatprep.subr.bf16.mxu0 0
      %645 = vmatpush1.bf16.msra.mxu0 0
      %646 = vmatprep.subr.bf16.mxu0 0
      %647 = vmatpush1.bf16.msra.mxu0 0
      %648 = vmatprep.subr.bf16.mxu0 0
      %649 = vmatpush1.bf16.msra.mxu0 0
      %650 = vmatprep.subr.bf16.mxu0 0
      %651 = vmatpush1.bf16.msra.mxu0 0
      %652 = vmatprep.subr.bf16.mxu0 0
      %653 = vmatpush1.bf16.msra.mxu0 0
      %654 = vmatprep.subr.bf16.mxu0 0
      %655 = vmatpush1.bf16.msra.mxu0 0
      %656 = vmatprep.subr.bf16.mxu0 0
      %657 = vmatpush1.bf16.msra.mxu0 0
      %658 = vmatprep.subr.bf16.mxu0 0
      %659 = vmatpush1.bf16.msra.mxu0 0
      %660 = vmatprep.subr.bf16.mxu0 0
      %661 = vmatpush1.bf16.msra.mxu0 0
      %662 = vmatprep.subr.bf16.mxu0 0
      %663 = vmatpush1.bf16.msra.mxu0 0
      %664 = vmatprep.subr.bf16.mxu0 0
      %665 = vmatpush1.bf16.msra.mxu0 0
      %666 = vmatprep.subr.bf16.mxu0 0
      %667 = vmatpush1.bf16.msra.mxu0 0
      %668 = vmatprep.mubr.bf16.mxu0 0
      %669 = vmatmul.mubr.bf16.gmra.mrb[0].mxu0 %v634
      %v670 = vpop.f32.mrb[0].mxu0
      %v671 = vadd.f32 0.0, %v670
      %v672 = vpop.f32.mrb[0].mxu0
      %v673 = vpop.f32.mrb[0].mxu0
      %v674 = vpop.f32.mrb[0].mxu0
      %675 = vdwg.mxu0
      %v676 = vadd.f32 %v594, %v671
      %v677 = vld [vmem:[%s166 + $0x4] sm:$0x7]
      %s678 = scalar_lea.vmem %s1, 192
      %v679 = vld [vmem:[%s678] sm:$0xf]
      %v680 = vld [vmem:[%s678 + $0x4] sm:$0xf]
      %v681 = vld [vmem:[%s678 + $0x8] sm:$0xf]
      %v682 = vld [vmem:[%s678 + $0xc] sm:$0xf]
      %v683 = vld [vmem:[%s678 + $0x10] sm:$0xf]
      %v684 = vld [vmem:[%s678 + $0x14] sm:$0xf]
      %v685 = vld [vmem:[%s678 + $0x18] sm:$0xf]
      %v686 = vld [vmem:[%s678 + $0x1c] sm:$0xf]
      %v695 = vunpack.c.l.b16 %v679
      %v696 = vunpack.c.l.b16 %v680
      %v697 = vunpack.c.l.b16 %v681
      %v698 = vunpack.c.l.b16 %v682
      %v699 = vunpack.c.l.b16 %v683
      %v700 = vunpack.c.l.b16 %v684
      %v701 = vunpack.c.l.b16 %v685
      %v702 = vunpack.c.l.b16 %v686
      %v703 = vpack.c.b16 %v696, %v695
      %v704 = vpack.c.b16 %v698, %v697
      %v705 = vpack.c.b16 %v700, %v699
      %v706 = vpack.c.b16 %v702, %v701
      %v712 = vsel %vm228, %v677, 0
      %714 = vmatprep.subr.bf16.mxu0 0
      %715 = vmatpush1.bf16.msra.mxu0 %v703
      %716 = vmatprep.subr.bf16.mxu0 0
      %717 = vmatpush1.bf16.msra.mxu0 %v704
      %718 = vmatprep.subr.bf16.mxu0 0
      %719 = vmatpush1.bf16.msra.mxu0 %v705
      %720 = vmatprep.subr.bf16.mxu0 0
      %721 = vmatpush1.bf16.msra.mxu0 %v706
      %722 = vmatprep.subr.bf16.mxu0 0
      %723 = vmatpush1.bf16.msra.mxu0 0
      %724 = vmatprep.subr.bf16.mxu0 0
      %725 = vmatpush1.bf16.msra.mxu0 0
      %726 = vmatprep.subr.bf16.mxu0 0
      %727 = vmatpush1.bf16.msra.mxu0 0
      %728 = vmatprep.subr.bf16.mxu0 0
      %729 = vmatpush1.bf16.msra.mxu0 0
      %730 = vmatprep.subr.bf16.mxu0 0
      %731 = vmatpush1.bf16.msra.mxu0 0
      %732 = vmatprep.subr.bf16.mxu0 0
      %733 = vmatpush1.bf16.msra.mxu0 0
      %734 = vmatprep.subr.bf16.mxu0 0
      %735 = vmatpush1.bf16.msra.mxu0 0
      %736 = vmatprep.subr.bf16.mxu0 0
      %737 = vmatpush1.bf16.msra.mxu0 0
      %738 = vmatprep.subr.bf16.mxu0 0
      %739 = vmatpush1.bf16.msra.mxu0 0
      %740 = vmatprep.subr.bf16.mxu0 0
      %741 = vmatpush1.bf16.msra.mxu0 0
      %742 = vmatprep.subr.bf16.mxu0 0
      %743 = vmatpush1.bf16.msra.mxu0 0
      %744 = vmatprep.subr.bf16.mxu0 0
      %745 = vmatpush1.bf16.msra.mxu0 0
      %746 = vmatprep.mubr.bf16.mxu0 0
      %747 = vmatmul.mubr.bf16.gmra.mrb[0].mxu0 %v712
      %v748 = vpop.f32.mrb[0].mxu0
      %v749 = vadd.f32 0.0, %v748
      %v750 = vpop.f32.mrb[0].mxu0
      %v751 = vpop.f32.mrb[0].mxu0
      %v752 = vpop.f32.mrb[0].mxu0
      %753 = vdwg.mxu0
      %v754 = vadd.f32 %v676, %v749
      %v755 = vld [vmem:[%s166 + $0x4] sm:$0xf]
      %s756 = scalar_lea.vmem %s1, 224
      %v757 = vld [vmem:[%s756] sm:$0xf]
      %v758 = vld [vmem:[%s756 + $0x4] sm:$0xf]
      %v759 = vld [vmem:[%s756 + $0x8] sm:$0xf]
      %v760 = vld [vmem:[%s756 + $0xc] sm:$0xf]
      %v761 = vld [vmem:[%s756 + $0x10] sm:$0xf]
      %v762 = vld [vmem:[%s756 + $0x14] sm:$0xf]
      %v763 = vld [vmem:[%s756 + $0x18] sm:$0xf]
      %v764 = vld [vmem:[%s756 + $0x1c] sm:$0xf]
      %v766 = vunpack.c.l.b16 %v755
      %v767 = vpack.c.b16 %v766, %v766
      %v769 = vshrl.u32 %v767, 16
      %v771 = vshll.u32 %v767, 16
      %v773 = vrot.slane %v771, 1
      %v774 = vor.u32 %v769, %v773
      %v783 = vunpack.c.l.b16 %v757
      %v784 = vunpack.c.l.b16 %v758
      %v785 = vunpack.c.l.b16 %v759
      %v786 = vunpack.c.l.b16 %v760
      %v787 = vunpack.c.l.b16 %v761
      %v788 = vunpack.c.l.b16 %v762
      %v789 = vunpack.c.l.b16 %v763
      %v790 = vunpack.c.l.b16 %v764
      %v791 = vpack.c.b16 %v784, %v783
      %v792 = vpack.c.b16 %v786, %v785
      %v793 = vpack.c.b16 %v788, %v787
      %v794 = vpack.c.b16 %v790, %v789
      %v800 = vsel %vm228, %v774, 0
      %802 = vmatprep.subr.bf16.mxu0 0
      %803 = vmatpush1.bf16.msra.mxu0 %v791
      %804 = vmatprep.subr.bf16.mxu0 0
      %805 = vmatpush1.bf16.msra.mxu0 %v792
      %806 = vmatprep.subr.bf16.mxu0 0
      %807 = vmatpush1.bf16.msra.mxu0 %v793
      %808 = vmatprep.subr.bf16.mxu0 0
      %809 = vmatpush1.bf16.msra.mxu0 %v794
      %810 = vmatprep.subr.bf16.mxu0 0
      %811 = vmatpush1.bf16.msra.mxu0 0
      %812 = vmatprep.subr.bf16.mxu0 0
      %813 = vmatpush1.bf16.msra.mxu0 0
      %814 = vmatprep.subr.bf16.mxu0 0
      %815 = vmatpush1.bf16.msra.mxu0 0
      %816 = vmatprep.subr.bf16.mxu0 0
      %817 = vmatpush1.bf16.msra.mxu0 0
      %818 = vmatprep.subr.bf16.mxu0 0
      %819 = vmatpush1.bf16.msra.mxu0 0
      %820 = vmatprep.subr.bf16.mxu0 0
      %821 = vmatpush1.bf16.msra.mxu0 0
      %822 = vmatprep.subr.bf16.mxu0 0
      %823 = vmatpush1.bf16.msra.mxu0 0
      %824 = vmatprep.subr.bf16.mxu0 0
      %825 = vmatpush1.bf16.msra.mxu0 0
      %826 = vmatprep.subr.bf16.mxu0 0
      %827 = vmatpush1.bf16.msra.mxu0 0
      %828 = vmatprep.subr.bf16.mxu0 0
      %829 = vmatpush1.bf16.msra.mxu0 0
      %830 = vmatprep.subr.bf16.mxu0 0
      %831 = vmatpush1.bf16.msra.mxu0 0
      %832 = vmatprep.subr.bf16.mxu0 0
      %833 = vmatpush1.bf16.msra.mxu0 0
      %834 = vmatprep.mubr.bf16.mxu0 0
      %835 = vmatmul.mubr.bf16.gmra.mrb[0].mxu0 %v800
      %v836 = vpop.f32.mrb[0].mxu0
      %v837 = vadd.f32 0.0, %v836
      %v838 = vpop.f32.mrb[0].mxu0
      %v839 = vpop.f32.mrb[0].mxu0
      %v840 = vpop.f32.mrb[0].mxu0
      %841 = vdwg.mxu0
      %v842 = vadd.f32 %v754, %v837
      %v843 = vld [vmem:[%s166 + $0x4] sm:$0xe]
      %s844 = scalar_lea.vmem %s1, 256
      %v845 = vld [vmem:[%s844] sm:$0xf]
      %v846 = vld [vmem:[%s844 + $0x4] sm:$0xf]
      %v847 = vld [vmem:[%s844 + $0x8] sm:$0xf]
      %v848 = vld [vmem:[%s844 + $0xc] sm:$0xf]
      %v849 = vld [vmem:[%s844 + $0x10] sm:$0xf]
      %v850 = vld [vmem:[%s844 + $0x14] sm:$0xf]
      %v851 = vld [vmem:[%s844 + $0x18] sm:$0xf]
      %v852 = vld [vmem:[%s844 + $0x1c] sm:$0xf]
      %v854 = vunpack.c.l.b16 %v843
      %v855 = vpack.c.b16 %v854, %v854
      %v856 = vrot.slane %v855, 1
      %v865 = vunpack.c.l.b16 %v845
      %v866 = vunpack.c.l.b16 %v846
      %v867 = vunpack.c.l.b16 %v847
      %v868 = vunpack.c.l.b16 %v848
      %v869 = vunpack.c.l.b16 %v849
      %v870 = vunpack.c.l.b16 %v850
      %v871 = vunpack.c.l.b16 %v851
      %v872 = vunpack.c.l.b16 %v852
      %v873 = vpack.c.b16 %v866, %v865
      %v874 = vpack.c.b16 %v868, %v867
      %v875 = vpack.c.b16 %v870, %v869
      %v876 = vpack.c.b16 %v872, %v871
      %v882 = vsel %vm228, %v856, 0
      %884 = vmatprep.subr.bf16.mxu0 0
      %885 = vmatpush1.bf16.msra.mxu0 %v873
      %886 = vmatprep.subr.bf16.mxu0 0
      %887 = vmatpush1.bf16.msra.mxu0 %v874
      %888 = vmatprep.subr.bf16.mxu0 0
      %889 = vmatpush1.bf16.msra.mxu0 %v875
      %890 = vmatprep.subr.bf16.mxu0 0
      %891 = vmatpush1.bf16.msra.mxu0 %v876
      %892 = vmatprep.subr.bf16.mxu0 0
      %893 = vmatpush1.bf16.msra.mxu0 0
      %894 = vmatprep.subr.bf16.mxu0 0
      %895 = vmatpush1.bf16.msra.mxu0 0
      %896 = vmatprep.subr.bf16.mxu0 0
      %897 = vmatpush1.bf16.msra.mxu0 0
      %898 = vmatprep.subr.bf16.mxu0 0
      %899 = vmatpush1.bf16.msra.mxu0 0
      %900 = vmatprep.subr.bf16.mxu0 0
      %901 = vmatpush1.bf16.msra.mxu0 0
      %902 = vmatprep.subr.bf16.mxu0 0
      %903 = vmatpush1.bf16.msra.mxu0 0
      %904 = vmatprep.subr.bf16.mxu0 0
      %905 = vmatpush1.bf16.msra.mxu0 0
      %906 = vmatprep.subr.bf16.mxu0 0
      %907 = vmatpush1.bf16.msra.mxu0 0
      %908 = vmatprep.subr.bf16.mxu0 0
      %909 = vmatpush1.bf16.msra.mxu0 0
      %910 = vmatprep.subr.bf16.mxu0 0
      %911 = vmatpush1.bf16.msra.mxu0 0
      %912 = vmatprep.subr.bf16.mxu0 0
      %913 = vmatpush1.bf16.msra.mxu0 0
      %914 = vmatprep.subr.bf16.mxu0 0
      %915 = vmatpush1.bf16.msra.mxu0 0
      %916 = vmatprep.mubr.bf16.mxu0 0
      %917 = vmatmul.mubr.bf16.gmra.mrb[0].mxu0 %v882
      %v918 = vpop.f32.mrb[0].mxu0
      %v919 = vadd.f32 0.0, %v918
      %v920 = vpop.f32.mrb[0].mxu0
      %v921 = vpop.f32.mrb[0].mxu0
      %v922 = vpop.f32.mrb[0].mxu0
      %923 = vdwg.mxu0
      %v924 = vadd.f32 %v842, %v919
      %v925 = vld [vmem:[%s2] sm:$0x1]
      %v927 = vlaneseq
      %v928 = vshrl.u32 %v927, 7
      %v929 = vsub.s32 0, %v928
      %v930 = vrot.slane %v925, %v929
      %v932 = vadd.f32 %v924, %v930
      %v933 = vmax.f32 %v932, 0.0
      %v934 = vpack.c.bf16 %v933, %v933
      %vm935 = vcmask 518144
      %936 = vst.msk [vmem:[%s172] sm:$0x7] %vm935, %v934
      %vm937 = vcmask 519171
      %938 = vst.msk [vmem:[%s172] sm:$0x8] %vm937, 0
      %vm939 = vcmask 519168
      %940 = vst.msk [vmem:[%s172 + $0x4] sm:$0xf] %vm939, 0
      %s941 = smul.u32 2, %s14
      %p942 = scmp.lt.s32.totalorder %s941, 3
      %s943 = scalar_select %p942, %s941, 3
      %s944 = smul.addr %s943, 4
      %s945 = scalar_lea.vmem %s3, %s944
      // Predicated region
      $region33: #{atari_base_ppo_forward.6} parent=31 // pred_check
        %p946 = pneg %p100
      $region34: #{atari_base_ppo_forward.6} parent=31 // pred_check_branch
        %948 = sbr.rel (%p946) target = $region36
      $region35: #{atari_base_ppo_forward.6} parent=31 // pred_region
        %s949 = smul.u32 2, %s14
      $region36: #{atari_base_ppo_forward.6} parent=31 // pred_fallthru
        _
    $region32: #{atari_base_ppo_forward.6} parent=5 // pred_fallthru
      _
    %p950 = scmp.le.s32.totalorder 2, %s9
    // Predicated region
    $region37: #{atari_base_ppo_forward.6} parent=5 // pred_check
      %p951 = pneg %p950
    $region38: #{atari_base_ppo_forward.6} parent=5 // pred_check_branch
      %953 = sbr.rel (%p951) target = $region40
    $region39: #{atari_base_ppo_forward.6} parent=5 // pred_region
      %s954 = ssub.s32 %s9, 2
      // Predicated region
      $region41: #{atari_base_ppo_forward.6} parent=39 // pred_check
        %p955 = pneg %p106
      $region42: #{atari_base_ppo_forward.6} parent=39 // pred_check_branch
        %957 = sbr.rel (%p955) target = $region44
      $region43: #{atari_base_ppo_forward.6} parent=39 // pred_region
        %s958 = smul.u32 2, %s15
        %p959 = scmp.lt.s32.totalorder %s958, 3
        %s960 = scalar_select %p959, %s958, 3
        %s961 = smul.addr %s960, 4
        %s962 = scalar_lea.vmem %s3, %s961
      $region44: #{atari_base_ppo_forward.6} parent=39 // pred_fallthru
        _
    $region40: #{atari_base_ppo_forward.6} parent=5 // pred_fallthru
      _
  $region6: #{atari_base_ppo_forward.6} parent=0 // loop_footer
    %s13 = sadd.s32 1, %s9
  $region7: #{atari_base_ppo_forward.6} parent=0 // loop_footer_branch
    %8 = sbr.rel target = $region3
  $region8: #{atari_base_ppo_forward.6} parent=0 // loop_exit
    _

// kernel: atari_base_ppo_forward.7
$region0: #{atari_base_ppo_forward.7}
  #allocation0 [shape = 'u32[]', space=smem, size = 0x4, offset = 0x4, fixed_abs, tag = 'smem constant byte address 0x4 - core index']
  #allocation1 [shape = 'u32[144,128]{1,0:T(1,128)}', space=vmem, size = 0x12000, scoped, tag = 'internal scratch']
  %s0 = inlined_call_operand.vmem [shape: bf16[2,1024], index: 0, kind: input, shape index: {}]
  %s1 = inlined_call_operand.vmem [shape: bf16[1024,512], index: 1, kind: input, shape index: {}]
  %s2 = inlined_call_operand.vmem [shape: f32[1,512], index: 2, kind: input, shape index: {}]
  %s3 = inlined_call_operand.vmem [shape: bf16[512,128], index: 3, kind: input, shape index: {}]
  %s4 = inlined_call_operand.vmem [shape: f32[1,128], index: 4, kind: input, shape index: {}]
  %s5 = inlined_call_operand.vmem [shape: f32[2,128], index: 5, kind: output, shape index: {}]
  %s6 = sld [smem:[#allocation0]]
  $region30: #{atari_base_ppo_forward.7} parent=0
    _
  %s8 = ssub.s32 1, %s6
  %s9 = scalar_select 0, %s8, %s6
  // Predicated region
  $region2: #{atari_base_ppo_forward.7} parent=0 // pred_check
    _
  $region3: #{atari_base_ppo_forward.7} parent=0 // pred_check_branch
    %11 = sbr.rel (0) target = $region5
  $region4: #{atari_base_ppo_forward.7} parent=0 // pred_region
    _
  $region5: #{atari_base_ppo_forward.7} parent=0 // pred_fallthru
    _
  // Predicated region
  $region6: #{atari_base_ppo_forward.7} parent=0 // pred_check
    _
  $region7: #{atari_base_ppo_forward.7} parent=0 // pred_check_branch
    %13 = sbr.rel (0) target = $region9
  $region8: #{atari_base_ppo_forward.7} parent=0 // pred_region
    _
  $region9: #{atari_base_ppo_forward.7} parent=0 // pred_fallthru
    _
  // Predicated region
  $region10: #{atari_base_ppo_forward.7} parent=0 // pred_check
    _
  $region11: #{atari_base_ppo_forward.7} parent=0 // pred_check_branch
    %15 = sbr.rel (0) target = $region13
  $region12: #{atari_base_ppo_forward.7} parent=0 // pred_region
    _
  $region13: #{atari_base_ppo_forward.7} parent=0 // pred_fallthru
    _
  // Predicated region
  $region14: #{atari_base_ppo_forward.7} parent=0 // pred_check
    _
  $region15: #{atari_base_ppo_forward.7} parent=0 // pred_check_branch
    %17 = sbr.rel (0) target = $region17
  $region16: #{atari_base_ppo_forward.7} parent=0 // pred_region
    _
  $region17: #{atari_base_ppo_forward.7} parent=0 // pred_fallthru
    _
  // Predicated region
  $region18: #{atari_base_ppo_forward.7} parent=0 // pred_check
    _
  $region19: #{atari_base_ppo_forward.7} parent=0 // pred_check_branch
    %19 = sbr.rel (0) target = $region21
  $region20: #{atari_base_ppo_forward.7} parent=0 // pred_region
    _
  $region21: #{atari_base_ppo_forward.7} parent=0 // pred_fallthru
    _
  %v21 = vld [vmem:[%s0] sm:$0xff]
  %v22 = vld [vmem:[%s1] sm:$0xff]
  %v23 = vld [vmem:[%s1 + $0x8] sm:$0xff]
  %v24 = vld [vmem:[%s1 + $0x10] sm:$0xff]
  %v25 = vld [vmem:[%s1 + $0x18] sm:$0xff]
  %v26 = vld [vmem:[%s1 + $0x20] sm:$0xff]
  %v27 = vld [vmem:[%s1 + $0x28] sm:$0xff]
  %v28 = vld [vmem:[%s1 + $0x30] sm:$0xff]
  %v29 = vld [vmem:[%s1 + $0x38] sm:$0xff]
  %v30 = vld [vmem:[%s1 + $0x40] sm:$0xff]
  %v31 = vld [vmem:[%s1 + $0x48] sm:$0xff]
  %v32 = vld [vmem:[%s1 + $0x50] sm:$0xff]
  %v33 = vld [vmem:[%s1 + $0x58] sm:$0xff]
  %v34 = vld [vmem:[%s1 + $0x60] sm:$0xff]
  %v35 = vld [vmem:[%s1 + $0x68] sm:$0xff]
  %v36 = vld [vmem:[%s1 + $0x70] sm:$0xff]
  %v37 = vld [vmem:[%s1 + $0x78] sm:$0xff]
  %v38 = vld [vmem:[%s1 + $0x80] sm:$0xff]
  %v39 = vld [vmem:[%s1 + $0x88] sm:$0xff]
  %v40 = vld [vmem:[%s1 + $0x90] sm:$0xff]
  %v41 = vld [vmem:[%s1 + $0x98] sm:$0xff]
  %v42 = vld [vmem:[%s1 + $0xa0] sm:$0xff]
  %v43 = vld [vmem:[%s1 + $0xa8] sm:$0xff]
  %v44 = vld [vmem:[%s1 + $0xb0] sm:$0xff]
  %v45 = vld [vmem:[%s1 + $0xb8] sm:$0xff]
  %v46 = vld [vmem:[%s1 + $0xc0] sm:$0xff]
  %v47 = vld [vmem:[%s1 + $0xc8] sm:$0xff]
  %v48 = vld [vmem:[%s1 + $0xd0] sm:$0xff]
  %v49 = vld [vmem:[%s1 + $0xd8] sm:$0xff]
  %v50 = vld [vmem:[%s1 + $0xe0] sm:$0xff]
  %v51 = vld [vmem:[%s1 + $0xe8] sm:$0xff]
  %v52 = vld [vmem:[%s1 + $0xf0] sm:$0xff]
  %v53 = vld [vmem:[%s1 + $0xf8] sm:$0xff]
  %v54 = vld [vmem:[%s1 + $0x100] sm:$0xff]
  %v55 = vld [vmem:[%s1 + $0x108] sm:$0xff]
  %v56 = vld [vmem:[%s1 + $0x110] sm:$0xff]
  %v57 = vld [vmem:[%s1 + $0x118] sm:$0xff]
  %v58 = vld [vmem:[%s1 + $0x120] sm:$0xff]
  %v59 = vld [vmem:[%s1 + $0x128] sm:$0xff]
  %v60 = vld [vmem:[%s1 + $0x130] sm:$0xff]
  %v61 = vld [vmem:[%s1 + $0x138] sm:$0xff]
  %v62 = vld [vmem:[%s1 + $0x140] sm:$0xff]
  %v63 = vld [vmem:[%s1 + $0x148] sm:$0xff]
  %v64 = vld [vmem:[%s1 + $0x150] sm:$0xff]
  %v65 = vld [vmem:[%s1 + $0x158] sm:$0xff]
  %v66 = vld [vmem:[%s1 + $0x160] sm:$0xff]
  %v67 = vld [vmem:[%s1 + $0x168] sm:$0xff]
  %v68 = vld [vmem:[%s1 + $0x170] sm:$0xff]
  %v69 = vld [vmem:[%s1 + $0x178] sm:$0xff]
  %v70 = vld [vmem:[%s1 + $0x180] sm:$0xff]
  %v71 = vld [vmem:[%s1 + $0x188] sm:$0xff]
  %v72 = vld [vmem:[%s1 + $0x190] sm:$0xff]
  %v73 = vld [vmem:[%s1 + $0x198] sm:$0xff]
  %v74 = vld [vmem:[%s1 + $0x1a0] sm:$0xff]
  %v75 = vld [vmem:[%s1 + $0x1a8] sm:$0xff]
  %v76 = vld [vmem:[%s1 + $0x1b0] sm:$0xff]
  %v77 = vld [vmem:[%s1 + $0x1b8] sm:$0xff]
  %v78 = vld [vmem:[%s1 + $0x1c0] sm:$0xff]
  %v79 = vld [vmem:[%s1 + $0x1c8] sm:$0xff]
  %v80 = vld [vmem:[%s1 + $0x1d0] sm:$0xff]
  %v81 = vld [vmem:[%s1 + $0x1d8] sm:$0xff]
  %v82 = vld [vmem:[%s1 + $0x1e0] sm:$0xff]
  %v83 = vld [vmem:[%s1 + $0x1e8] sm:$0xff]
  %v84 = vld [vmem:[%s1 + $0x1f0] sm:$0xff]
  %v85 = vld [vmem:[%s1 + $0x1f8] sm:$0xff]
  %v86 = vld [vmem:[%s1 + $0x200] sm:$0xff]
  %v87 = vld [vmem:[%s1 + $0x208] sm:$0xff]
  %v88 = vld [vmem:[%s1 + $0x210] sm:$0xff]
  %v89 = vld [vmem:[%s1 + $0x218] sm:$0xff]
  %v90 = vld [vmem:[%s1 + $0x220] sm:$0xff]
  %v91 = vld [vmem:[%s1 + $0x228] sm:$0xff]
  %v92 = vld [vmem:[%s1 + $0x230] sm:$0xff]
  %v93 = vld [vmem:[%s1 + $0x238] sm:$0xff]
  %v94 = vld [vmem:[%s1 + $0x240] sm:$0xff]
  %v95 = vld [vmem:[%s1 + $0x248] sm:$0xff]
  %v96 = vld [vmem:[%s1 + $0x250] sm:$0xff]
  %v97 = vld [vmem:[%s1 + $0x258] sm:$0xff]
  %v98 = vld [vmem:[%s1 + $0x260] sm:$0xff]
  %v99 = vld [vmem:[%s1 + $0x268] sm:$0xff]
  %v100 = vld [vmem:[%s1 + $0x270] sm:$0xff]
  %v101 = vld [vmem:[%s1 + $0x278] sm:$0xff]
  %v102 = vld [vmem:[%s1 + $0x280] sm:$0xff]
  %v103 = vld [vmem:[%s1 + $0x288] sm:$0xff]
  %v104 = vld [vmem:[%s1 + $0x290] sm:$0xff]
  %v105 = vld [vmem:[%s1 + $0x298] sm:$0xff]
  %v106 = vld [vmem:[%s1 + $0x2a0] sm:$0xff]
  %v107 = vld [vmem:[%s1 + $0x2a8] sm:$0xff]
  %v108 = vld [vmem:[%s1 + $0x2b0] sm:$0xff]
  %v109 = vld [vmem:[%s1 + $0x2b8] sm:$0xff]
  %v110 = vld [vmem:[%s1 + $0x2c0] sm:$0xff]
  %v111 = vld [vmem:[%s1 + $0x2c8] sm:$0xff]
  %v112 = vld [vmem:[%s1 + $0x2d0] sm:$0xff]
  %v113 = vld [vmem:[%s1 + $0x2d8] sm:$0xff]
  %v114 = vld [vmem:[%s1 + $0x2e0] sm:$0xff]
  %v115 = vld [vmem:[%s1 + $0x2e8] sm:$0xff]
  %v116 = vld [vmem:[%s1 + $0x2f0] sm:$0xff]
  %v117 = vld [vmem:[%s1 + $0x2f8] sm:$0xff]
  %v118 = vld [vmem:[%s1 + $0x300] sm:$0xff]
  %v119 = vld [vmem:[%s1 + $0x308] sm:$0xff]
  %v120 = vld [vmem:[%s1 + $0x310] sm:$0xff]
  %v121 = vld [vmem:[%s1 + $0x318] sm:$0xff]
  %v122 = vld [vmem:[%s1 + $0x320] sm:$0xff]
  %v123 = vld [vmem:[%s1 + $0x328] sm:$0xff]
  %v124 = vld [vmem:[%s1 + $0x330] sm:$0xff]
  %v125 = vld [vmem:[%s1 + $0x338] sm:$0xff]
  %v126 = vld [vmem:[%s1 + $0x340] sm:$0xff]
  %v127 = vld [vmem:[%s1 + $0x348] sm:$0xff]
  %v128 = vld [vmem:[%s1 + $0x350] sm:$0xff]
  %v129 = vld [vmem:[%s1 + $0x358] sm:$0xff]
  %v130 = vld [vmem:[%s1 + $0x360] sm:$0xff]
  %v131 = vld [vmem:[%s1 + $0x368] sm:$0xff]
  %v132 = vld [vmem:[%s1 + $0x370] sm:$0xff]
  %v133 = vld [vmem:[%s1 + $0x378] sm:$0xff]
  %v134 = vld [vmem:[%s1 + $0x380] sm:$0xff]
  %v135 = vld [vmem:[%s1 + $0x388] sm:$0xff]
  %v136 = vld [vmem:[%s1 + $0x390] sm:$0xff]
  %v137 = vld [vmem:[%s1 + $0x398] sm:$0xff]
  %v138 = vld [vmem:[%s1 + $0x3a0] sm:$0xff]
  %v139 = vld [vmem:[%s1 + $0x3a8] sm:$0xff]
  %v140 = vld [vmem:[%s1 + $0x3b0] sm:$0xff]
  %v141 = vld [vmem:[%s1 + $0x3b8] sm:$0xff]
  %v142 = vld [vmem:[%s1 + $0x3c0] sm:$0xff]
  %v143 = vld [vmem:[%s1 + $0x3c8] sm:$0xff]
  %v144 = vld [vmem:[%s1 + $0x3d0] sm:$0xff]
  %v145 = vld [vmem:[%s1 + $0x3d8] sm:$0xff]
  %v146 = vld [vmem:[%s1 + $0x3e0] sm:$0xff]
  %v147 = vld [vmem:[%s1 + $0x3e8] sm:$0xff]
  %v148 = vld [vmem:[%s1 + $0x3f0] sm:$0xff]
  %v149 = vld [vmem:[%s1 + $0x3f8] sm:$0xff]
  %v150 = vld [vmem:[%s1 + $0x400] sm:$0xff]
  %v151 = vld [vmem:[%s1 + $0x408] sm:$0xff]
  %v152 = vld [vmem:[%s1 + $0x410] sm:$0xff]
  %v153 = vld [vmem:[%s1 + $0x418] sm:$0xff]
  %v154 = vld [vmem:[%s1 + $0x420] sm:$0xff]
  %v155 = vld [vmem:[%s1 + $0x428] sm:$0xff]
  %v156 = vld [vmem:[%s1 + $0x430] sm:$0xff]
  %v157 = vld [vmem:[%s1 + $0x438] sm:$0xff]
  %v158 = vld [vmem:[%s1 + $0x440] sm:$0xff]
  %v159 = vld [vmem:[%s1 + $0x448] sm:$0xff]
  %v160 = vld [vmem:[%s1 + $0x450] sm:$0xff]
  %v161 = vld [vmem:[%s1 + $0x458] sm:$0xff]
  %v162 = vld [vmem:[%s1 + $0x460] sm:$0xff]
  %v163 = vld [vmem:[%s1 + $0x468] sm:$0xff]
  %v164 = vld [vmem:[%s1 + $0x470] sm:$0xff]
  %v165 = vld [vmem:[%s1 + $0x478] sm:$0xff]
  %v166 = vld [vmem:[%s1 + $0x480] sm:$0xff]
  %v167 = vld [vmem:[%s1 + $0x488] sm:$0xff]
  %v168 = vld [vmem:[%s1 + $0x490] sm:$0xff]
  %v169 = vld [vmem:[%s1 + $0x498] sm:$0xff]
  %v170 = vld [vmem:[%s1 + $0x4a0] sm:$0xff]
  %v171 = vld [vmem:[%s1 + $0x4a8] sm:$0xff]
  %v172 = vld [vmem:[%s1 + $0x4b0] sm:$0xff]
  %v173 = vld [vmem:[%s1 + $0x4b8] sm:$0xff]
  %v174 = vld [vmem:[%s1 + $0x4c0] sm:$0xff]
  %v175 = vld [vmem:[%s1 + $0x4c8] sm:$0xff]
  %v176 = vld [vmem:[%s1 + $0x4d0] sm:$0xff]
  %v177 = vld [vmem:[%s1 + $0x4d8] sm:$0xff]
  %v178 = vld [vmem:[%s1 + $0x4e0] sm:$0xff]
  %v179 = vld [vmem:[%s1 + $0x4e8] sm:$0xff]
  %v180 = vld [vmem:[%s1 + $0x4f0] sm:$0xff]
  %v181 = vld [vmem:[%s1 + $0x4f8] sm:$0xff]
  %v182 = vld [vmem:[%s1 + $0x500] sm:$0xff]
  %v183 = vld [vmem:[%s1 + $0x508] sm:$0xff]
  %v184 = vld [vmem:[%s1 + $0x510] sm:$0xff]
  %v185 = vld [vmem:[%s1 + $0x518] sm:$0xff]
  %v186 = vld [vmem:[%s1 + $0x520] sm:$0xff]
  %v187 = vld [vmem:[%s1 + $0x528] sm:$0xff]
  %v188 = vld [vmem:[%s1 + $0x530] sm:$0xff]
  %v189 = vld [vmem:[%s1 + $0x538] sm:$0xff]
  %v190 = vld [vmem:[%s1 + $0x540] sm:$0xff]
  %v191 = vld [vmem:[%s1 + $0x548] sm:$0xff]
  %v192 = vld [vmem:[%s1 + $0x550] sm:$0xff]
  %v193 = vld [vmem:[%s1 + $0x558] sm:$0xff]
  %v194 = vld [vmem:[%s1 + $0x560] sm:$0xff]
  %v195 = vld [vmem:[%s1 + $0x568] sm:$0xff]
  %v196 = vld [vmem:[%s1 + $0x570] sm:$0xff]
  %v197 = vld [vmem:[%s1 + $0x578] sm:$0xff]
  %v198 = vld [vmem:[%s1 + $0x580] sm:$0xff]
  %v199 = vld [vmem:[%s1 + $0x588] sm:$0xff]
  %v200 = vld [vmem:[%s1 + $0x590] sm:$0xff]
  %v201 = vld [vmem:[%s1 + $0x598] sm:$0xff]
  %v202 = vld [vmem:[%s1 + $0x5a0] sm:$0xff]
  %v203 = vld [vmem:[%s1 + $0x5a8] sm:$0xff]
  %v204 = vld [vmem:[%s1 + $0x5b0] sm:$0xff]
  %v205 = vld [vmem:[%s1 + $0x5b8] sm:$0xff]
  %v206 = vld [vmem:[%s1 + $0x5c0] sm:$0xff]
  %v207 = vld [vmem:[%s1 + $0x5c8] sm:$0xff]
  %v208 = vld [vmem:[%s1 + $0x5d0] sm:$0xff]
  %v209 = vld [vmem:[%s1 + $0x5d8] sm:$0xff]
  %v210 = vld [vmem:[%s1 + $0x5e0] sm:$0xff]
  %v211 = vld [vmem:[%s1 + $0x5e8] sm:$0xff]
  %v212 = vld [vmem:[%s1 + $0x5f0] sm:$0xff]
  %v213 = vld [vmem:[%s1 + $0x5f8] sm:$0xff]
  %v214 = vld [vmem:[%s1 + $0x600] sm:$0xff]
  %v215 = vld [vmem:[%s1 + $0x608] sm:$0xff]
  %v216 = vld [vmem:[%s1 + $0x610] sm:$0xff]
  %v217 = vld [vmem:[%s1 + $0x618] sm:$0xff]
  %v218 = vld [vmem:[%s1 + $0x620] sm:$0xff]
  %v219 = vld [vmem:[%s1 + $0x628] sm:$0xff]
  %v220 = vld [vmem:[%s1 + $0x630] sm:$0xff]
  %v221 = vld [vmem:[%s1 + $0x638] sm:$0xff]
  %v222 = vld [vmem:[%s1 + $0x640] sm:$0xff]
  %v223 = vld [vmem:[%s1 + $0x648] sm:$0xff]
  %v224 = vld [vmem:[%s1 + $0x650] sm:$0xff]
  %v225 = vld [vmem:[%s1 + $0x658] sm:$0xff]
  %v226 = vld [vmem:[%s1 + $0x660] sm:$0xff]
  %v227 = vld [vmem:[%s1 + $0x668] sm:$0xff]
  %v228 = vld [vmem:[%s1 + $0x670] sm:$0xff]
  %v229 = vld [vmem:[%s1 + $0x678] sm:$0xff]
  %v230 = vld [vmem:[%s1 + $0x680] sm:$0xff]
  %v231 = vld [vmem:[%s1 + $0x688] sm:$0xff]
  %v232 = vld [vmem:[%s1 + $0x690] sm:$0xff]
  %v233 = vld [vmem:[%s1 + $0x698] sm:$0xff]
  %v234 = vld [vmem:[%s1 + $0x6a0] sm:$0xff]
  %v235 = vld [vmem:[%s1 + $0x6a8] sm:$0xff]
  %v236 = vld [vmem:[%s1 + $0x6b0] sm:$0xff]
  %v237 = vld [vmem:[%s1 + $0x6b8] sm:$0xff]
  %v238 = vld [vmem:[%s1 + $0x6c0] sm:$0xff]
  %v239 = vld [vmem:[%s1 + $0x6c8] sm:$0xff]
  %v240 = vld [vmem:[%s1 + $0x6d0] sm:$0xff]
  %v241 = vld [vmem:[%s1 + $0x6d8] sm:$0xff]
  %v242 = vld [vmem:[%s1 + $0x6e0] sm:$0xff]
  %v243 = vld [vmem:[%s1 + $0x6e8] sm:$0xff]
  %v244 = vld [vmem:[%s1 + $0x6f0] sm:$0xff]
  %v245 = vld [vmem:[%s1 + $0x6f8] sm:$0xff]
  %v246 = vld [vmem:[%s1 + $0x700] sm:$0xff]
  %v247 = vld [vmem:[%s1 + $0x708] sm:$0xff]
  %v248 = vld [vmem:[%s1 + $0x710] sm:$0xff]
  %v249 = vld [vmem:[%s1 + $0x718] sm:$0xff]
  %v250 = vld [vmem:[%s1 + $0x720] sm:$0xff]
  %v251 = vld [vmem:[%s1 + $0x728] sm:$0xff]
  %v252 = vld [vmem:[%s1 + $0x730] sm:$0xff]
  %v253 = vld [vmem:[%s1 + $0x738] sm:$0xff]
  %v254 = vld [vmem:[%s1 + $0x740] sm:$0xff]
  %v255 = vld [vmem:[%s1 + $0x748] sm:$0xff]
  %v256 = vld [vmem:[%s1 + $0x750] sm:$0xff]
  %v257 = vld [vmem:[%s1 + $0x758] sm:$0xff]
  %v258 = vld [vmem:[%s1 + $0x760] sm:$0xff]
  %v259 = vld [vmem:[%s1 + $0x768] sm:$0xff]
  %v260 = vld [vmem:[%s1 + $0x770] sm:$0xff]
  %v261 = vld [vmem:[%s1 + $0x778] sm:$0xff]
  %v262 = vld [vmem:[%s1 + $0x780] sm:$0xff]
  %v263 = vld [vmem:[%s1 + $0x788] sm:$0xff]
  %v264 = vld [vmem:[%s1 + $0x790] sm:$0xff]
  %v265 = vld [vmem:[%s1 + $0x798] sm:$0xff]
  %v266 = vld [vmem:[%s1 + $0x7a0] sm:$0xff]
  %v267 = vld [vmem:[%s1 + $0x7a8] sm:$0xff]
  %v268 = vld [vmem:[%s1 + $0x7b0] sm:$0xff]
  %v269 = vld [vmem:[%s1 + $0x7b8] sm:$0xff]
  %v270 = vld [vmem:[%s1 + $0x7c0] sm:$0xff]
  %v271 = vld [vmem:[%s1 + $0x7c8] sm:$0xff]
  %v272 = vld [vmem:[%s1 + $0x7d0] sm:$0xff]
  %v273 = vld [vmem:[%s1 + $0x7d8] sm:$0xff]
  %v274 = vld [vmem:[%s1 + $0x7e0] sm:$0xff]
  %v275 = vld [vmem:[%s1 + $0x7e8] sm:$0xff]
  %v276 = vld [vmem:[%s1 + $0x7f0] sm:$0xff]
  %v277 = vld [vmem:[%s1 + $0x7f8] sm:$0xff]
  %v278 = vld [vmem:[%s2] sm:$0xf]
  %v280 = vlaneseq
  %v281 = vshrl.u32 %v280, 7
  %v282 = vsub.s32 0, %v281
  %v283 = vrot.slane %v278, %v282
  %v284 = vlaneseq
  %v285 = vshrl.u32 %v284, 7
  %v286 = vsub.s32 1, %v285
  %v287 = vrot.slane %v278, %v286
  %v288 = vlaneseq
  %v289 = vshrl.u32 %v288, 7
  %v290 = vsub.s32 2, %v289
  %v291 = vrot.slane %v278, %v290
  %v292 = vlaneseq
  %v293 = vshrl.u32 %v292, 7
  %v294 = vsub.s32 3, %v293
  %v295 = vrot.slane %v278, %v294
  %v301 = vcombine.high %v21, %v21
  %v303 = vunpack.c.l.s4 1966171168
  %v304 = vunpack.c.0.s8 %v303
  %v305 = vlaneseq
  %v306 = vshrl.u32 %v305, 7
  %v307 = vsub.s32 %v304, %v306
  %v308 = vrot.slane %v21, %v307
  %v310 = vunpack.c.l.s4 1966171168
  %v311 = vunpack.c.0.s8 %v310
  %v312 = vlaneseq
  %v313 = vshrl.u32 %v312, 7
  %v314 = vsub.s32 %v311, %v313
  %v315 = vrot.slane %v301, %v314
  %v316 = vcombine.high %v308, %v308
  %v317 = vcombine.high %v315, %v315
  %v319 = vunpack.c.l.s4 1966171168
  %v320 = vunpack.c.0.s8 %v319
  %v321 = vlaneseq
  %v322 = vshrl.u32 %v321, 7
  %v323 = vsub.s32 %v320, %v322
  %v324 = vrot.slane %v308, %v323
  %v326 = vunpack.c.l.s4 1966171168
  %v327 = vunpack.c.0.s8 %v326
  %v328 = vlaneseq
  %v329 = vshrl.u32 %v328, 7
  %v330 = vsub.s32 %v327, %v329
  %v331 = vrot.slane %v315, %v330
  %v333 = vunpack.c.l.s4 1966171168
  %v334 = vunpack.c.0.s8 %v333
  %v335 = vlaneseq
  %v336 = vshrl.u32 %v335, 7
  %v337 = vsub.s32 %v334, %v336
  %v338 = vrot.slane %v316, %v337
  %v340 = vunpack.c.l.s4 1966171168
  %v341 = vunpack.c.0.s8 %v340
  %v342 = vlaneseq
  %v343 = vshrl.u32 %v342, 7
  %v344 = vsub.s32 %v341, %v343
  %v345 = vrot.slane %v317, %v344
  %v346 = vcombine.high %v324, %v324
  %v347 = vcombine.high %v331, %v331
  %v348 = vcombine.high %v338, %v338
  %v349 = vcombine.high %v345, %v345
  %v614 = vunpack.c.l.b16 %v22
  %v615 = vunpack.c.h.b16 %v22
  %v616 = vunpack.c.l.b16 %v23
  %v617 = vunpack.c.h.b16 %v23
  %v618 = vunpack.c.l.b16 %v24
  %v619 = vunpack.c.h.b16 %v24
  %v620 = vunpack.c.l.b16 %v25
  %v621 = vunpack.c.h.b16 %v25
  %v622 = vunpack.c.l.b16 %v26
  %v623 = vunpack.c.h.b16 %v26
  %v624 = vunpack.c.l.b16 %v27
  %v625 = vunpack.c.h.b16 %v27
  %v626 = vunpack.c.l.b16 %v28
  %v627 = vunpack.c.h.b16 %v28
  %v628 = vunpack.c.l.b16 %v29
  %v629 = vunpack.c.h.b16 %v29
  %v630 = vunpack.c.l.b16 %v30
  %v631 = vunpack.c.h.b16 %v30
  %v632 = vunpack.c.l.b16 %v31
  %v633 = vunpack.c.h.b16 %v31
  %v634 = vunpack.c.l.b16 %v32
  %v635 = vunpack.c.h.b16 %v32
  %v636 = vunpack.c.l.b16 %v33
  %v637 = vunpack.c.h.b16 %v33
  %v638 = vunpack.c.l.b16 %v34
  %v639 = vunpack.c.h.b16 %v34
  %v640 = vunpack.c.l.b16 %v35
  %v641 = vunpack.c.h.b16 %v35
  %v642 = vunpack.c.l.b16 %v36
  %v643 = vunpack.c.h.b16 %v36
  %v644 = vunpack.c.l.b16 %v37
  %v645 = vunpack.c.h.b16 %v37
  %v646 = vunpack.c.l.b16 %v38
  %v647 = vunpack.c.h.b16 %v38
  %v648 = vunpack.c.l.b16 %v39
  %v649 = vunpack.c.h.b16 %v39
  %v650 = vunpack.c.l.b16 %v40
  %v651 = vunpack.c.h.b16 %v40
  %v652 = vunpack.c.l.b16 %v41
  %v653 = vunpack.c.h.b16 %v41
  %v654 = vunpack.c.l.b16 %v42
  %v655 = vunpack.c.h.b16 %v42
  %v656 = vunpack.c.l.b16 %v43
  %v657 = vunpack.c.h.b16 %v43
  %v658 = vunpack.c.l.b16 %v44
  %v659 = vunpack.c.h.b16 %v44
  %v660 = vunpack.c.l.b16 %v45
  %v661 = vunpack.c.h.b16 %v45
  %v662 = vunpack.c.l.b16 %v46
  %v663 = vunpack.c.h.b16 %v46
  %v664 = vunpack.c.l.b16 %v47
  %v665 = vunpack.c.h.b16 %v47
  %v666 = vunpack.c.l.b16 %v48
  %v667 = vunpack.c.h.b16 %v48
  %v668 = vunpack.c.l.b16 %v49
  %v669 = vunpack.c.h.b16 %v49
  %v670 = vunpack.c.l.b16 %v50
  %v671 = vunpack.c.h.b16 %v50
  %v672 = vunpack.c.l.b16 %v51
  %v673 = vunpack.c.h.b16 %v51
  %v674 = vunpack.c.l.b16 %v52
  %v675 = vunpack.c.h.b16 %v52
  %v676 = vunpack.c.l.b16 %v53
  %v677 = vunpack.c.h.b16 %v53
  %v678 = vunpack.c.l.b16 %v54
  %v679 = vunpack.c.h.b16 %v54
  %v680 = vunpack.c.l.b16 %v55
  %v681 = vunpack.c.h.b16 %v55
  %v682 = vunpack.c.l.b16 %v56
  %v683 = vunpack.c.h.b16 %v56
  %v684 = vunpack.c.l.b16 %v57
  %v685 = vunpack.c.h.b16 %v57
  %v686 = vunpack.c.l.b16 %v58
  %v687 = vunpack.c.h.b16 %v58
  %v688 = vunpack.c.l.b16 %v59
  %v689 = vunpack.c.h.b16 %v59
  %v690 = vunpack.c.l.b16 %v60
  %v691 = vunpack.c.h.b16 %v60
  %v692 = vunpack.c.l.b16 %v61
  %v693 = vunpack.c.h.b16 %v61
  %v694 = vunpack.c.l.b16 %v62
  %v695 = vunpack.c.h.b16 %v62
  %v696 = vunpack.c.l.b16 %v63
  %v697 = vunpack.c.h.b16 %v63
  %v698 = vunpack.c.l.b16 %v64
  %v699 = vunpack.c.h.b16 %v64
  %v700 = vunpack.c.l.b16 %v65
  %v701 = vunpack.c.h.b16 %v65
  %v702 = vunpack.c.l.b16 %v66
  %v703 = vunpack.c.h.b16 %v66
  %v704 = vunpack.c.l.b16 %v67
  %v705 = vunpack.c.h.b16 %v67
  %v706 = vunpack.c.l.b16 %v68
  %v707 = vunpack.c.h.b16 %v68
  %v708 = vunpack.c.l.b16 %v69
  %v709 = vunpack.c.h.b16 %v69
  %v710 = vunpack.c.l.b16 %v70
  %v711 = vunpack.c.h.b16 %v70
  %v712 = vunpack.c.l.b16 %v71
  %v713 = vunpack.c.h.b16 %v71
  %v714 = vunpack.c.l.b16 %v72
  %v715 = vunpack.c.h.b16 %v72
  %v716 = vunpack.c.l.b16 %v73
  %v717 = vunpack.c.h.b16 %v73
  %v718 = vunpack.c.l.b16 %v74
  %v719 = vunpack.c.h.b16 %v74
  %v720 = vunpack.c.l.b16 %v75
  %v721 = vunpack.c.h.b16 %v75
  %v722 = vunpack.c.l.b16 %v76
  %v723 = vunpack.c.h.b16 %v76
  %v724 = vunpack.c.l.b16 %v77
  %v725 = vunpack.c.h.b16 %v77
  %v726 = vunpack.c.l.b16 %v78
  %v727 = vunpack.c.h.b16 %v78
  %v728 = vunpack.c.l.b16 %v79
  %v729 = vunpack.c.h.b16 %v79
  %v730 = vunpack.c.l.b16 %v80
  %v731 = vunpack.c.h.b16 %v80
  %v732 = vunpack.c.l.b16 %v81
  %v733 = vunpack.c.h.b16 %v81
  %v734 = vunpack.c.l.b16 %v82
  %v735 = vunpack.c.h.b16 %v82
  %v736 = vunpack.c.l.b16 %v83
  %v737 = vunpack.c.h.b16 %v83
  %v738 = vunpack.c.l.b16 %v84
  %v739 = vunpack.c.h.b16 %v84
  %v740 = vunpack.c.l.b16 %v85
  %v741 = vunpack.c.h.b16 %v85
  %v742 = vunpack.c.l.b16 %v86
  %v743 = vunpack.c.h.b16 %v86
  %v744 = vunpack.c.l.b16 %v87
  %v745 = vunpack.c.h.b16 %v87
  %v746 = vunpack.c.l.b16 %v88
  %v747 = vunpack.c.h.b16 %v88
  %v748 = vunpack.c.l.b16 %v89
  %v749 = vunpack.c.h.b16 %v89
  %v750 = vunpack.c.l.b16 %v90
  %v751 = vunpack.c.h.b16 %v90
  %v752 = vunpack.c.l.b16 %v91
  %v753 = vunpack.c.h.b16 %v91
  %v754 = vunpack.c.l.b16 %v92
  %v755 = vunpack.c.h.b16 %v92
  %v756 = vunpack.c.l.b16 %v93
  %v757 = vunpack.c.h.b16 %v93
  %v758 = vunpack.c.l.b16 %v94
  %v759 = vunpack.c.h.b16 %v94
  %v760 = vunpack.c.l.b16 %v95
  %v761 = vunpack.c.h.b16 %v95
  %v762 = vunpack.c.l.b16 %v96
  %v763 = vunpack.c.h.b16 %v96
  %v764 = vunpack.c.l.b16 %v97
  %v765 = vunpack.c.h.b16 %v97
  %v766 = vunpack.c.l.b16 %v98
  %v767 = vunpack.c.h.b16 %v98
  %v768 = vunpack.c.l.b16 %v99
  %v769 = vunpack.c.h.b16 %v99
  %v770 = vunpack.c.l.b16 %v100
  %v771 = vunpack.c.h.b16 %v100
  %v772 = vunpack.c.l.b16 %v101
  %v773 = vunpack.c.h.b16 %v101
  %v774 = vunpack.c.l.b16 %v102
  %v775 = vunpack.c.h.b16 %v102
  %v776 = vunpack.c.l.b16 %v103
  %v777 = vunpack.c.h.b16 %v103
  %v778 = vunpack.c.l.b16 %v104
  %v779 = vunpack.c.h.b16 %v104
  %v780 = vunpack.c.l.b16 %v105
  %v781 = vunpack.c.h.b16 %v105
  %v782 = vunpack.c.l.b16 %v106
  %v783 = vunpack.c.h.b16 %v106
  %v784 = vunpack.c.l.b16 %v107
  %v785 = vunpack.c.h.b16 %v107
  %v786 = vunpack.c.l.b16 %v108
  %v787 = vunpack.c.h.b16 %v108
  %v788 = vunpack.c.l.b16 %v109
  %v789 = vunpack.c.h.b16 %v109
  %v790 = vunpack.c.l.b16 %v110
  %v791 = vunpack.c.h.b16 %v110
  %v792 = vunpack.c.l.b16 %v111
  %v793 = vunpack.c.h.b16 %v111
  %v794 = vunpack.c.l.b16 %v112
  %v795 = vunpack.c.h.b16 %v112
  %v796 = vunpack.c.l.b16 %v113
  %v797 = vunpack.c.h.b16 %v113
  %v798 = vunpack.c.l.b16 %v114
  %v799 = vunpack.c.h.b16 %v114
  %v800 = vunpack.c.l.b16 %v115
  %v801 = vunpack.c.h.b16 %v115
  %v802 = vunpack.c.l.b16 %v116
  %v803 = vunpack.c.h.b16 %v116
  %v804 = vunpack.c.l.b16 %v117
  %v805 = vunpack.c.h.b16 %v117
  %v806 = vunpack.c.l.b16 %v118
  %v807 = vunpack.c.h.b16 %v118
  %v808 = vunpack.c.l.b16 %v119
  %v809 = vunpack.c.h.b16 %v119
  %v810 = vunpack.c.l.b16 %v120
  %v811 = vunpack.c.h.b16 %v120
  %v812 = vunpack.c.l.b16 %v121
  %v813 = vunpack.c.h.b16 %v121
  %v814 = vunpack.c.l.b16 %v122
  %v815 = vunpack.c.h.b16 %v122
  %v816 = vunpack.c.l.b16 %v123
  %v817 = vunpack.c.h.b16 %v123
  %v818 = vunpack.c.l.b16 %v124
  %v819 = vunpack.c.h.b16 %v124
  %v820 = vunpack.c.l.b16 %v125
  %v821 = vunpack.c.h.b16 %v125
  %v822 = vunpack.c.l.b16 %v126
  %v823 = vunpack.c.h.b16 %v126
  %v824 = vunpack.c.l.b16 %v127
  %v825 = vunpack.c.h.b16 %v127
  %v826 = vunpack.c.l.b16 %v128
  %v827 = vunpack.c.h.b16 %v128
  %v828 = vunpack.c.l.b16 %v129
  %v829 = vunpack.c.h.b16 %v129
  %v830 = vunpack.c.l.b16 %v130
  %v831 = vunpack.c.h.b16 %v130
  %v832 = vunpack.c.l.b16 %v131
  %v833 = vunpack.c.h.b16 %v131
  %v834 = vunpack.c.l.b16 %v132
  %v835 = vunpack.c.h.b16 %v132
  %v836 = vunpack.c.l.b16 %v133
  %v837 = vunpack.c.h.b16 %v133
  %v838 = vunpack.c.l.b16 %v134
  %v839 = vunpack.c.h.b16 %v134
  %v840 = vunpack.c.l.b16 %v135
  %v841 = vunpack.c.h.b16 %v135
  %v842 = vunpack.c.l.b16 %v136
  %v843 = vunpack.c.h.b16 %v136
  %v844 = vunpack.c.l.b16 %v137
  %v845 = vunpack.c.h.b16 %v137
  %v846 = vunpack.c.l.b16 %v138
  %v847 = vunpack.c.h.b16 %v138
  %v848 = vunpack.c.l.b16 %v139
  %v849 = vunpack.c.h.b16 %v139
  %v850 = vunpack.c.l.b16 %v140
  %v851 = vunpack.c.h.b16 %v140
  %v852 = vunpack.c.l.b16 %v141
  %v853 = vunpack.c.h.b16 %v141
  %v854 = vunpack.c.l.b16 %v142
  %v855 = vunpack.c.h.b16 %v142
  %v856 = vunpack.c.l.b16 %v143
  %v857 = vunpack.c.h.b16 %v143
  %v858 = vunpack.c.l.b16 %v144
  %v859 = vunpack.c.h.b16 %v144
  %v860 = vunpack.c.l.b16 %v145
  %v861 = vunpack.c.h.b16 %v145
  %v862 = vunpack.c.l.b16 %v146
  %v863 = vunpack.c.h.b16 %v146
  %v864 = vunpack.c.l.b16 %v147
  %v865 = vunpack.c.h.b16 %v147
  %v866 = vunpack.c.l.b16 %v148
  %v867 = vunpack.c.h.b16 %v148
  %v868 = vunpack.c.l.b16 %v149
  %v869 = vunpack.c.h.b16 %v149
  %v870 = vunpack.c.l.b16 %v150
  %v871 = vunpack.c.h.b16 %v150
  %v872 = vunpack.c.l.b16 %v151
  %v873 = vunpack.c.h.b16 %v151
  %v874 = vunpack.c.l.b16 %v152
  %v875 = vunpack.c.h.b16 %v152
  %v876 = vunpack.c.l.b16 %v153
  %v877 = vunpack.c.h.b16 %v153
  %v878 = vunpack.c.l.b16 %v154
  %v879 = vunpack.c.h.b16 %v154
  %v880 = vunpack.c.l.b16 %v155
  %v881 = vunpack.c.h.b16 %v155
  %v882 = vunpack.c.l.b16 %v156
  %v883 = vunpack.c.h.b16 %v156
  %v884 = vunpack.c.l.b16 %v157
  %v885 = vunpack.c.h.b16 %v157
  %v886 = vunpack.c.l.b16 %v158
  %v887 = vunpack.c.h.b16 %v158
  %v888 = vunpack.c.l.b16 %v159
  %v889 = vunpack.c.h.b16 %v159
  %v890 = vunpack.c.l.b16 %v160
  %v891 = vunpack.c.h.b16 %v160
  %v892 = vunpack.c.l.b16 %v161
  %v893 = vunpack.c.h.b16 %v161
  %v894 = vunpack.c.l.b16 %v162
  %v895 = vunpack.c.h.b16 %v162
  %v896 = vunpack.c.l.b16 %v163
  %v897 = vunpack.c.h.b16 %v163
  %v898 = vunpack.c.l.b16 %v164
  %v899 = vunpack.c.h.b16 %v164
  %v900 = vunpack.c.l.b16 %v165
  %v901 = vunpack.c.h.b16 %v165
  %v902 = vunpack.c.l.b16 %v166
  %v903 = vunpack.c.h.b16 %v166
  %v904 = vunpack.c.l.b16 %v167
  %v905 = vunpack.c.h.b16 %v167
  %v906 = vunpack.c.l.b16 %v168
  %v907 = vunpack.c.h.b16 %v168
  %v908 = vunpack.c.l.b16 %v169
  %v909 = vunpack.c.h.b16 %v169
  %v910 = vunpack.c.l.b16 %v170
  %v911 = vunpack.c.h.b16 %v170
  %v912 = vunpack.c.l.b16 %v171
  %v913 = vunpack.c.h.b16 %v171
  %v914 = vunpack.c.l.b16 %v172
  %v915 = vunpack.c.h.b16 %v172
  %v916 = vunpack.c.l.b16 %v173
  %v917 = vunpack.c.h.b16 %v173
  %v918 = vunpack.c.l.b16 %v174
  %v919 = vunpack.c.h.b16 %v174
  %v920 = vunpack.c.l.b16 %v175
  %v921 = vunpack.c.h.b16 %v175
  %v922 = vunpack.c.l.b16 %v176
  %v923 = vunpack.c.h.b16 %v176
  %v924 = vunpack.c.l.b16 %v177
  %v925 = vunpack.c.h.b16 %v177
  %v926 = vunpack.c.l.b16 %v178
  %v927 = vunpack.c.h.b16 %v178
  %v928 = vunpack.c.l.b16 %v179
  %v929 = vunpack.c.h.b16 %v179
  %v930 = vunpack.c.l.b16 %v180
  %v931 = vunpack.c.h.b16 %v180
  %v932 = vunpack.c.l.b16 %v181
  %v933 = vunpack.c.h.b16 %v181
  %v934 = vunpack.c.l.b16 %v182
  %v935 = vunpack.c.h.b16 %v182
  %v936 = vunpack.c.l.b16 %v183
  %v937 = vunpack.c.h.b16 %v183
  %v938 = vunpack.c.l.b16 %v184
  %v939 = vunpack.c.h.b16 %v184
  %v940 = vunpack.c.l.b16 %v185
  %v941 = vunpack.c.h.b16 %v185
  %v942 = vunpack.c.l.b16 %v186
  %v943 = vunpack.c.h.b16 %v186
  %v944 = vunpack.c.l.b16 %v187
  %v945 = vunpack.c.h.b16 %v187
  %v946 = vunpack.c.l.b16 %v188
  %v947 = vunpack.c.h.b16 %v188
  %v948 = vunpack.c.l.b16 %v189
  %v949 = vunpack.c.h.b16 %v189
  %v950 = vunpack.c.l.b16 %v190
  %v951 = vunpack.c.h.b16 %v190
  %v952 = vunpack.c.l.b16 %v191
  %v953 = vunpack.c.h.b16 %v191
  %v954 = vunpack.c.l.b16 %v192
  %v955 = vunpack.c.h.b16 %v192
  %v956 = vunpack.c.l.b16 %v193
  %v957 = vunpack.c.h.b16 %v193
  %v958 = vunpack.c.l.b16 %v194
  %v959 = vunpack.c.h.b16 %v194
  %v960 = vunpack.c.l.b16 %v195
  %v961 = vunpack.c.h.b16 %v195
  %v962 = vunpack.c.l.b16 %v196
  %v963 = vunpack.c.h.b16 %v196
  %v964 = vunpack.c.l.b16 %v197
  %v965 = vunpack.c.h.b16 %v197
  %v966 = vunpack.c.l.b16 %v198
  %v967 = vunpack.c.h.b16 %v198
  %v968 = vunpack.c.l.b16 %v199
  %v969 = vunpack.c.h.b16 %v199
  %v970 = vunpack.c.l.b16 %v200
  %v971 = vunpack.c.h.b16 %v200
  %v972 = vunpack.c.l.b16 %v201
  %v973 = vunpack.c.h.b16 %v201
  %v974 = vunpack.c.l.b16 %v202
  %v975 = vunpack.c.h.b16 %v202
  %v976 = vunpack.c.l.b16 %v203
  %v977 = vunpack.c.h.b16 %v203
  %v978 = vunpack.c.l.b16 %v204
  %v979 = vunpack.c.h.b16 %v204
  %v980 = vunpack.c.l.b16 %v205
  %v981 = vunpack.c.h.b16 %v205
  %v982 = vunpack.c.l.b16 %v206
  %v983 = vunpack.c.h.b16 %v206
  %v984 = vunpack.c.l.b16 %v207
  %v985 = vunpack.c.h.b16 %v207
  %v986 = vunpack.c.l.b16 %v208
  %v987 = vunpack.c.h.b16 %v208
  %v988 = vunpack.c.l.b16 %v209
  %v989 = vunpack.c.h.b16 %v209
  %v990 = vunpack.c.l.b16 %v210
  %v991 = vunpack.c.h.b16 %v210
  %v992 = vunpack.c.l.b16 %v211
  %v993 = vunpack.c.h.b16 %v211
  %v994 = vunpack.c.l.b16 %v212
  %v995 = vunpack.c.h.b16 %v212
  %v996 = vunpack.c.l.b16 %v213
  %v997 = vunpack.c.h.b16 %v213
  %v998 = vunpack.c.l.b16 %v214
  %v999 = vunpack.c.h.b16 %v214
  %v1000 = vunpack.c.l.b16 %v215
  %v1001 = vunpack.c.h.b16 %v215
  %v1002 = vunpack.c.l.b16 %v216
  %v1003 = vunpack.c.h.b16 %v216
  %v1004 = vunpack.c.l.b16 %v217
  %v1005 = vunpack.c.h.b16 %v217
  %v1006 = vunpack.c.l.b16 %v218
  %v1007 = vunpack.c.h.b16 %v218
  %v1008 = vunpack.c.l.b16 %v219
  %v1009 = vunpack.c.h.b16 %v219
  %v1010 = vunpack.c.l.b16 %v220
  %v1011 = vunpack.c.h.b16 %v220
  %v1012 = vunpack.c.l.b16 %v221
  %v1013 = vunpack.c.h.b16 %v221
  %v1014 = vunpack.c.l.b16 %v222
  %v1015 = vunpack.c.h.b16 %v222
  %v1016 = vunpack.c.l.b16 %v223
  %v1017 = vunpack.c.h.b16 %v223
  %v1018 = vunpack.c.l.b16 %v224
  %v1019 = vunpack.c.h.b16 %v224
  %v1020 = vunpack.c.l.b16 %v225
  %v1021 = vunpack.c.h.b16 %v225
  %v1022 = vunpack.c.l.b16 %v226
  %v1023 = vunpack.c.h.b16 %v226
  %v1024 = vunpack.c.l.b16 %v227
  %v1025 = vunpack.c.h.b16 %v227
  %v1026 = vunpack.c.l.b16 %v228
  %v1027 = vunpack.c.h.b16 %v228
  %v1028 = vunpack.c.l.b16 %v229
  %v1029 = vunpack.c.h.b16 %v229
  %v1030 = vunpack.c.l.b16 %v230
  %v1031 = vunpack.c.h.b16 %v230
  %v1032 = vunpack.c.l.b16 %v231
  %v1033 = vunpack.c.h.b16 %v231
  %v1034 = vunpack.c.l.b16 %v232
  %v1035 = vunpack.c.h.b16 %v232
  %v1036 = vunpack.c.l.b16 %v233
  %v1037 = vunpack.c.h.b16 %v233
  %v1038 = vunpack.c.l.b16 %v234
  %v1039 = vunpack.c.h.b16 %v234
  %v1040 = vunpack.c.l.b16 %v235
  %v1041 = vunpack.c.h.b16 %v235
  %v1042 = vunpack.c.l.b16 %v236
  %v1043 = vunpack.c.h.b16 %v236
  %v1044 = vunpack.c.l.b16 %v237
  %v1045 = vunpack.c.h.b16 %v237
  %v1046 = vunpack.c.l.b16 %v238
  %v1047 = vunpack.c.h.b16 %v238
  %v1048 = vunpack.c.l.b16 %v239
  %v1049 = vunpack.c.h.b16 %v239
  %v1050 = vunpack.c.l.b16 %v240
  %v1051 = vunpack.c.h.b16 %v240
  %v1052 = vunpack.c.l.b16 %v241
  %v1053 = vunpack.c.h.b16 %v241
  %v1054 = vunpack.c.l.b16 %v242
  %v1055 = vunpack.c.h.b16 %v242
  %v1056 = vunpack.c.l.b16 %v243
  %v1057 = vunpack.c.h.b16 %v243
  %v1058 = vunpack.c.l.b16 %v244
  %v1059 = vunpack.c.h.b16 %v244
  %v1060 = vunpack.c.l.b16 %v245
  %v1061 = vunpack.c.h.b16 %v245
  %v1062 = vunpack.c.l.b16 %v246
  %v1063 = vunpack.c.h.b16 %v246
  %v1064 = vunpack.c.l.b16 %v247
  %v1065 = vunpack.c.h.b16 %v247
  %v1066 = vunpack.c.l.b16 %v248
  %v1067 = vunpack.c.h.b16 %v248
  %v1068 = vunpack.c.l.b16 %v249
  %v1069 = vunpack.c.h.b16 %v249
  %v1070 = vunpack.c.l.b16 %v250
  %v1071 = vunpack.c.h.b16 %v250
  %v1072 = vunpack.c.l.b16 %v251
  %v1073 = vunpack.c.h.b16 %v251
  %v1074 = vunpack.c.l.b16 %v252
  %v1075 = vunpack.c.h.b16 %v252
  %v1076 = vunpack.c.l.b16 %v253
  %v1077 = vunpack.c.h.b16 %v253
  %v1078 = vunpack.c.l.b16 %v254
  %v1079 = vunpack.c.h.b16 %v254
  %v1080 = vunpack.c.l.b16 %v255
  %v1081 = vunpack.c.h.b16 %v255
  %v1082 = vunpack.c.l.b16 %v256
  %v1083 = vunpack.c.h.b16 %v256
  %v1084 = vunpack.c.l.b16 %v257
  %v1085 = vunpack.c.h.b16 %v257
  %v1086 = vunpack.c.l.b16 %v258
  %v1087 = vunpack.c.h.b16 %v258
  %v1088 = vunpack.c.l.b16 %v259
  %v1089 = vunpack.c.h.b16 %v259
  %v1090 = vunpack.c.l.b16 %v260
  %v1091 = vunpack.c.h.b16 %v260
  %v1092 = vunpack.c.l.b16 %v261
  %v1093 = vunpack.c.h.b16 %v261
  %v1094 = vunpack.c.l.b16 %v262
  %v1095 = vunpack.c.h.b16 %v262
  %v1096 = vunpack.c.l.b16 %v263
  %v1097 = vunpack.c.h.b16 %v263
  %v1098 = vunpack.c.l.b16 %v264
  %v1099 = vunpack.c.h.b16 %v264
  %v1100 = vunpack.c.l.b16 %v265
  %v1101 = vunpack.c.h.b16 %v265
  %v1102 = vunpack.c.l.b16 %v266
  %v1103 = vunpack.c.h.b16 %v266
  %v1104 = vunpack.c.l.b16 %v267
  %v1105 = vunpack.c.h.b16 %v267
  %v1106 = vunpack.c.l.b16 %v268
  %v1107 = vunpack.c.h.b16 %v268
  %v1108 = vunpack.c.l.b16 %v269
  %v1109 = vunpack.c.h.b16 %v269
  %v1110 = vunpack.c.l.b16 %v270
  %v1111 = vunpack.c.h.b16 %v270
  %v1112 = vunpack.c.l.b16 %v271
  %v1113 = vunpack.c.h.b16 %v271
  %v1114 = vunpack.c.l.b16 %v272
  %v1115 = vunpack.c.h.b16 %v272
  %v1116 = vunpack.c.l.b16 %v273
  %v1117 = vunpack.c.h.b16 %v273
  %v1118 = vunpack.c.l.b16 %v274
  %v1119 = vunpack.c.h.b16 %v274
  %v1120 = vunpack.c.l.b16 %v275
  %v1121 = vunpack.c.h.b16 %v275
  %v1122 = vunpack.c.l.b16 %v276
  %v1123 = vunpack.c.h.b16 %v276
  %v1124 = vunpack.c.l.b16 %v277
  %v1125 = vunpack.c.h.b16 %v277
  %v1126 = vpack.c.b16 %v618, %v614
  %v1127 = vpack.c.b16 %v619, %v615
  %v1128 = vpack.c.b16 %v620, %v616
  %v1129 = vpack.c.b16 %v621, %v617
  %v1130 = vpack.c.b16 %v626, %v622
  %v1131 = vpack.c.b16 %v627, %v623
  %v1132 = vpack.c.b16 %v628, %v624
  %v1133 = vpack.c.b16 %v629, %v625
  %v1134 = vpack.c.b16 %v634, %v630
  %v1135 = vpack.c.b16 %v635, %v631
  %v1136 = vpack.c.b16 %v636, %v632
  %v1137 = vpack.c.b16 %v637, %v633
  %v1138 = vpack.c.b16 %v642, %v638
  %v1139 = vpack.c.b16 %v643, %v639
  %v1140 = vpack.c.b16 %v644, %v640
  %v1141 = vpack.c.b16 %v645, %v641
  %v1142 = vpack.c.b16 %v650, %v646
  %v1143 = vpack.c.b16 %v651, %v647
  %v1144 = vpack.c.b16 %v652, %v648
  %v1145 = vpack.c.b16 %v653, %v649
  %v1146 = vpack.c.b16 %v658, %v654
  %v1147 = vpack.c.b16 %v659, %v655
  %v1148 = vpack.c.b16 %v660, %v656
  %v1149 = vpack.c.b16 %v661, %v657
  %v1150 = vpack.c.b16 %v666, %v662
  %v1151 = vpack.c.b16 %v667, %v663
  %v1152 = vpack.c.b16 %v668, %v664
  %v1153 = vpack.c.b16 %v669, %v665
  %v1154 = vpack.c.b16 %v674, %v670
  %v1155 = vpack.c.b16 %v675, %v671
  %v1156 = vpack.c.b16 %v676, %v672
  %v1157 = vpack.c.b16 %v677, %v673
  %v1158 = vpack.c.b16 %v682, %v678
  %v1159 = vpack.c.b16 %v683, %v679
  %v1160 = vpack.c.b16 %v684, %v680
  %v1161 = vpack.c.b16 %v685, %v681
  %v1162 = vpack.c.b16 %v690, %v686
  %v1163 = vpack.c.b16 %v691, %v687
  %v1164 = vpack.c.b16 %v692, %v688
  %v1165 = vpack.c.b16 %v693, %v689
  %v1166 = vpack.c.b16 %v698, %v694
  %v1167 = vpack.c.b16 %v699, %v695
  %v1168 = vpack.c.b16 %v700, %v696
  %v1169 = vpack.c.b16 %v701, %v697
  %v1170 = vpack.c.b16 %v706, %v702
  %v1171 = vpack.c.b16 %v707, %v703
  %v1172 = vpack.c.b16 %v708, %v704
  %v1173 = vpack.c.b16 %v709, %v705
  %v1174 = vpack.c.b16 %v714, %v710
  %v1175 = vpack.c.b16 %v715, %v711
  %v1176 = vpack.c.b16 %v716, %v712
  %v1177 = vpack.c.b16 %v717, %v713
  %v1178 = vpack.c.b16 %v722, %v718
  %v1179 = vpack.c.b16 %v723, %v719
  %v1180 = vpack.c.b16 %v724, %v720
  %v1181 = vpack.c.b16 %v725, %v721
  %v1182 = vpack.c.b16 %v730, %v726
  %v1183 = vpack.c.b16 %v731, %v727
  %v1184 = vpack.c.b16 %v732, %v728
  %v1185 = vpack.c.b16 %v733, %v729
  %v1186 = vpack.c.b16 %v738, %v734
  %v1187 = vpack.c.b16 %v739, %v735
  %v1188 = vpack.c.b16 %v740, %v736
  %v1189 = vpack.c.b16 %v741, %v737
  %v1190 = vpack.c.b16 %v746, %v742
  %v1191 = vpack.c.b16 %v747, %v743
  %v1192 = vpack.c.b16 %v748, %v744
  %v1193 = vpack.c.b16 %v749, %v745
  %v1194 = vpack.c.b16 %v754, %v750
  %v1195 = vpack.c.b16 %v755, %v751
  %v1196 = vpack.c.b16 %v756, %v752
  %v1197 = vpack.c.b16 %v757, %v753
  %v1198 = vpack.c.b16 %v762, %v758
  %v1199 = vpack.c.b16 %v763, %v759
  %v1200 = vpack.c.b16 %v764, %v760
  %v1201 = vpack.c.b16 %v765, %v761
  %v1202 = vpack.c.b16 %v770, %v766
  %v1203 = vpack.c.b16 %v771, %v767
  %v1204 = vpack.c.b16 %v772, %v768
  %v1205 = vpack.c.b16 %v773, %v769
  %v1206 = vpack.c.b16 %v778, %v774
  %v1207 = vpack.c.b16 %v779, %v775
  %v1208 = vpack.c.b16 %v780, %v776
  %v1209 = vpack.c.b16 %v781, %v777
  %v1210 = vpack.c.b16 %v786, %v782
  %v1211 = vpack.c.b16 %v787, %v783
  %v1212 = vpack.c.b16 %v788, %v784
  %v1213 = vpack.c.b16 %v789, %v785
  %v1214 = vpack.c.b16 %v794, %v790
  %v1215 = vpack.c.b16 %v795, %v791
  %v1216 = vpack.c.b16 %v796, %v792
  %v1217 = vpack.c.b16 %v797, %v793
  %v1218 = vpack.c.b16 %v802, %v798
  %v1219 = vpack.c.b16 %v803, %v799
  %v1220 = vpack.c.b16 %v804, %v800
  %v1221 = vpack.c.b16 %v805, %v801
  %v1222 = vpack.c.b16 %v810, %v806
  %v1223 = vpack.c.b16 %v811, %v807
  %v1224 = vpack.c.b16 %v812, %v808
  %v1225 = vpack.c.b16 %v813, %v809
  %v1226 = vpack.c.b16 %v818, %v814
  %v1227 = vpack.c.b16 %v819, %v815
  %v1228 = vpack.c.b16 %v820, %v816
  %v1229 = vpack.c.b16 %v821, %v817
  %v1230 = vpack.c.b16 %v826, %v822
  %v1231 = vpack.c.b16 %v827, %v823
  %v1232 = vpack.c.b16 %v828, %v824
  %v1233 = vpack.c.b16 %v829, %v825
  %v1234 = vpack.c.b16 %v834, %v830
  %v1235 = vpack.c.b16 %v835, %v831
  %v1236 = vpack.c.b16 %v836, %v832
  %v1237 = vpack.c.b16 %v837, %v833
  %v1238 = vpack.c.b16 %v842, %v838
  %v1239 = vpack.c.b16 %v843, %v839
  %v1240 = vpack.c.b16 %v844, %v840
  %v1241 = vpack.c.b16 %v845, %v841
  %v1242 = vpack.c.b16 %v850, %v846
  %v1243 = vpack.c.b16 %v851, %v847
  %v1244 = vpack.c.b16 %v852, %v848
  %v1245 = vpack.c.b16 %v853, %v849
  %v1246 = vpack.c.b16 %v858, %v854
  %v1247 = vpack.c.b16 %v859, %v855
  %v1248 = vpack.c.b16 %v860, %v856
  %v1249 = vpack.c.b16 %v861, %v857
  %v1250 = vpack.c.b16 %v866, %v862
  %v1251 = vpack.c.b16 %v867, %v863
  %v1252 = vpack.c.b16 %v868, %v864
  %v1253 = vpack.c.b16 %v869, %v865
  %v1254 = vpack.c.b16 %v874, %v870
  %v1255 = vpack.c.b16 %v875, %v871
  %v1256 = vpack.c.b16 %v876, %v872
  %v1257 = vpack.c.b16 %v877, %v873
  %v1258 = vpack.c.b16 %v882, %v878
  %v1259 = vpack.c.b16 %v883, %v879
  %v1260 = vpack.c.b16 %v884, %v880
  %v1261 = vpack.c.b16 %v885, %v881
  %v1262 = vpack.c.b16 %v890, %v886
  %v1263 = vpack.c.b16 %v891, %v887
  %v1264 = vpack.c.b16 %v892, %v888
  %v1265 = vpack.c.b16 %v893, %v889
  %v1266 = vpack.c.b16 %v898, %v894
  %v1267 = vpack.c.b16 %v899, %v895
  %v1268 = vpack.c.b16 %v900, %v896
  %v1269 = vpack.c.b16 %v901, %v897
  %v1270 = vpack.c.b16 %v906, %v902
  %v1271 = vpack.c.b16 %v907, %v903
  %v1272 = vpack.c.b16 %v908, %v904
  %v1273 = vpack.c.b16 %v909, %v905
  %v1274 = vpack.c.b16 %v914, %v910
  %v1275 = vpack.c.b16 %v915, %v911
  %v1276 = vpack.c.b16 %v916, %v912
  %v1277 = vpack.c.b16 %v917, %v913
  %v1278 = vpack.c.b16 %v922, %v918
  %v1279 = vpack.c.b16 %v923, %v919
  %v1280 = vpack.c.b16 %v924, %v920
  %v1281 = vpack.c.b16 %v925, %v921
  %v1282 = vpack.c.b16 %v930, %v926
  %v1283 = vpack.c.b16 %v931, %v927
  %v1284 = vpack.c.b16 %v932, %v928
  %v1285 = vpack.c.b16 %v933, %v929
  %v1286 = vpack.c.b16 %v938, %v934
  %v1287 = vpack.c.b16 %v939, %v935
  %v1288 = vpack.c.b16 %v940, %v936
  %v1289 = vpack.c.b16 %v941, %v937
  %v1290 = vpack.c.b16 %v946, %v942
  %v1291 = vpack.c.b16 %v947, %v943
  %v1292 = vpack.c.b16 %v948, %v944
  %v1293 = vpack.c.b16 %v949, %v945
  %v1294 = vpack.c.b16 %v954, %v950
  %v1295 = vpack.c.b16 %v955, %v951
  %v1296 = vpack.c.b16 %v956, %v952
  %v1297 = vpack.c.b16 %v957, %v953
  %v1298 = vpack.c.b16 %v962, %v958
  %v1299 = vpack.c.b16 %v963, %v959
  %v1300 = vpack.c.b16 %v964, %v960
  %v1301 = vpack.c.b16 %v965, %v961
  %v1302 = vpack.c.b16 %v970, %v966
  %v1303 = vpack.c.b16 %v971, %v967
  %v1304 = vpack.c.b16 %v972, %v968
  %v1305 = vpack.c.b16 %v973, %v969
  %v1306 = vpack.c.b16 %v978, %v974
  %v1307 = vpack.c.b16 %v979, %v975
  %v1308 = vpack.c.b16 %v980, %v976
  %v1309 = vpack.c.b16 %v981, %v977
  %v1310 = vpack.c.b16 %v986, %v982
  %v1311 = vpack.c.b16 %v987, %v983
  %v1312 = vpack.c.b16 %v988, %v984
  %v1313 = vpack.c.b16 %v989, %v985
  %v1314 = vpack.c.b16 %v994, %v990
  %v1315 = vpack.c.b16 %v995, %v991
  %v1316 = vpack.c.b16 %v996, %v992
  %v1317 = vpack.c.b16 %v997, %v993
  %v1318 = vpack.c.b16 %v1002, %v998
  %v1319 = vpack.c.b16 %v1003, %v999
  %v1320 = vpack.c.b16 %v1004, %v1000
  %v1321 = vpack.c.b16 %v1005, %v1001
  %v1322 = vpack.c.b16 %v1010, %v1006
  %v1323 = vpack.c.b16 %v1011, %v1007
  %v1324 = vpack.c.b16 %v1012, %v1008
  %v1325 = vpack.c.b16 %v1013, %v1009
  %v1326 = vpack.c.b16 %v1018, %v1014
  %v1327 = vpack.c.b16 %v1019, %v1015
  %v1328 = vpack.c.b16 %v1020, %v1016
  %v1329 = vpack.c.b16 %v1021, %v1017
  %v1330 = vpack.c.b16 %v1026, %v1022
  %v1331 = vpack.c.b16 %v1027, %v1023
  %v1332 = vpack.c.b16 %v1028, %v1024
  %v1333 = vpack.c.b16 %v1029, %v1025
  %v1334 = vpack.c.b16 %v1034, %v1030
  %v1335 = vpack.c.b16 %v1035, %v1031
  %v1336 = vpack.c.b16 %v1036, %v1032
  %v1337 = vpack.c.b16 %v1037, %v1033
  %v1338 = vpack.c.b16 %v1042, %v1038
  %v1339 = vpack.c.b16 %v1043, %v1039
  %v1340 = vpack.c.b16 %v1044, %v1040
  %v1341 = vpack.c.b16 %v1045, %v1041
  %v1342 = vpack.c.b16 %v1050, %v1046
  %v1343 = vpack.c.b16 %v1051, %v1047
  %v1344 = vpack.c.b16 %v1052, %v1048
  %v1345 = vpack.c.b16 %v1053, %v1049
  %v1346 = vpack.c.b16 %v1058, %v1054
  %v1347 = vpack.c.b16 %v1059, %v1055
  %v1348 = vpack.c.b16 %v1060, %v1056
  %v1349 = vpack.c.b16 %v1061, %v1057
  %v1350 = vpack.c.b16 %v1066, %v1062
  %v1351 = vpack.c.b16 %v1067, %v1063
  %v1352 = vpack.c.b16 %v1068, %v1064
  %v1353 = vpack.c.b16 %v1069, %v1065
  %v1354 = vpack.c.b16 %v1074, %v1070
  %v1355 = vpack.c.b16 %v1075, %v1071
  %v1356 = vpack.c.b16 %v1076, %v1072
  %v1357 = vpack.c.b16 %v1077, %v1073
  %v1358 = vpack.c.b16 %v1082, %v1078
  %v1359 = vpack.c.b16 %v1083, %v1079
  %v1360 = vpack.c.b16 %v1084, %v1080
  %v1361 = vpack.c.b16 %v1085, %v1081
  %v1362 = vpack.c.b16 %v1090, %v1086
  %v1363 = vpack.c.b16 %v1091, %v1087
  %v1364 = vpack.c.b16 %v1092, %v1088
  %v1365 = vpack.c.b16 %v1093, %v1089
  %v1366 = vpack.c.b16 %v1098, %v1094
  %v1367 = vpack.c.b16 %v1099, %v1095
  %v1368 = vpack.c.b16 %v1100, %v1096
  %v1369 = vpack.c.b16 %v1101, %v1097
  %v1370 = vpack.c.b16 %v1106, %v1102
  %v1371 = vpack.c.b16 %v1107, %v1103
  %v1372 = vpack.c.b16 %v1108, %v1104
  %v1373 = vpack.c.b16 %v1109, %v1105
  %v1374 = vpack.c.b16 %v1114, %v1110
  %v1375 = vpack.c.b16 %v1115, %v1111
  %v1376 = vpack.c.b16 %v1116, %v1112
  %v1377 = vpack.c.b16 %v1117, %v1113
  %v1378 = vpack.c.b16 %v1122, %v1118
  %v1379 = vpack.c.b16 %v1123, %v1119
  %v1380 = vpack.c.b16 %v1124, %v1120
  %v1381 = vpack.c.b16 %v1125, %v1121
  %1638 = vmatprep.subr.bf16.mxu0 %v1127
  %1639 = vmatpush1.bf16.msra.mxu0 %v1126
  %1640 = vmatprep.subr.bf16.mxu0 %v1131
  %1641 = vmatpush1.bf16.msra.mxu0 %v1130
  %1642 = vmatprep.subr.bf16.mxu0 %v1135
  %1643 = vmatpush1.bf16.msra.mxu0 %v1134
  %1644 = vmatprep.subr.bf16.mxu0 %v1139
  %1645 = vmatpush1.bf16.msra.mxu0 %v1138
  %1646 = vmatprep.subr.bf16.mxu0 %v1143
  %1647 = vmatpush1.bf16.msra.mxu0 %v1142
  %1648 = vmatprep.subr.bf16.mxu0 %v1147
  %1649 = vmatpush1.bf16.msra.mxu0 %v1146
  %1650 = vmatprep.subr.bf16.mxu0 %v1151
  %1651 = vmatpush1.bf16.msra.mxu0 %v1150
  %1652 = vmatprep.subr.bf16.mxu0 %v1155
  %1653 = vmatpush1.bf16.msra.mxu0 %v1154
  %1654 = vmatprep.subr.bf16.mxu0 %v1159
  %1655 = vmatpush1.bf16.msra.mxu0 %v1158
  %1656 = vmatprep.subr.bf16.mxu0 %v1163
  %1657 = vmatpush1.bf16.msra.mxu0 %v1162
  %1658 = vmatprep.subr.bf16.mxu0 %v1167
  %1659 = vmatpush1.bf16.msra.mxu0 %v1166
  %1660 = vmatprep.subr.bf16.mxu0 %v1171
  %1661 = vmatpush1.bf16.msra.mxu0 %v1170
  %1662 = vmatprep.subr.bf16.mxu0 %v1175
  %1663 = vmatpush1.bf16.msra.mxu0 %v1174
  %1664 = vmatprep.subr.bf16.mxu0 %v1179
  %1665 = vmatpush1.bf16.msra.mxu0 %v1178
  %1666 = vmatprep.subr.bf16.mxu0 %v1183
  %1667 = vmatpush1.bf16.msra.mxu0 %v1182
  %1668 = vmatprep.subr.bf16.mxu0 %v1187
  %1669 = vmatpush1.bf16.msra.mxu0 %v1186
  %1670 = vmatprep.mubr.bf16.mxu0 %v338
  %1671 = vmatmul.mubr.bf16.gmra.mrb[0].mxu0 %v324
  %v1672 = vpop.f32.mrb[0].mxu0
  %v1673 = vadd.f32 %v283, %v1672
  %v1674 = vpop.f32.mrb[0].mxu0
  %v1675 = vadd.f32 %v287, %v1674
  %v1676 = vpop.f32.mrb[0].mxu0
  %v1677 = vpop.f32.mrb[0].mxu0
  %1678 = vdwg.mxu0
  %1679 = vmatprep.subr.bf16.mxu0 %v1191
  %1680 = vmatpush1.bf16.msra.mxu0 %v1190
  %1681 = vmatprep.subr.bf16.mxu0 %v1195
  %1682 = vmatpush1.bf16.msra.mxu0 %v1194
  %1683 = vmatprep.subr.bf16.mxu0 %v1199
  %1684 = vmatpush1.bf16.msra.mxu0 %v1198
  %1685 = vmatprep.subr.bf16.mxu0 %v1203
  %1686 = vmatpush1.bf16.msra.mxu0 %v1202
  %1687 = vmatprep.subr.bf16.mxu0 %v1207
  %1688 = vmatpush1.bf16.msra.mxu0 %v1206
  %1689 = vmatprep.subr.bf16.mxu0 %v1211
  %1690 = vmatpush1.bf16.msra.mxu0 %v1210
  %1691 = vmatprep.subr.bf16.mxu0 %v1215
  %1692 = vmatpush1.bf16.msra.mxu0 %v1214
  %1693 = vmatprep.subr.bf16.mxu0 %v1219
  %1694 = vmatpush1.bf16.msra.mxu0 %v1218
  %1695 = vmatprep.subr.bf16.mxu0 %v1223
  %1696 = vmatpush1.bf16.msra.mxu0 %v1222
  %1697 = vmatprep.subr.bf16.mxu0 %v1227
  %1698 = vmatpush1.bf16.msra.mxu0 %v1226
  %1699 = vmatprep.subr.bf16.mxu0 %v1231
  %1700 = vmatpush1.bf16.msra.mxu0 %v1230
  %1701 = vmatprep.subr.bf16.mxu0 %v1235
  %1702 = vmatpush1.bf16.msra.mxu0 %v1234
  %1703 = vmatprep.subr.bf16.mxu0 %v1239
  %1704 = vmatpush1.bf16.msra.mxu0 %v1238
  %1705 = vmatprep.subr.bf16.mxu0 %v1243
  %1706 = vmatpush1.bf16.msra.mxu0 %v1242
  %1707 = vmatprep.subr.bf16.mxu0 %v1247
  %1708 = vmatpush1.bf16.msra.mxu0 %v1246
  %1709 = vmatprep.subr.bf16.mxu0 %v1251
  %1710 = vmatpush1.bf16.msra.mxu0 %v1250
  %1711 = vmatprep.mubr.bf16.mxu0 %v348
  %1712 = vmatmul.mubr.bf16.gmra.mrb[0].mxu0 %v346
  %v1713 = vpop.f32.mrb[0].mxu0
  %v1714 = vadd.f32 %v1673, %v1713
  %v1715 = vpop.f32.mrb[0].mxu0
  %v1716 = vadd.f32 %v1675, %v1715
  %v1717 = vpop.f32.mrb[0].mxu0
  %v1718 = vpop.f32.mrb[0].mxu0
  %1719 = vdwg.mxu0
  %1720 = vmatprep.subr.bf16.mxu0 %v1255
  %1721 = vmatpush1.bf16.msra.mxu0 %v1254
  %1722 = vmatprep.subr.bf16.mxu0 %v1259
  %1723 = vmatpush1.bf16.msra.mxu0 %v1258
  %1724 = vmatprep.subr.bf16.mxu0 %v1263
  %1725 = vmatpush1.bf16.msra.mxu0 %v1262
  %1726 = vmatprep.subr.bf16.mxu0 %v1267
  %1727 = vmatpush1.bf16.msra.mxu0 %v1266
  %1728 = vmatprep.subr.bf16.mxu0 %v1271
  %1729 = vmatpush1.bf16.msra.mxu0 %v1270
  %1730 = vmatprep.subr.bf16.mxu0 %v1275
  %1731 = vmatpush1.bf16.msra.mxu0 %v1274
  %1732 = vmatprep.subr.bf16.mxu0 %v1279
  %1733 = vmatpush1.bf16.msra.mxu0 %v1278
  %1734 = vmatprep.subr.bf16.mxu0 %v1283
  %1735 = vmatpush1.bf16.msra.mxu0 %v1282
  %1736 = vmatprep.subr.bf16.mxu0 %v1287
  %1737 = vmatpush1.bf16.msra.mxu0 %v1286
  %1738 = vmatprep.subr.bf16.mxu0 %v1291
  %1739 = vmatpush1.bf16.msra.mxu0 %v1290
  %1740 = vmatprep.subr.bf16.mxu0 %v1295
  %1741 = vmatpush1.bf16.msra.mxu0 %v1294
  %1742 = vmatprep.subr.bf16.mxu0 %v1299
  %1743 = vmatpush1.bf16.msra.mxu0 %v1298
  %1744 = vmatprep.subr.bf16.mxu0 %v1303
  %1745 = vmatpush1.bf16.msra.mxu0 %v1302
  %1746 = vmatprep.subr.bf16.mxu0 %v1307
  %1747 = vmatpush1.bf16.msra.mxu0 %v1306
  %1748 = vmatprep.subr.bf16.mxu0 %v1311
  %1749 = vmatpush1.bf16.msra.mxu0 %v1310
  %1750 = vmatprep.subr.bf16.mxu0 %v1315
  %1751 = vmatpush1.bf16.msra.mxu0 %v1314
  %1752 = vmatprep.mubr.bf16.mxu0 %v345
  %1753 = vmatmul.mubr.bf16.gmra.mrb[0].mxu0 %v331
  %v1754 = vpop.f32.mrb[0].mxu0
  %v1755 = vadd.f32 %v1714, %v1754
  %v1756 = vpop.f32.mrb[0].mxu0
  %v1757 = vadd.f32 %v1716, %v1756
  %v1758 = vpop.f32.mrb[0].mxu0
  %v1759 = vpop.f32.mrb[0].mxu0
  %1760 = vdwg.mxu0
  %1761 = vmatprep.subr.bf16.mxu0 %v1319
  %1762 = vmatpush1.bf16.msra.mxu0 %v1318
  %1763 = vmatprep.subr.bf16.mxu0 %v1323
  %1764 = vmatpush1.bf16.msra.mxu0 %v1322
  %1765 = vmatprep.subr.bf16.mxu0 %v1327
  %1766 = vmatpush1.bf16.msra.mxu0 %v1326
  %1767 = vmatprep.subr.bf16.mxu0 %v1331
  %1768 = vmatpush1.bf16.msra.mxu0 %v1330
  %1769 = vmatprep.subr.bf16.mxu0 %v1335
  %1770 = vmatpush1.bf16.msra.mxu0 %v1334
  %1771 = vmatprep.subr.bf16.mxu0 %v1339
  %1772 = vmatpush1.bf16.msra.mxu0 %v1338
  %1773 = vmatprep.subr.bf16.mxu0 %v1343
  %1774 = vmatpush1.bf16.msra.mxu0 %v1342
  %1775 = vmatprep.subr.bf16.mxu0 %v1347
  %1776 = vmatpush1.bf16.msra.mxu0 %v1346
  %1777 = vmatprep.subr.bf16.mxu0 %v1351
  %1778 = vmatpush1.bf16.msra.mxu0 %v1350
  %1779 = vmatprep.subr.bf16.mxu0 %v1355
  %1780 = vmatpush1.bf16.msra.mxu0 %v1354
  %1781 = vmatprep.subr.bf16.mxu0 %v1359
  %1782 = vmatpush1.bf16.msra.mxu0 %v1358
  %1783 = vmatprep.subr.bf16.mxu0 %v1363
  %1784 = vmatpush1.bf16.msra.mxu0 %v1362
  %1785 = vmatprep.subr.bf16.mxu0 %v1367
  %1786 = vmatpush1.bf16.msra.mxu0 %v1366
  %1787 = vmatprep.subr.bf16.mxu0 %v1371
  %1788 = vmatpush1.bf16.msra.mxu0 %v1370
  %1789 = vmatprep.subr.bf16.mxu0 %v1375
  %1790 = vmatpush1.bf16.msra.mxu0 %v1374
  %1791 = vmatprep.subr.bf16.mxu0 %v1379
  %1792 = vmatpush1.bf16.msra.mxu0 %v1378
  %1793 = vmatprep.mubr.bf16.mxu0 %v349
  %1794 = vmatmul.mubr.bf16.gmra.mrb[0].mxu0 %v347
  %v1795 = vpop.f32.mrb[0].mxu0
  %v1796 = vadd.f32 %v1755, %v1795
  %v1797 = vpop.f32.mrb[0].mxu0
  %v1798 = vadd.f32 %v1757, %v1797
  %v1799 = vpop.f32.mrb[0].mxu0
  %v1800 = vpop.f32.mrb[0].mxu0
  %1801 = vdwg.mxu0
  %1802 = vmatprep.subr.bf16.mxu0 %v1129
  %1803 = vmatpush1.bf16.msra.mxu0 %v1128
  %1804 = vmatprep.subr.bf16.mxu0 %v1133
  %1805 = vmatpush1.bf16.msra.mxu0 %v1132
  %1806 = vmatprep.subr.bf16.mxu0 %v1137
  %1807 = vmatpush1.bf16.msra.mxu0 %v1136
  %1808 = vmatprep.subr.bf16.mxu0 %v1141
  %1809 = vmatpush1.bf16.msra.mxu0 %v1140
  %1810 = vmatprep.subr.bf16.mxu0 %v1145
  %1811 = vmatpush1.bf16.msra.mxu0 %v1144
  %1812 = vmatprep.subr.bf16.mxu0 %v1149
  %1813 = vmatpush1.bf16.msra.mxu0 %v1148
  %1814 = vmatprep.subr.bf16.mxu0 %v1153
  %1815 = vmatpush1.bf16.msra.mxu0 %v1152
  %1816 = vmatprep.subr.bf16.mxu0 %v1157
  %1817 = vmatpush1.bf16.msra.mxu0 %v1156
  %1818 = vmatprep.subr.bf16.mxu0 %v1161
  %1819 = vmatpush1.bf16.msra.mxu0 %v1160
  %1820 = vmatprep.subr.bf16.mxu0 %v1165
  %1821 = vmatpush1.bf16.msra.mxu0 %v1164
  %1822 = vmatprep.subr.bf16.mxu0 %v1169
  %1823 = vmatpush1.bf16.msra.mxu0 %v1168
  %1824 = vmatprep.subr.bf16.mxu0 %v1173
  %1825 = vmatpush1.bf16.msra.mxu0 %v1172
  %1826 = vmatprep.subr.bf16.mxu0 %v1177
  %1827 = vmatpush1.bf16.msra.mxu0 %v1176
  %1828 = vmatprep.subr.bf16.mxu0 %v1181
  %1829 = vmatpush1.bf16.msra.mxu0 %v1180
  %1830 = vmatprep.subr.bf16.mxu0 %v1185
  %1831 = vmatpush1.bf16.msra.mxu0 %v1184
  %1832 = vmatprep.subr.bf16.mxu0 %v1189
  %1833 = vmatpush1.bf16.msra.mxu0 %v1188
  %1834 = vmatprep.mubr.bf16.mxu0 %v338
  %1835 = vmatmul.mubr.bf16.gmra.mrb[0].mxu0 %v324
  %v1836 = vpop.f32.mrb[0].mxu0
  %v1837 = vadd.f32 %v291, %v1836
  %v1838 = vpop.f32.mrb[0].mxu0
  %v1839 = vadd.f32 %v295, %v1838
  %v1840 = vpop.f32.mrb[0].mxu0
  %v1841 = vpop.f32.mrb[0].mxu0
  %1842 = vdwg.mxu0
  %1843 = vmatprep.subr.bf16.mxu0 %v1193
  %1844 = vmatpush1.bf16.msra.mxu0 %v1192
  %1845 = vmatprep.subr.bf16.mxu0 %v1197
  %1846 = vmatpush1.bf16.msra.mxu0 %v1196
  %1847 = vmatprep.subr.bf16.mxu0 %v1201
  %1848 = vmatpush1.bf16.msra.mxu0 %v1200
  %1849 = vmatprep.subr.bf16.mxu0 %v1205
  %1850 = vmatpush1.bf16.msra.mxu0 %v1204
  %1851 = vmatprep.subr.bf16.mxu0 %v1209
  %1852 = vmatpush1.bf16.msra.mxu0 %v1208
  %1853 = vmatprep.subr.bf16.mxu0 %v1213
  %1854 = vmatpush1.bf16.msra.mxu0 %v1212
  %1855 = vmatprep.subr.bf16.mxu0 %v1217
  %1856 = vmatpush1.bf16.msra.mxu0 %v1216
  %1857 = vmatprep.subr.bf16.mxu0 %v1221
  %1858 = vmatpush1.bf16.msra.mxu0 %v1220
  %1859 = vmatprep.subr.bf16.mxu0 %v1225
  %1860 = vmatpush1.bf16.msra.mxu0 %v1224
  %1861 = vmatprep.subr.bf16.mxu0 %v1229
  %1862 = vmatpush1.bf16.msra.mxu0 %v1228
  %1863 = vmatprep.subr.bf16.mxu0 %v1233
  %1864 = vmatpush1.bf16.msra.mxu0 %v1232
  %1865 = vmatprep.subr.bf16.mxu0 %v1237
  %1866 = vmatpush1.bf16.msra.mxu0 %v1236
  %1867 = vmatprep.subr.bf16.mxu0 %v1241
  %1868 = vmatpush1.bf16.msra.mxu0 %v1240
  %1869 = vmatprep.subr.bf16.mxu0 %v1245
  %1870 = vmatpush1.bf16.msra.mxu0 %v1244
  %1871 = vmatprep.subr.bf16.mxu0 %v1249
  %1872 = vmatpush1.bf16.msra.mxu0 %v1248
  %1873 = vmatprep.subr.bf16.mxu0 %v1253
  %1874 = vmatpush1.bf16.msra.mxu0 %v1252
  %1875 = vmatprep.mubr.bf16.mxu0 %v348
  %1876 = vmatmul.mubr.bf16.gmra.mrb[0].mxu0 %v346
  %v1877 = vpop.f32.mrb[0].mxu0
  %v1878 = vadd.f32 %v1837, %v1877
  %v1879 = vpop.f32.mrb[0].mxu0
  %v1880 = vadd.f32 %v1839, %v1879
  %v1881 = vpop.f32.mrb[0].mxu0
  %v1882 = vpop.f32.mrb[0].mxu0
  %1883 = vdwg.mxu0
  %1884 = vmatprep.subr.bf16.mxu0 %v1257
  %1885 = vmatpush1.bf16.msra.mxu0 %v1256
  %1886 = vmatprep.subr.bf16.mxu0 %v1261
  %1887 = vmatpush1.bf16.msra.mxu0 %v1260
  %1888 = vmatprep.subr.bf16.mxu0 %v1265
  %1889 = vmatpush1.bf16.msra.mxu0 %v1264
  %1890 = vmatprep.subr.bf16.mxu0 %v1269
  %1891 = vmatpush1.bf16.msra.mxu0 %v1268
  %1892 = vmatprep.subr.bf16.mxu0 %v1273
  %1893 = vmatpush1.bf16.msra.mxu0 %v1272
  %1894 = vmatprep.subr.bf16.mxu0 %v1277
  %1895 = vmatpush1.bf16.msra.mxu0 %v1276
  %1896 = vmatprep.subr.bf16.mxu0 %v1281
  %1897 = vmatpush1.bf16.msra.mxu0 %v1280
  %1898 = vmatprep.subr.bf16.mxu0 %v1285
  %1899 = vmatpush1.bf16.msra.mxu0 %v1284
  %1900 = vmatprep.subr.bf16.mxu0 %v1289
  %1901 = vmatpush1.bf16.msra.mxu0 %v1288
  %1902 = vmatprep.subr.bf16.mxu0 %v1293
  %1903 = vmatpush1.bf16.msra.mxu0 %v1292
  %1904 = vmatprep.subr.bf16.mxu0 %v1297
  %1905 = vmatpush1.bf16.msra.mxu0 %v1296
  %1906 = vmatprep.subr.bf16.mxu0 %v1301
  %1907 = vmatpush1.bf16.msra.mxu0 %v1300
  %1908 = vmatprep.subr.bf16.mxu0 %v1305
  %1909 = vmatpush1.bf16.msra.mxu0 %v1304
  %1910 = vmatprep.subr.bf16.mxu0 %v1309
  %1911 = vmatpush1.bf16.msra.mxu0 %v1308
  %1912 = vmatprep.subr.bf16.mxu0 %v1313
  %1913 = vmatpush1.bf16.msra.mxu0 %v1312
  %1914 = vmatprep.subr.bf16.mxu0 %v1317
  %1915 = vmatpush1.bf16.msra.mxu0 %v1316
  %1916 = vmatprep.mubr.bf16.mxu0 %v345
  %1917 = vmatmul.mubr.bf16.gmra.mrb[0].mxu0 %v331
  %v1918 = vpop.f32.mrb[0].mxu0
  %v1919 = vadd.f32 %v1878, %v1918
  %v1920 = vpop.f32.mrb[0].mxu0
  %v1921 = vadd.f32 %v1880, %v1920
  %v1922 = vpop.f32.mrb[0].mxu0
  %v1923 = vpop.f32.mrb[0].mxu0
  %1924 = vdwg.mxu0
  %1925 = vmatprep.subr.bf16.mxu0 %v1321
  %1926 = vmatpush1.bf16.msra.mxu0 %v1320
  %1927 = vmatprep.subr.bf16.mxu0 %v1325
  %1928 = vmatpush1.bf16.msra.mxu0 %v1324
  %1929 = vmatprep.subr.bf16.mxu0 %v1329
  %1930 = vmatpush1.bf16.msra.mxu0 %v1328
  %1931 = vmatprep.subr.bf16.mxu0 %v1333
  %1932 = vmatpush1.bf16.msra.mxu0 %v1332
  %1933 = vmatprep.subr.bf16.mxu0 %v1337
  %1934 = vmatpush1.bf16.msra.mxu0 %v1336
  %1935 = vmatprep.subr.bf16.mxu0 %v1341
  %1936 = vmatpush1.bf16.msra.mxu0 %v1340
  %1937 = vmatprep.subr.bf16.mxu0 %v1345
  %1938 = vmatpush1.bf16.msra.mxu0 %v1344
  %1939 = vmatprep.subr.bf16.mxu0 %v1349
  %1940 = vmatpush1.bf16.msra.mxu0 %v1348
  %1941 = vmatprep.subr.bf16.mxu0 %v1353
  %1942 = vmatpush1.bf16.msra.mxu0 %v1352
  %1943 = vmatprep.subr.bf16.mxu0 %v1357
  %1944 = vmatpush1.bf16.msra.mxu0 %v1356
  %1945 = vmatprep.subr.bf16.mxu0 %v1361
  %1946 = vmatpush1.bf16.msra.mxu0 %v1360
  %1947 = vmatprep.subr.bf16.mxu0 %v1365
  %1948 = vmatpush1.bf16.msra.mxu0 %v1364
  %1949 = vmatprep.subr.bf16.mxu0 %v1369
  %1950 = vmatpush1.bf16.msra.mxu0 %v1368
  %1951 = vmatprep.subr.bf16.mxu0 %v1373
  %1952 = vmatpush1.bf16.msra.mxu0 %v1372
  %1953 = vmatprep.subr.bf16.mxu0 %v1377
  %1954 = vmatpush1.bf16.msra.mxu0 %v1376
  %1955 = vmatprep.subr.bf16.mxu0 %v1381
  %1956 = vmatpush1.bf16.msra.mxu0 %v1380
  %1957 = vmatprep.mubr.bf16.mxu0 %v349
  %1958 = vmatmul.mubr.bf16.gmra.mrb[0].mxu0 %v347
  %v1959 = vpop.f32.mrb[0].mxu0
  %v1960 = vadd.f32 %v1919, %v1959
  %v1961 = vpop.f32.mrb[0].mxu0
  %v1962 = vadd.f32 %v1921, %v1961
  %v1963 = vpop.f32.mrb[0].mxu0
  %v1964 = vpop.f32.mrb[0].mxu0
  %1965 = vdwg.mxu0
  %v1966 = vmax.f32 %v1796, 0.0
  %v1967 = vmax.f32 %v1798, 0.0
  %v1968 = vmax.f32 %v1960, 0.0
  %v1969 = vmax.f32 %v1962, 0.0
  %v1970 = vpack.c.bf16 %v1966, %v1966
  %v1971 = vpack.c.bf16 %v1967, %v1967
  %v1972 = vpack.c.bf16 %v1968, %v1968
  %v1973 = vpack.c.bf16 %v1969, %v1969
  %v1974 = vld [vmem:[%s3] sm:$0xf]
  %v1975 = vld [vmem:[%s3 + $0x4] sm:$0xf]
  %v1976 = vld [vmem:[%s3 + $0x8] sm:$0xf]
  %v1977 = vld [vmem:[%s3 + $0xc] sm:$0xf]
  %v1978 = vld [vmem:[%s3 + $0x10] sm:$0xf]
  %v1979 = vld [vmem:[%s3 + $0x14] sm:$0xf]
  %v1980 = vld [vmem:[%s3 + $0x18] sm:$0xf]
  %v1981 = vld [vmem:[%s3 + $0x1c] sm:$0xf]
  %v1982 = vld [vmem:[%s3 + $0x20] sm:$0xf]
  %v1983 = vld [vmem:[%s3 + $0x24] sm:$0xf]
  %v1984 = vld [vmem:[%s3 + $0x28] sm:$0xf]
  %v1985 = vld [vmem:[%s3 + $0x2c] sm:$0xf]
  %v1986 = vld [vmem:[%s3 + $0x30] sm:$0xf]
  %v1987 = vld [vmem:[%s3 + $0x34] sm:$0xf]
  %v1988 = vld [vmem:[%s3 + $0x38] sm:$0xf]
  %v1989 = vld [vmem:[%s3 + $0x3c] sm:$0xf]
  %v1990 = vld [vmem:[%s3 + $0x40] sm:$0xf]
  %v1991 = vld [vmem:[%s3 + $0x44] sm:$0xf]
  %v1992 = vld [vmem:[%s3 + $0x48] sm:$0xf]
  %v1993 = vld [vmem:[%s3 + $0x4c] sm:$0xf]
  %v1994 = vld [vmem:[%s3 + $0x50] sm:$0xf]
  %v1995 = vld [vmem:[%s3 + $0x54] sm:$0xf]
  %v1996 = vld [vmem:[%s3 + $0x58] sm:$0xf]
  %v1997 = vld [vmem:[%s3 + $0x5c] sm:$0xf]
  %v1998 = vld [vmem:[%s3 + $0x60] sm:$0xf]
  %v1999 = vld [vmem:[%s3 + $0x64] sm:$0xf]
  %v2000 = vld [vmem:[%s3 + $0x68] sm:$0xf]
  %v2001 = vld [vmem:[%s3 + $0x6c] sm:$0xf]
  %v2002 = vld [vmem:[%s3 + $0x70] sm:$0xf]
  %v2003 = vld [vmem:[%s3 + $0x74] sm:$0xf]
  %v2004 = vld [vmem:[%s3 + $0x78] sm:$0xf]
  %v2005 = vld [vmem:[%s3 + $0x7c] sm:$0xf]
  %v2006 = vld [vmem:[%s3 + $0x80] sm:$0xf]
  %v2007 = vld [vmem:[%s3 + $0x84] sm:$0xf]
  %v2008 = vld [vmem:[%s3 + $0x88] sm:$0xf]
  %v2009 = vld [vmem:[%s3 + $0x8c] sm:$0xf]
  %v2010 = vld [vmem:[%s3 + $0x90] sm:$0xf]
  %v2011 = vld [vmem:[%s3 + $0x94] sm:$0xf]
  %v2012 = vld [vmem:[%s3 + $0x98] sm:$0xf]
  %v2013 = vld [vmem:[%s3 + $0x9c] sm:$0xf]
  %v2014 = vld [vmem:[%s3 + $0xa0] sm:$0xf]
  %v2015 = vld [vmem:[%s3 + $0xa4] sm:$0xf]
  %v2016 = vld [vmem:[%s3 + $0xa8] sm:$0xf]
  %v2017 = vld [vmem:[%s3 + $0xac] sm:$0xf]
  %v2018 = vld [vmem:[%s3 + $0xb0] sm:$0xf]
  %v2019 = vld [vmem:[%s3 + $0xb4] sm:$0xf]
  %v2020 = vld [vmem:[%s3 + $0xb8] sm:$0xf]
  %v2021 = vld [vmem:[%s3 + $0xbc] sm:$0xf]
  %v2022 = vld [vmem:[%s3 + $0xc0] sm:$0xf]
  %v2023 = vld [vmem:[%s3 + $0xc4] sm:$0xf]
  %v2024 = vld [vmem:[%s3 + $0xc8] sm:$0xf]
  %v2025 = vld [vmem:[%s3 + $0xcc] sm:$0xf]
  %v2026 = vld [vmem:[%s3 + $0xd0] sm:$0xf]
  %v2027 = vld [vmem:[%s3 + $0xd4] sm:$0xf]
  %v2028 = vld [vmem:[%s3 + $0xd8] sm:$0xf]
  %v2029 = vld [vmem:[%s3 + $0xdc] sm:$0xf]
  %v2030 = vld [vmem:[%s3 + $0xe0] sm:$0xf]
  %v2031 = vld [vmem:[%s3 + $0xe4] sm:$0xf]
  %v2032 = vld [vmem:[%s3 + $0xe8] sm:$0xf]
  %v2033 = vld [vmem:[%s3 + $0xec] sm:$0xf]
  %v2034 = vld [vmem:[%s3 + $0xf0] sm:$0xf]
  %v2035 = vld [vmem:[%s3 + $0xf4] sm:$0xf]
  %v2036 = vld [vmem:[%s3 + $0xf8] sm:$0xf]
  %v2037 = vld [vmem:[%s3 + $0xfc] sm:$0xf]
  %v2038 = vld [vmem:[%s4] sm:$0x1]
  %v2040 = vlaneseq
  %v2041 = vshrl.u32 %v2040, 7
  %v2042 = vsub.s32 0, %v2041
  %v2043 = vrot.slane %v2038, %v2042
  %v2109 = vunpack.c.l.b16 %v1974
  %v2110 = vunpack.c.l.b16 %v1975
  %v2111 = vunpack.c.l.b16 %v1976
  %v2112 = vunpack.c.l.b16 %v1977
  %v2113 = vunpack.c.l.b16 %v1978
  %v2114 = vunpack.c.l.b16 %v1979
  %v2115 = vunpack.c.l.b16 %v1980
  %v2116 = vunpack.c.l.b16 %v1981
  %v2117 = vunpack.c.l.b16 %v1982
  %v2118 = vunpack.c.l.b16 %v1983
  %v2119 = vunpack.c.l.b16 %v1984
  %v2120 = vunpack.c.l.b16 %v1985
  %v2121 = vunpack.c.l.b16 %v1986
  %v2122 = vunpack.c.l.b16 %v1987
  %v2123 = vunpack.c.l.b16 %v1988
  %v2124 = vunpack.c.l.b16 %v1989
  %v2125 = vunpack.c.l.b16 %v1990
  %v2126 = vunpack.c.l.b16 %v1991
  %v2127 = vunpack.c.l.b16 %v1992
  %v2128 = vunpack.c.l.b16 %v1993
  %v2129 = vunpack.c.l.b16 %v1994
  %v2130 = vunpack.c.l.b16 %v1995
  %v2131 = vunpack.c.l.b16 %v1996
  %v2132 = vunpack.c.l.b16 %v1997
  %v2133 = vunpack.c.l.b16 %v1998
  %v2134 = vunpack.c.l.b16 %v1999
  %v2135 = vunpack.c.l.b16 %v2000
  %v2136 = vunpack.c.l.b16 %v2001
  %v2137 = vunpack.c.l.b16 %v2002
  %v2138 = vunpack.c.l.b16 %v2003
  %v2139 = vunpack.c.l.b16 %v2004
  %v2140 = vunpack.c.l.b16 %v2005
  %v2141 = vunpack.c.l.b16 %v2006
  %v2142 = vunpack.c.l.b16 %v2007
  %v2143 = vunpack.c.l.b16 %v2008
  %v2144 = vunpack.c.l.b16 %v2009
  %v2145 = vunpack.c.l.b16 %v2010
  %v2146 = vunpack.c.l.b16 %v2011
  %v2147 = vunpack.c.l.b16 %v2012
  %v2148 = vunpack.c.l.b16 %v2013
  %v2149 = vunpack.c.l.b16 %v2014
  %v2150 = vunpack.c.l.b16 %v2015
  %v2151 = vunpack.c.l.b16 %v2016
  %v2152 = vunpack.c.l.b16 %v2017
  %v2153 = vunpack.c.l.b16 %v2018
  %v2154 = vunpack.c.l.b16 %v2019
  %v2155 = vunpack.c.l.b16 %v2020
  %v2156 = vunpack.c.l.b16 %v2021
  %v2157 = vunpack.c.l.b16 %v2022
  %v2158 = vunpack.c.l.b16 %v2023
  %v2159 = vunpack.c.l.b16 %v2024
  %v2160 = vunpack.c.l.b16 %v2025
  %v2161 = vunpack.c.l.b16 %v2026
  %v2162 = vunpack.c.l.b16 %v2027
  %v2163 = vunpack.c.l.b16 %v2028
  %v2164 = vunpack.c.l.b16 %v2029
  %v2165 = vunpack.c.l.b16 %v2030
  %v2166 = vunpack.c.l.b16 %v2031
  %v2167 = vunpack.c.l.b16 %v2032
  %v2168 = vunpack.c.l.b16 %v2033
  %v2169 = vunpack.c.l.b16 %v2034
  %v2170 = vunpack.c.l.b16 %v2035
  %v2171 = vunpack.c.l.b16 %v2036
  %v2172 = vunpack.c.l.b16 %v2037
  %v2173 = vpack.c.b16 %v2110, %v2109
  %v2174 = vpack.c.b16 %v2112, %v2111
  %v2175 = vpack.c.b16 %v2114, %v2113
  %v2176 = vpack.c.b16 %v2116, %v2115
  %v2177 = vpack.c.b16 %v2118, %v2117
  %v2178 = vpack.c.b16 %v2120, %v2119
  %v2179 = vpack.c.b16 %v2122, %v2121
  %v2180 = vpack.c.b16 %v2124, %v2123
  %v2181 = vpack.c.b16 %v2126, %v2125
  %v2182 = vpack.c.b16 %v2128, %v2127
  %v2183 = vpack.c.b16 %v2130, %v2129
  %v2184 = vpack.c.b16 %v2132, %v2131
  %v2185 = vpack.c.b16 %v2134, %v2133
  %v2186 = vpack.c.b16 %v2136, %v2135
  %v2187 = vpack.c.b16 %v2138, %v2137
  %v2188 = vpack.c.b16 %v2140, %v2139
  %v2189 = vpack.c.b16 %v2142, %v2141
  %v2190 = vpack.c.b16 %v2144, %v2143
  %v2191 = vpack.c.b16 %v2146, %v2145
  %v2192 = vpack.c.b16 %v2148, %v2147
  %v2193 = vpack.c.b16 %v2150, %v2149
  %v2194 = vpack.c.b16 %v2152, %v2151
  %v2195 = vpack.c.b16 %v2154, %v2153
  %v2196 = vpack.c.b16 %v2156, %v2155
  %v2197 = vpack.c.b16 %v2158, %v2157
  %v2198 = vpack.c.b16 %v2160, %v2159
  %v2199 = vpack.c.b16 %v2162, %v2161
  %v2200 = vpack.c.b16 %v2164, %v2163
  %v2201 = vpack.c.b16 %v2166, %v2165
  %v2202 = vpack.c.b16 %v2168, %v2167
  %v2203 = vpack.c.b16 %v2170, %v2169
  %v2204 = vpack.c.b16 %v2172, %v2171
  %2237 = vmatprep.subr.bf16.mxu0 0
  %2238 = vmatpush1.bf16.msra.mxu0 %v2173
  %2239 = vmatprep.subr.bf16.mxu0 0
  %2240 = vmatpush1.bf16.msra.mxu0 %v2174
  %2241 = vmatprep.subr.bf16.mxu0 0
  %2242 = vmatpush1.bf16.msra.mxu0 %v2175
  %2243 = vmatprep.subr.bf16.mxu0 0
  %2244 = vmatpush1.bf16.msra.mxu0 %v2176
  %2245 = vmatprep.subr.bf16.mxu0 0
  %2246 = vmatpush1.bf16.msra.mxu0 %v2177
  %2247 = vmatprep.subr.bf16.mxu0 0
  %2248 = vmatpush1.bf16.msra.mxu0 %v2178
  %2249 = vmatprep.subr.bf16.mxu0 0
  %2250 = vmatpush1.bf16.msra.mxu0 %v2179
  %2251 = vmatprep.subr.bf16.mxu0 0
  %2252 = vmatpush1.bf16.msra.mxu0 %v2180
  %2253 = vmatprep.subr.bf16.mxu0 0
  %2254 = vmatpush1.bf16.msra.mxu0 %v2181
  %2255 = vmatprep.subr.bf16.mxu0 0
  %2256 = vmatpush1.bf16.msra.mxu0 %v2182
  %2257 = vmatprep.subr.bf16.mxu0 0
  %2258 = vmatpush1.bf16.msra.mxu0 %v2183
  %2259 = vmatprep.subr.bf16.mxu0 0
  %2260 = vmatpush1.bf16.msra.mxu0 %v2184
  %2261 = vmatprep.subr.bf16.mxu0 0
  %2262 = vmatpush1.bf16.msra.mxu0 %v2185
  %2263 = vmatprep.subr.bf16.mxu0 0
  %2264 = vmatpush1.bf16.msra.mxu0 %v2186
  %2265 = vmatprep.subr.bf16.mxu0 0
  %2266 = vmatpush1.bf16.msra.mxu0 %v2187
  %2267 = vmatprep.subr.bf16.mxu0 0
  %2268 = vmatpush1.bf16.msra.mxu0 %v2188
  %2269 = vmatprep.mubr.bf16.mxu0 %v1971
  %2270 = vmatmul.mubr.bf16.gmra.mrb[0].mxu0 %v1970
  %v2271 = vpop.f32.mrb[0].mxu0
  %v2272 = vadd.f32 %v2043, %v2271
  %v2273 = vpop.f32.mrb[0].mxu0
  %v2274 = vpop.f32.mrb[0].mxu0
  %v2275 = vpop.f32.mrb[0].mxu0
  %2276 = vdwg.mxu0
  %2277 = vmatprep.subr.bf16.mxu0 0
  %2278 = vmatpush1.bf16.msra.mxu0 %v2189
  %2279 = vmatprep.subr.bf16.mxu0 0
  %2280 = vmatpush1.bf16.msra.mxu0 %v2190
  %2281 = vmatprep.subr.bf16.mxu0 0
  %2282 = vmatpush1.bf16.msra.mxu0 %v2191
  %2283 = vmatprep.subr.bf16.mxu0 0
  %2284 = vmatpush1.bf16.msra.mxu0 %v2192
  %2285 = vmatprep.subr.bf16.mxu0 0
  %2286 = vmatpush1.bf16.msra.mxu0 %v2193
  %2287 = vmatprep.subr.bf16.mxu0 0
  %2288 = vmatpush1.bf16.msra.mxu0 %v2194
  %2289 = vmatprep.subr.bf16.mxu0 0
  %2290 = vmatpush1.bf16.msra.mxu0 %v2195
  %2291 = vmatprep.subr.bf16.mxu0 0
  %2292 = vmatpush1.bf16.msra.mxu0 %v2196
  %2293 = vmatprep.subr.bf16.mxu0 0
  %2294 = vmatpush1.bf16.msra.mxu0 %v2197
  %2295 = vmatprep.subr.bf16.mxu0 0
  %2296 = vmatpush1.bf16.msra.mxu0 %v2198
  %2297 = vmatprep.subr.bf16.mxu0 0
  %2298 = vmatpush1.bf16.msra.mxu0 %v2199
  %2299 = vmatprep.subr.bf16.mxu0 0
  %2300 = vmatpush1.bf16.msra.mxu0 %v2200
  %2301 = vmatprep.subr.bf16.mxu0 0
  %2302 = vmatpush1.bf16.msra.mxu0 %v2201
  %2303 = vmatprep.subr.bf16.mxu0 0
  %2304 = vmatpush1.bf16.msra.mxu0 %v2202
  %2305 = vmatprep.subr.bf16.mxu0 0
  %2306 = vmatpush1.bf16.msra.mxu0 %v2203
  %2307 = vmatprep.subr.bf16.mxu0 0
  %2308 = vmatpush1.bf16.msra.mxu0 %v2204
  %2309 = vmatprep.mubr.bf16.mxu0 %v1973
  %2310 = vmatmul.mubr.bf16.gmra.mrb[0].mxu0 %v1972
  %v2311 = vpop.f32.mrb[0].mxu0
  %v2312 = vadd.f32 %v2272, %v2311
  %v2313 = vpop.f32.mrb[0].mxu0
  %v2314 = vpop.f32.mrb[0].mxu0
  %v2315 = vpop.f32.mrb[0].mxu0
  %2316 = vdwg.mxu0
  %2317 = vst [vmem:[%s5] sm:$0x3] %v2312
  // Predicated region
  $region22: #{atari_base_ppo_forward.7} parent=0 // pred_check
    _
  $region23: #{atari_base_ppo_forward.7} parent=0 // pred_check_branch
    %2319 = sbr.rel (0) target = $region25
  $region24: #{atari_base_ppo_forward.7} parent=0 // pred_region
    _
  $region25: #{atari_base_ppo_forward.7} parent=0 // pred_fallthru
    _
  // Predicated region
  $region26: #{atari_base_ppo_forward.7} parent=0 // pred_check
    _
  $region27: #{atari_base_ppo_forward.7} parent=0 // pred_check_branch
    %2321 = sbr.rel (0) target = $region29
  $region28: #{atari_base_ppo_forward.7} parent=0 // pred_region
    _
  $region29: #{atari_base_ppo_forward.7} parent=0 // pred_fallthru
    _

</llo_original>
